<compile_context>
chip_gen: v6e
topology: v6e:2x2x1
jax: 0.10.0
libtpu: 0.0.40
codegen_flags: <defaults>
</compile_context>

<pallas_src>
import jax
import jax.numpy as jnp
import numpy as np
from jax.experimental import pallas as pl
from jax.experimental.pallas import tpu as pltpu

N_NODES = 116                       # nodes per brain graph (AAL atlas)
C_IN = 116                          # raw node feature dim
GROUP_EMBED_DIM = 2
HEMI_EMBED_DIM = 2
C_EMB = GROUP_EMBED_DIM + HEMI_EMBED_DIM        # 4
C_ASYM = C_IN // 2                              # 58
C_OUT = C_IN + C_EMB + C_ASYM                   # 178  (node_out_dim)
EPS = 1e-5                                      # PyG LayerNorm default eps
MAX_GRAPHS_PER_BLOCK = 32                       # ~27 MiB worst-case working set


def _brain_context_kernel(x_ref, emb_ref, w_ref, b_ref, o_ref, cat_ref):
    """One grid step == a block of G graphs, processed fully batched.

      * even/odd de-interleave of x via an exact bf16-split permutation matmul
        (MXU; x is read from HBM only once)
      * asymmetry features  (|l| + |r|) * |l - r|
      * graph-mode LayerNorm (PyG mode='graph'): two-pass mean/var over ALL nodes
        & channels of [x | emb | asym] per graph, 1/std folded into the affine,
        single full-width store.
    """
    g_blk = x_ref.shape[0]
    x = x_ref[...]                    # (G, 116, 116) f32 raw node features
    e = emb_ref[...]                  # (G, 1, 4)     per-graph embedding row
    w = w_ref[...]                    # (1, 1, 178)   LayerNorm weight
    b = b_ref[...]                    # (1, 1, 178)   LayerNorm bias

    # ---- build the [even | odd] column-permutation selector in-kernel ----------
    # perm[r, c] = 1 iff (c < 58 and r == 2c) or (c >= 58 and r == 2c - 115);
    # x @ perm gives [x[:, 0::2] | x[:, 1::2]].  0/1 entries are exact in bf16.
    row = jax.lax.broadcasted_iota(jnp.int32, (C_IN, C_IN), 0)
    col = jax.lax.broadcasted_iota(jnp.int32, (C_IN, C_IN), 1)
    take_even = (col < C_ASYM) & (row == 2 * col)
    take_odd = (col >= C_ASYM) & (row == 2 * col - (C_IN - 1))
    perm = jnp.where(take_even | take_odd, 1.0, 0.0).astype(jnp.bfloat16)
    perm_b = jnp.broadcast_to(perm[None], (g_blk, C_IN, C_IN))

    # ---- exact 3-term bf16 split so the bf16 MXU matmuls reconstruct x exactly --
    # (every output element is a single x*1 product, so no accumulation error)
    x1 = x.astype(jnp.bfloat16)
    r1 = x - x1.astype(jnp.float32)
    x2 = r1.astype(jnp.bfloat16)
    x3 = (r1 - x2.astype(jnp.float32)).astype(jnp.bfloat16)

    xlr = (jnp.einsum("gnc,gcd->gnd", x1, perm_b, preferred_element_type=jnp.float32)
           + jnp.einsum("gnc,gcd->gnd", x2, perm_b, preferred_element_type=jnp.float32)
           + jnp.einsum("gnc,gcd->gnd", x3, perm_b, preferred_element_type=jnp.float32))
    xl = xlr[:, :, :C_ASYM]                               # == x[:, :, 0::2]
    xr = xlr[:, :, C_ASYM:]                               # == x[:, :, 1::2]
    af = (jnp.abs(xl) + jnp.abs(xr)) * jnp.abs(xl - xr)   # (G, 116, 58)

    # ---- assemble [x | emb | asym] once in VMEM scratch -------------------------
    cat_ref[:, :, 0:C_IN] = x
    cat_ref[:, :, C_IN:C_IN + C_EMB] = jnp.broadcast_to(e, (g_blk, N_NODES, C_EMB))
    cat_ref[:, :, C_IN + C_EMB:C_OUT] = af
    cat = cat_ref[...]                                    # (G, 116, 178)

    # ---- two-pass graph-wise LayerNorm ------------------------------------------
    denom = jnp.float32(N_NODES * C_OUT)
    s = jnp.sum(jnp.sum(cat, axis=2, keepdims=True), axis=1, keepdims=True)   # (G,1,1)
    mean = s / denom
    xc = cat - mean
    v = jnp.sum(jnp.sum(xc * xc, axis=2, keepdims=True), axis=1, keepdims=True)
    inv = jax.lax.rsqrt(v / denom + EPS)                  # (G,1,1)

    # Single full-width (lane-dense) store; 1/std folded into the weight.
    # TODO(synk): emit bf16 output here if the downstream GNN tolerates it
    # (halves output HBM traffic on this memory-bound kernel).
    o_ref[...] = xc * (inv * w) + b


def _choose_block(num_graphs: int):
    """Pick graphs-per-block.

    Prefers a divisor of num_graphs (no wrapper-side padding / output slice copy)
    and keeps >= 2 grid blocks when there is more than one graph so 2-TensorCore
    chips (v7x) can shard the grid via dimension_semantics=("parallel",).
    """
    if num_graphs <= 1:
        return 1, 1, 0
    cap = min(MAX_GRAPHS_PER_BLOCK, (num_graphs + 1) // 2)
    best = 1
    for g in range(cap, 0, -1):
        if num_graphs % g == 0:
            best = g
            break
    if best >= max(1, cap // 2):
        g_blk = best                      # clean divisor: no padding needed
    else:
        # TODO(synk): handle the ragged tail in-kernel (scalar-prefetched valid
        # count + pl.when) instead of padding; padding kept minimal here.
        n_blocks = pl.cdiv(num_graphs, cap)
        g_blk = pl.cdiv(num_graphs, n_blocks)
    num_blocks = pl.cdiv(num_graphs, g_blk)
    pad = num_blocks * g_blk - num_graphs
    return g_blk, num_blocks, pad


@jax.jit
def brain_context_forward(x_flat, batch, precomputed_node_emb, ln_weight, ln_bias):
    """x_flat: [total_nodes, 116], batch: [total_nodes] graph id per node.

    Nodes are assumed grouped per graph (standard PyG batching: 116 consecutive
    nodes per brain graph), as in the original reshape-based implementation.
    """
    n_total = x_flat.shape[0]
    if n_total % N_NODES != 0:
        raise ValueError(f"total_nodes={n_total} must be a multiple of {N_NODES}")
    num_graphs = n_total // N_NODES

    # glue (pure indexing / reshape, no arithmetic)
    x = x_flat.reshape(num_graphs, N_NODES, C_IN).astype(jnp.float32)
    # PyTorch does precomputed[data.batch]; within a graph every node shares the
    # same batch id, so one embedding row per graph suffices (matches the spec
    # literally, no per-node gather in the wrapper).
    graph_ids = batch[::N_NODES]
    emb_rows = precomputed_node_emb[graph_ids].astype(jnp.float32)
    emb_rows = emb_rows.reshape(num_graphs, 1, C_EMB)
    w = ln_weight.reshape(1, 1, C_OUT).astype(jnp.float32)
    b = ln_bias.reshape(1, 1, C_OUT).astype(jnp.float32)

    g_blk, num_blocks, pad = _choose_block(num_graphs)
    padded_graphs = num_graphs + pad
    if pad:
        x = jnp.pad(x, ((0, pad), (0, 0), (0, 0)))
        emb_rows = jnp.pad(emb_rows, ((0, pad), (0, 0), (0, 0)))

    cost = pl.CostEstimate(
        flops=num_graphs * (3 * 2 * N_NODES * C_IN * C_IN + 12 * N_NODES * C_OUT),
        transcendentals=num_graphs,
        bytes_accessed=(4 * padded_graphs * N_NODES * (C_IN + C_OUT)
                        + 4 * padded_graphs * C_EMB + 2 * 4 * C_OUT),
    )

    out = pl.pallas_call(
        _brain_context_kernel,
        out_shape=jax.ShapeDtypeStruct((padded_graphs, N_NODES, C_OUT), jnp.float32),
        grid_spec=pltpu.PrefetchScalarGridSpec(
            num_scalar_prefetch=0,
            grid=(num_blocks,),
            in_specs=[
                pl.BlockSpec((g_blk, N_NODES, C_IN), lambda i: (i, 0, 0)),
                pl.BlockSpec((g_blk, 1, C_EMB), lambda i: (i, 0, 0)),
                pl.BlockSpec((1, 1, C_OUT), lambda i: (0, 0, 0)),
                pl.BlockSpec((1, 1, C_OUT), lambda i: (0, 0, 0)),
            ],
            out_specs=pl.BlockSpec((g_blk, N_NODES, C_OUT), lambda i: (i, 0, 0)),
            scratch_shapes=[pltpu.VMEM((g_blk, N_NODES, C_OUT), jnp.float32)],
        ),
        compiler_params=pltpu.CompilerParams(
            dimension_semantics=("parallel",),
            vmem_limit_bytes=48 * 1024 * 1024,   # headroom for the 32-graph block
        ),
        cost_estimate=cost,
    )(x, emb_rows, w, b)

    if pad:
        out = out[:num_graphs]
    return out.reshape(n_total, C_OUT)


def init_params(key):
    """Deterministic parameter init mirroring BrainContext.__init__ (+ the
    _precompute_node_embeddings step)."""
    kg, kh = jax.random.split(key)
    functional_groups = {
        "visual": list(range(0, 30)),
        "somatomotor": list(range(30, 60)),
        "limbic": list(range(60, 90)),
        "default": list(range(90, 116)),
    }
    group_embedding = jax.random.normal(
        kg, (len(functional_groups), GROUP_EMBED_DIM), jnp.float32)
    hemi_embedding = jax.random.normal(kh, (2, HEMI_EMBED_DIM), jnp.float32)

    group_ids = jnp.zeros((N_NODES,), jnp.int32)
    for gid, (_, nodes) in enumerate(functional_groups.items()):
        group_ids = group_ids.at[jnp.array(nodes, dtype=jnp.int32)].set(gid)
    hemi_ind = jnp.arange(N_NODES, dtype=jnp.int32) % 2

    precomputed = jnp.concatenate(
        [group_embedding[group_ids], hemi_embedding[hemi_ind]], axis=-1)  # [116, 4]

    ln_weight = jnp.ones((C_OUT,), jnp.float32)   # PyG LayerNorm default affine init
    ln_bias = jnp.zeros((C_OUT,), jnp.float32)
    return precomputed, ln_weight, ln_bias


def reference_forward(x_flat, batch, precomputed, w, b):
    """Pure-JAX reference reproducing the PyTorch/PyG semantics literally."""
    emb = precomputed[batch]
    left = x_flat[:, 0::2]
    right = x_flat[:, 1::2]
    af = (jnp.abs(left) + jnp.abs(right)) * jnp.abs(left - right)
    cat = jnp.concatenate([x_flat, emb, af], axis=-1)
    num_graphs = x_flat.shape[0] // N_NODES
    cat_g = cat.reshape(num_graphs, N_NODES, C_OUT)
    denom = float(N_NODES * C_OUT)
    mean = cat_g.sum(axis=(1, 2), keepdims=True) / denom
    xc = cat_g - mean
    var = (xc * xc).sum(axis=(1, 2), keepdims=True) / denom
    out = xc / jnp.sqrt(var + EPS) * w + b
    return out.reshape(-1, C_OUT)


if __name__ == "__main__":
    key = jax.random.PRNGKey(0)
    k_x, k_p = jax.random.split(key)
    precomputed, ln_w, ln_b = init_params(k_p)

    num_graphs = 8
    x_flat = jax.random.normal(k_x, (num_graphs * N_NODES, C_IN), jnp.float32)
    batch = jnp.repeat(jnp.arange(num_graphs, dtype=jnp.int32), N_NODES)

    node_out = brain_context_forward(x_flat, batch, precomputed, ln_w, ln_b)
    node_out = jax.block_until_ready(node_out)

    # use_edges=False -> edge_attr is None, matching the PyTorch forward
    edge_attr = None
    # TODO(synk): edge branch (use_edges/include_connection_type) not exercised in
    # this default config; it is pure integer masking + embedding-lookup glue.

    ref = reference_forward(x_flat, batch, precomputed, ln_w, ln_b)
    assert node_out.shape == (num_graphs * N_NODES, C_OUT)
    np.testing.assert_allclose(np.asarray(node_out), np.asarray(ref),
                               rtol=1e-4, atol=1e-4)
    print("KERNEL_OK")
</pallas_src>

<mosaic_0001>
module attributes {stable_mosaic.version = 11 : i64} {
  func.func @_brain_context_kernel(%arg0: i32, %arg1: memref<4x116x116xf32, #tpu.memory_space<vmem>>, %arg2: memref<4x1x4xf32, #tpu.memory_space<vmem>>, %arg3: memref<1x1x178xf32, #tpu.memory_space<vmem>>, %arg4: memref<1x1x178xf32, #tpu.memory_space<vmem>>, %arg5: memref<4x116x178xf32, #tpu.memory_space<vmem>>, %arg6: memref<4x116x178xf32, #tpu.memory_space<vmem>>) attributes {dimension_semantics = [#tpu.dimension_semantics<parallel>], iteration_bounds = array<i64: 2>, scalar_prefetch = 0 : i64, scratch_operands = 1 : i64, tpu.core_type = #tpu.core_type<tc>, window_params = [{transform_indices = @transform_0, window_bounds = array<i64: 4, 116, 116>}, {transform_indices = @transform_1, window_bounds = array<i64: 4, 1, 4>}, {pipeline_mode = #tpu.pipeline_mode<synchronous>, transform_indices = @transform_2, window_bounds = array<i64: 1, 1, 178>}, {pipeline_mode = #tpu.pipeline_mode<synchronous>, transform_indices = @transform_3, window_bounds = array<i64: 1, 1, 178>}, {transform_indices = @transform_4, window_bounds = array<i64: 4, 116, 178>}]} {
    %c0 = arith.constant 0 : index
    %c0_0 = arith.constant 0 : index
    %c0_1 = arith.constant 0 : index
    %0 = vector.load %arg1[%c0, %c0_0, %c0_1] : memref<4x116x116xf32, #tpu.memory_space<vmem>>, vector<4x116x116xf32>
    %c0_2 = arith.constant 0 : index
    %c0_3 = arith.constant 0 : index
    %c0_4 = arith.constant 0 : index
    %1 = vector.load %arg2[%c0_2, %c0_3, %c0_4] : memref<4x1x4xf32, #tpu.memory_space<vmem>>, vector<4x1x4xf32>
    %c0_5 = arith.constant 0 : index
    %c0_6 = arith.constant 0 : index
    %c0_7 = arith.constant 0 : index
    %2 = vector.load %arg3[%c0_5, %c0_6, %c0_7] : memref<1x1x178xf32, #tpu.memory_space<vmem>>, vector<1x1x178xf32>
    %c0_8 = arith.constant 0 : index
    %c0_9 = arith.constant 0 : index
    %c0_10 = arith.constant 0 : index
    %3 = vector.load %arg4[%c0_8, %c0_9, %c0_10] : memref<1x1x178xf32, #tpu.memory_space<vmem>>, vector<1x1x178xf32>
    %4 = tpu.iota {dimensions = array<i32: 0>} : vector<116x116xi32>
    %5 = tpu.iota {dimensions = array<i32: 1>} : vector<116x116xi32>
    %c58_i32 = arith.constant 58 : i32
    %6 = vector.broadcast %c58_i32 : i32 to vector<116x116xi32>
    %7 = arith.cmpi slt, %5, %6 : vector<116x116xi32>
    %c2_i32 = arith.constant 2 : i32
    %8 = vector.broadcast %c2_i32 : i32 to vector<116x116xi32>
    %9 = arith.muli %8, %5 : vector<116x116xi32>
    %10 = arith.cmpi eq, %4, %9 : vector<116x116xi32>
    %11 = arith.andi %7, %10 : vector<116x116xi1>
    %c58_i32_11 = arith.constant 58 : i32
    %12 = vector.broadcast %c58_i32_11 : i32 to vector<116x116xi32>
    %13 = arith.cmpi sge, %5, %12 : vector<116x116xi32>
    %c2_i32_12 = arith.constant 2 : i32
    %14 = vector.broadcast %c2_i32_12 : i32 to vector<116x116xi32>
    %15 = arith.muli %14, %5 : vector<116x116xi32>
    %c115_i32 = arith.constant 115 : i32
    %16 = vector.broadcast %c115_i32 : i32 to vector<116x116xi32>
    %17 = arith.subi %15, %16 : vector<116x116xi32>
    %18 = arith.cmpi eq, %4, %17 : vector<116x116xi32>
    %19 = arith.andi %13, %18 : vector<116x116xi1>
    %20 = arith.ori %11, %19 : vector<116x116xi1>
    %cst = arith.constant 1.000000e+00 : f32
    %cst_13 = arith.constant 0.000000e+00 : f32
    %21 = vector.broadcast %cst : f32 to vector<116x116xf32>
    %22 = vector.broadcast %cst_13 : f32 to vector<116x116xf32>
    %23 = arith.select %20, %21, %22 : vector<116x116xi1>, vector<116x116xf32>
    %24 = arith.truncf %23 : vector<116x116xf32> to vector<116x116xbf16>
    %25 = vector.shape_cast %24 : vector<116x116xbf16> to vector<1x116x116xbf16>
    %26 = vector.shape_cast %25 : vector<1x116x116xbf16> to vector<1x116x116xbf16>
    %27 = vector.broadcast %26 : vector<1x116x116xbf16> to vector<4x116x116xbf16>
    %28 = arith.truncf %0 : vector<4x116x116xf32> to vector<4x116x116xbf16>
    %29 = arith.extf %28 : vector<4x116x116xbf16> to vector<4x116x116xf32>
    %30 = arith.subf %0, %29 : vector<4x116x116xf32>
    %31 = arith.truncf %30 : vector<4x116x116xf32> to vector<4x116x116xbf16>
    %32 = arith.extf %31 : vector<4x116x116xbf16> to vector<4x116x116xf32>
    %33 = arith.subf %30, %32 : vector<4x116x116xf32>
    %34 = arith.truncf %33 : vector<4x116x116xf32> to vector<4x116x116xbf16>
    "tpu.trace_start"() <{level = 10 : i32, message = "gnc,gcd->gnd"}> : () -> ()
    %cst_14 = arith.constant dense<0.000000e+00> : vector<4x116x116xf32>
    %35 = tpu.matmul %28, %27, %cst_14 {dimension_numbers = #tpu.dot_dimension_numbers<[2], [1], [1], [2], [0, 0, 0, 1, 1, 2], [0], [0]>} : vector<4x116x116xbf16>, vector<4x116x116xbf16>, vector<4x116x116xf32> -> vector<4x116x116xf32>
    %cst_15 = arith.constant dense<0.000000e+00> : vector<4x116x116xf32>
    %36 = tpu.matmul %31, %27, %cst_15 {dimension_numbers = #tpu.dot_dimension_numbers<[2], [1], [1], [2], [0, 0, 0, 1, 1, 2], [0], [0]>} : vector<4x116x116xbf16>, vector<4x116x116xbf16>, vector<4x116x116xf32> -> vector<4x116x116xf32>
    "tpu.trace_stop"() : () -> ()
    %37 = arith.addf %35, %36 : vector<4x116x116xf32>
    "tpu.trace_start"() <{level = 10 : i32, message = "gnc,gcd->gnd"}> : () -> ()
    %cst_16 = arith.constant dense<0.000000e+00> : vector<4x116x116xf32>
    %38 = tpu.matmul %34, %27, %cst_16 {dimension_numbers = #tpu.dot_dimension_numbers<[2], [1], [1], [2], [0, 0, 0, 1, 1, 2], [0], [0]>} : vector<4x116x116xbf16>, vector<4x116x116xbf16>, vector<4x116x116xf32> -> vector<4x116x116xf32>
    "tpu.trace_stop"() : () -> ()
    %39 = arith.addf %37, %38 : vector<4x116x116xf32>
    %40 = vector.extract_strided_slice %39 {offsets = [0, 0, 0], sizes = [4, 116, 58], strides = [1, 1, 1]} : vector<4x116x116xf32> to vector<4x116x58xf32>
    %41 = vector.extract_strided_slice %39 {offsets = [0, 0, 58], sizes = [4, 116, 58], strides = [1, 1, 1]} : vector<4x116x116xf32> to vector<4x116x58xf32>
    %42 = math.absf %40 : vector<4x116x58xf32>
    %43 = math.absf %41 : vector<4x116x58xf32>
    %44 = arith.addf %42, %43 : vector<4x116x58xf32>
    %45 = arith.subf %40, %41 : vector<4x116x58xf32>
    %46 = math.absf %45 : vector<4x116x58xf32>
    %47 = arith.mulf %44, %46 : vector<4x116x58xf32>
    %c0_17 = arith.constant 0 : index
    %c0_18 = arith.constant 0 : index
    %c0_19 = arith.constant 0 : index
    %48 = vector.load %arg6[%c0_17, %c0_18, %c0_19] : memref<4x116x178xf32, #tpu.memory_space<vmem>>, vector<4x116x116xf32>
    tpu.vector_store %arg6[%c0_17, %c0_18, %c0_19], %0 {strides = array<i32>} : memref<4x116x178xf32, #tpu.memory_space<vmem>>, vector<4x116x116xf32>,
    %49 = vector.shape_cast %1 : vector<4x1x4xf32> to vector<4x1x4xf32>
    %50 = vector.broadcast %49 : vector<4x1x4xf32> to vector<4x116x4xf32>
    %c0_20 = arith.constant 0 : index
    %c0_21 = arith.constant 0 : index
    %c116 = arith.constant 116 : index
    %51 = vector.load %arg6[%c0_20, %c0_21, %c116] : memref<4x116x178xf32, #tpu.memory_space<vmem>>, vector<4x116x4xf32>
    tpu.vector_store %arg6[%c0_20, %c0_21, %c116], %50 {strides = array<i32>} : memref<4x116x178xf32, #tpu.memory_space<vmem>>, vector<4x116x4xf32>,
    %c0_22 = arith.constant 0 : index
    %c0_23 = arith.constant 0 : index
    %c120 = arith.constant 120 : index
    %52 = vector.load %arg6[%c0_22, %c0_23, %c120] : memref<4x116x178xf32, #tpu.memory_space<vmem>>, vector<4x116x58xf32>
    tpu.vector_store %arg6[%c0_22, %c0_23, %c120], %47 {strides = array<i32>} : memref<4x116x178xf32, #tpu.memory_space<vmem>>, vector<4x116x58xf32>,
    %c0_24 = arith.constant 0 : index
    %c0_25 = arith.constant 0 : index
    %c0_26 = arith.constant 0 : index
    %53 = vector.load %arg6[%c0_24, %c0_25, %c0_26] : memref<4x116x178xf32, #tpu.memory_space<vmem>>, vector<4x116x178xf32>
    %cst_27 = arith.constant dense<0.000000e+00> : vector<4x116xf32>
    %54 = vector.multi_reduction <add>, %53, %cst_27 [2] : vector<4x116x178xf32> to vector<4x116xf32>
    %55 = vector.shape_cast %54 : vector<4x116xf32> to vector<4x116x1xf32>
    %cst_28 = arith.constant dense<0.000000e+00> : vector<4x1xf32>
    %56 = vector.multi_reduction <add>, %55, %cst_28 [1] : vector<4x116x1xf32> to vector<4x1xf32>
    %57 = vector.shape_cast %56 : vector<4x1xf32> to vector<4x1x1xf32>
    %cst_29 = arith.constant 2.064800e+04 : f32
    %58 = vector.broadcast %cst_29 : f32 to vector<4x1x1xf32>
    %59 = arith.divf %57, %58 : vector<4x1x1xf32>
    %60 = vector.broadcast %59 : vector<4x1x1xf32> to vector<4x116x178xf32>
    %61 = arith.subf %53, %60 : vector<4x116x178xf32>
    %62 = arith.mulf %61, %61 : vector<4x116x178xf32>
    %cst_30 = arith.constant dense<0.000000e+00> : vector<4x116xf32>
    %63 = vector.multi_reduction <add>, %62, %cst_30 [2] : vector<4x116x178xf32> to vector<4x116xf32>
    %64 = vector.shape_cast %63 : vector<4x116xf32> to vector<4x116x1xf32>
    %cst_31 = arith.constant dense<0.000000e+00> : vector<4x1xf32>
    %65 = vector.multi_reduction <add>, %64, %cst_31 [1] : vector<4x116x1xf32> to vector<4x1xf32>
    %66 = vector.shape_cast %65 : vector<4x1xf32> to vector<4x1x1xf32>
    %cst_32 = arith.constant 2.064800e+04 : f32
    %67 = vector.broadcast %cst_32 : f32 to vector<4x1x1xf32>
    %68 = arith.divf %66, %67 : vector<4x1x1xf32>
    %cst_33 = arith.constant 9.99999974E-6 : f32
    %69 = vector.broadcast %cst_33 : f32 to vector<4x1x1xf32>
    %70 = arith.addf %68, %69 : vector<4x1x1xf32>
    %71 = math.rsqrt %70 : vector<4x1x1xf32>
    %72 = vector.broadcast %71 : vector<4x1x1xf32> to vector<4x1x178xf32>
    %73 = vector.broadcast %2 : vector<1x1x178xf32> to vector<4x1x178xf32>
    %74 = arith.mulf %72, %73 : vector<4x1x178xf32>
    %75 = vector.broadcast %74 : vector<4x1x178xf32> to vector<4x116x178xf32>
    %76 = arith.mulf %61, %75 : vector<4x116x178xf32>
    %77 = vector.broadcast %3 : vector<1x1x178xf32> to vector<4x116x178xf32>
    %78 = arith.addf %76, %77 : vector<4x116x178xf32>
    %c0_34 = arith.constant 0 : index
    %c0_35 = arith.constant 0 : index
    %c0_36 = arith.constant 0 : index
    %79 = vector.load %arg5[%c0_34, %c0_35, %c0_36] : memref<4x116x178xf32, #tpu.memory_space<vmem>>, vector<4x116x178xf32>
    tpu.vector_store %arg5[%c0_34, %c0_35, %c0_36], %78 {strides = array<i32>} : memref<4x116x178xf32, #tpu.memory_space<vmem>>, vector<4x116x178xf32>,
    return
  }
  func.func @transform_0(%arg0: i32) -> (i32, i32, i32) {
    %c0_i32 = arith.constant 0 : i32
    %c0_i32_0 = arith.constant 0 : i32
    %c0_i32_1 = arith.constant 0 : i32
    return %arg0, %c0_i32, %c0_i32_0 : i32, i32, i32
  }
  func.func @transform_1(%arg0: i32) -> (i32, i32, i32) {
    %c0_i32 = arith.constant 0 : i32
    %c0_i32_0 = arith.constant 0 : i32
    %c0_i32_1 = arith.constant 0 : i32
    return %arg0, %c0_i32, %c0_i32_0 : i32, i32, i32
  }
  func.func @transform_2(%arg0: i32) -> (i32, i32, i32) {
    %c0_i32 = arith.constant 0 : i32
    %c0_i32_0 = arith.constant 0 : i32
    %c0_i32_1 = arith.constant 0 : i32
    %c0_i32_2 = arith.constant 0 : i32
    return %c0_i32, %c0_i32_0, %c0_i32_1 : i32, i32, i32
  }
  func.func @transform_3(%arg0: i32) -> (i32, i32, i32) {
    %c0_i32 = arith.constant 0 : i32
    %c0_i32_0 = arith.constant 0 : i32
    %c0_i32_1 = arith.constant 0 : i32
    %c0_i32_2 = arith.constant 0 : i32
    return %c0_i32, %c0_i32_0, %c0_i32_1 : i32, i32, i32
  }
  func.func @transform_4(%arg0: i32) -> (i32, i32, i32) {
    %c0_i32 = arith.constant 0 : i32
    %c0_i32_0 = arith.constant 0 : i32
    %c0_i32_1 = arith.constant 0 : i32
    return %arg0, %c0_i32, %c0_i32_0 : i32, i32, i32
  }
}

</mosaic_0001>

<llo_original>
// kernel: brain_context_forward.1
$region0: #{brain_context_forward.1}
  #allocation0 [shape = 'u32[]', space=smem, size = 0x4, offset = 0x4, fixed_abs, tag = 'smem constant byte address 0x4 - core index']
  #allocation1 [shape = 'u32[144,128]{1,0:T(1,128)}', space=vmem, size = 0x12000, scoped, tag = 'internal scratch']
  #allocation2 [shape = 'f32[4,116,178]{2,1,0:T(8,128)}', space=vmem, size = 0x78000, scoped, tag = 'scratch operand']
  %s0 = inlined_call_operand.vmem [shape: f32[8,116,116], index: 0, kind: input, shape index: {}]
  %s1 = inlined_call_operand.vmem [shape: f32[8,1,4], index: 1, kind: input, shape index: {}]
  %s2 = inlined_call_operand.vmem [shape: f32[1,1,178], index: 2, kind: input, shape index: {}]
  %s3 = inlined_call_operand.vmem [shape: f32[1,1,178], index: 3, kind: input, shape index: {}]
  %s4 = inlined_call_operand.vmem [shape: f32[8,116,178], index: 4, kind: output, shape index: {}]
  %s5 = sld [smem:[#allocation0]]
  $region49: #{brain_context_forward.1} parent=0
    _
  %s7 = ssub.s32 1, %s5
  %s8 = scalar_select 0, %s7, %s5
  loop: start=0, step=1, limit=4
  $region2: #{brain_context_forward.1} parent=0 // loop_pre_header
    _
  $region3: #{brain_context_forward.1} parent=0 // loop_header
    %s10 = sphi 0, %s14
    %p11 = scmp.ge.s32.totalorder %s10, 4
    %s20 = sphi 0, %s22
    %s23 = sphi 0, %s20
    %s24 = sphi 0, %s23
    %s40 = sphi 0, %s24
    %s46 = sphi 0, %s48
    %s49 = sphi 0, %s46
    %s50 = sphi 0, %s49
    %s66 = sphi 0, %s50
    %s70 = sphi 0, %s70
    %s72 = sphi 0, %s70
    %s73 = sphi 0, %s72
    %s87 = sphi 0, %s73
    %s91 = sphi 0, %s91
    %s93 = sphi 0, %s91
    %s94 = sphi 0, %s93
    %s108 = sphi 0, %s94
    %s114 = sphi 0, %s116
    %s117 = sphi 0, %s114
    %s118 = sphi 0, %s117
    %s134 = sphi 0, %s118
  $region4: #{brain_context_forward.1} parent=0 // loop_header_branch
    %13 = sbr.rel (%p11) target = $region8
  $region5: #{brain_context_forward.1} parent=0 // loop_body
    %s15 = ssub.s32 %s10, 1
    %s16 = ssub.s32 %s10, 2
    %s17 = sadd.s32 %s10, 1
    %s18 = ssub.s32 %s10, %s17
    %p19 = scmp.eq.s32.totalorder %s18, 0
    %s21 = sadd.s32 %s20, 1
    %s22 = scalar_select %p19, %s20, %s21
    %p25 = pneg %p19
    %p26 = scmp.eq.s32.totalorder %s10, 1
    %p27 = por %p25, %p26
    %p28 = scmp.ne.s32.totalorder %s20, %s23
    %p29 = scmp.eq.s32.totalorder %s10, 0
    %p30 = por %p28, %p29
    %p31 = scmp.ne.s32.totalorder %s20, %s23
    %p32 = scmp.eq.s32.totalorder %s15, 1
    %p33 = por %p31, %p32
    %p34 = scmp.ne.s32.totalorder %s23, %s24
    %p35 = scmp.eq.s32.totalorder %s15, 0
    %p36 = por %p34, %p35
    %p37 = scmp.ne.s32.totalorder %s23, %s24
    %p38 = scmp.eq.s32.totalorder %s16, 1
    %p39 = por %p37, %p38
    %p41 = scmp.ne.s32.totalorder %s24, %s40
    %p42 = scmp.eq.s32.totalorder %s16, 0
    %p43 = por %p41, %p42
    %s44 = ssub.s32 %s10, %s17
    %p45 = scmp.eq.s32.totalorder %s44, 0
    %s47 = sadd.s32 %s46, 1
    %s48 = scalar_select %p45, %s46, %s47
    %p51 = pneg %p45
    %p52 = scmp.eq.s32.totalorder %s10, 1
    %p53 = por %p51, %p52
    %p54 = scmp.ne.s32.totalorder %s46, %s49
    %p55 = scmp.eq.s32.totalorder %s10, 0
    %p56 = por %p54, %p55
    %p57 = scmp.ne.s32.totalorder %s46, %s49
    %p58 = scmp.eq.s32.totalorder %s15, 1
    %p59 = por %p57, %p58
    %p60 = scmp.ne.s32.totalorder %s49, %s50
    %p61 = scmp.eq.s32.totalorder %s15, 0
    %p62 = por %p60, %p61
    %p63 = scmp.ne.s32.totalorder %s49, %s50
    %p64 = scmp.eq.s32.totalorder %s16, 1
    %p65 = por %p63, %p64
    %p67 = scmp.ne.s32.totalorder %s50, %s66
    %p68 = scmp.eq.s32.totalorder %s16, 0
    %p69 = por %p67, %p68
    %s71 = sadd.s32 %s70, 1
    %p74 = scmp.eq.s32.totalorder %s10, 1
    %p75 = scmp.ne.s32.totalorder %s70, %s72
    %p76 = scmp.eq.s32.totalorder %s10, 0
    %p77 = por %p75, %p76
    %p78 = scmp.ne.s32.totalorder %s70, %s72
    %p79 = scmp.eq.s32.totalorder %s15, 1
    %p80 = por %p78, %p79
    %p81 = scmp.ne.s32.totalorder %s72, %s73
    %p82 = scmp.eq.s32.totalorder %s15, 0
    %p83 = por %p81, %p82
    %p84 = scmp.ne.s32.totalorder %s72, %s73
    %p85 = scmp.eq.s32.totalorder %s16, 1
    %p86 = por %p84, %p85
    %p88 = scmp.ne.s32.totalorder %s73, %s87
    %p89 = scmp.eq.s32.totalorder %s16, 0
    %p90 = por %p88, %p89
    %s92 = sadd.s32 %s91, 1
    %p95 = scmp.eq.s32.totalorder %s10, 1
    %p96 = scmp.ne.s32.totalorder %s91, %s93
    %p97 = scmp.eq.s32.totalorder %s10, 0
    %p98 = por %p96, %p97
    %p99 = scmp.ne.s32.totalorder %s91, %s93
    %p100 = scmp.eq.s32.totalorder %s15, 1
    %p101 = por %p99, %p100
    %p102 = scmp.ne.s32.totalorder %s93, %s94
    %p103 = scmp.eq.s32.totalorder %s15, 0
    %p104 = por %p102, %p103
    %p105 = scmp.ne.s32.totalorder %s93, %s94
    %p106 = scmp.eq.s32.totalorder %s16, 1
    %p107 = por %p105, %p106
    %p109 = scmp.ne.s32.totalorder %s94, %s108
    %p110 = scmp.eq.s32.totalorder %s16, 0
    %p111 = por %p109, %p110
    %s112 = ssub.s32 %s10, %s17
    %p113 = scmp.eq.s32.totalorder %s112, 0
    %s115 = sadd.s32 %s114, 1
    %s116 = scalar_select %p113, %s114, %s115
    %p119 = pneg %p113
    %p120 = scmp.eq.s32.totalorder %s10, 1
    %p121 = por %p119, %p120
    %p122 = scmp.ne.s32.totalorder %s114, %s117
    %p123 = scmp.eq.s32.totalorder %s10, 0
    %p124 = por %p122, %p123
    %p125 = scmp.ne.s32.totalorder %s114, %s117
    %p126 = scmp.eq.s32.totalorder %s15, 1
    %p127 = por %p125, %p126
    %p128 = scmp.ne.s32.totalorder %s117, %s118
    %p129 = scmp.eq.s32.totalorder %s15, 0
    %p130 = por %p128, %p129
    %p131 = scmp.ne.s32.totalorder %s117, %s118
    %p132 = scmp.eq.s32.totalorder %s16, 1
    %p133 = por %p131, %p132
    %p135 = scmp.ne.s32.totalorder %s118, %s134
    %p136 = scmp.eq.s32.totalorder %s16, 0
    %p137 = por %p135, %p136
    %p138 = scmp.le.s32.totalorder 1, %s10
    %p139 = scmp.lt.s32.totalorder %s10, 3
    %p140 = pnand %p138, %p139
    %p141 = pneg %p140
    // Predicated region
    $region9: #{brain_context_forward.1} parent=5 // pred_check
      _
    $region10: #{brain_context_forward.1} parent=5 // pred_check_branch
      %143 = sbr.rel (%p140) target = $region12
    $region11: #{brain_context_forward.1} parent=5 // pred_region
      %s144 = ssub.s32 %s10, 1
      // Predicated region
      $region13: #{brain_context_forward.1} parent=11 // pred_check
        %p145 = pneg %p83
      $region14: #{brain_context_forward.1} parent=11 // pred_check_branch
        %147 = sbr.rel (%p145) target = $region16
      $region15: #{brain_context_forward.1} parent=11 // pred_region
        _
      $region16: #{brain_context_forward.1} parent=11 // pred_fallthru
        _
      // Predicated region
      $region17: #{brain_context_forward.1} parent=11 // pred_check
        %p148 = pneg %p104
      $region18: #{brain_context_forward.1} parent=11 // pred_check_branch
        %150 = sbr.rel (%p148) target = $region20
      $region19: #{brain_context_forward.1} parent=11 // pred_region
        _
      $region20: #{brain_context_forward.1} parent=11 // pred_fallthru
        _
    $region12: #{brain_context_forward.1} parent=5 // pred_fallthru
      _
    %p151 = scmp.lt.s32.totalorder %s10, 2
    // Predicated region
    $region21: #{brain_context_forward.1} parent=5 // pred_check
      %p152 = pneg %p151
    $region22: #{brain_context_forward.1} parent=5 // pred_check_branch
      %154 = sbr.rel (%p152) target = $region24
    $region23: #{brain_context_forward.1} parent=5 // pred_region
      // Predicated region
      $region25: #{brain_context_forward.1} parent=23 // pred_check
        %p155 = pneg %p30
      $region26: #{brain_context_forward.1} parent=23 // pred_check_branch
        %157 = sbr.rel (%p155) target = $region28
      $region27: #{brain_context_forward.1} parent=23 // pred_region
        %s158 = smul.u32 4, %s10
        %p159 = scmp.lt.s32.totalorder %s158, 7
        %s160 = scalar_select %p159, %s158, 7
        %s161 = smul.addr %s160, 15
        %s162 = smul.addr %s161, 8
        %s163 = scalar_lea.vmem %s0, %s162
        %s164 = smul.u32 4, %s10
      $region28: #{brain_context_forward.1} parent=23 // pred_fallthru
        _
      // Predicated region
      $region29: #{brain_context_forward.1} parent=23 // pred_check
        %p165 = pneg %p56
      $region30: #{brain_context_forward.1} parent=23 // pred_check_branch
        %167 = sbr.rel (%p165) target = $region32
      $region31: #{brain_context_forward.1} parent=23 // pred_region
        %s168 = smul.u32 4, %s10
        %p169 = scmp.lt.s32.totalorder %s168, 7
        %s170 = scalar_select %p169, %s168, 7
        %s171 = scalar_lea.vmem %s1, %s170
        %s172 = smul.u32 4, %s10
      $region32: #{brain_context_forward.1} parent=23 // pred_fallthru
        _
    $region24: #{brain_context_forward.1} parent=5 // pred_fallthru
      _
    %p173 = scmp.le.s32.totalorder 1, %s10
    %p174 = scmp.lt.s32.totalorder %s10, 3
    %p175 = pnand %p173, %p174
    %p176 = pneg %p175
    // Predicated region
    $region33: #{brain_context_forward.1} parent=5 // pred_check
      _
    $region34: #{brain_context_forward.1} parent=5 // pred_check_branch
      %178 = sbr.rel (%p175) target = $region36
    $region35: #{brain_context_forward.1} parent=5 // pred_region
      %s179 = ssub.s32 %s10, 1
      %s180 = smul.u32 4, %s15
      %p181 = scmp.lt.s32.totalorder %s180, 7
      %s182 = scalar_select %p181, %s180, 7
      %s183 = smul.addr %s182, 15
      %s184 = smul.addr %s183, 8
      %s185 = scalar_lea.vmem %s0, %s184
      %p186 = pneg %p36
      %p187 = pneg %p33
      %s188 = smul.u32 4, %s15
      %p189 = scmp.lt.s32.totalorder %s188, 7
      %s190 = scalar_select %p189, %s188, 7
      %s191 = scalar_lea.vmem %s1, %s190
      %p192 = pneg %p62
      %p193 = pneg %p59
      %p194 = pneg %p83
      %p195 = pneg %p80
      %p196 = pneg %p104
      %p197 = pneg %p101
      %p198 = pneg %p130
      %p199 = pneg %p127
      %s200 = smul.u32 4, %s15
      %p201 = scmp.lt.s32.totalorder %s200, 7
      %s202 = scalar_select %p201, %s200, 7
      %s203 = smul.addr %s202, 30
      %s204 = smul.addr %s203, 8
      %s205 = scalar_lea.vmem %s4, %s204
      %s206 = smul.u32 4, %s15
      %p207 = scmp.lt.s32.totalorder %s206, 7
      %s208 = scalar_select %p207, %s206, 7
      %s209 = smul.addr %s208, 15
      %s210 = smul.addr %s209, 8
      %s211 = scalar_lea.vmem %s0, %s210
      %s212 = smul.u32 4, %s15
      %s213 = smul.u32 4, %s15
      %p214 = scmp.lt.s32.totalorder %s213, 7
      %s215 = scalar_select %p214, %s213, 7
      %s216 = scalar_lea.vmem %s1, %s215
      %s217 = smul.u32 4, %s15
      %s218 = smul.u32 4, %s15
      %p219 = scmp.lt.s32.totalorder %s218, 7
      %s220 = scalar_select %p219, %s218, 7
      %s221 = smul.addr %s220, 30
      %s222 = smul.addr %s221, 8
      %s223 = scalar_lea.vmem %s4, %s222
      %s224 = smul.u32 4, %s15
      %v226 = vld [vmem:[%s211] sm:$0xff]
      %v227 = vld [vmem:[%s211 + $0x8] sm:$0xff]
      %v228 = vld [vmem:[%s211 + $0x10] sm:$0xff]
      %v229 = vld [vmem:[%s211 + $0x18] sm:$0xff]
      %v230 = vld [vmem:[%s211 + $0x20] sm:$0xff]
      %v231 = vld [vmem:[%s211 + $0x28] sm:$0xff]
      %v232 = vld [vmem:[%s211 + $0x30] sm:$0xff]
      %v233 = vld [vmem:[%s211 + $0x38] sm:$0xff]
      %v234 = vld [vmem:[%s211 + $0x40] sm:$0xff]
      %v235 = vld [vmem:[%s211 + $0x48] sm:$0xff]
      %v236 = vld [vmem:[%s211 + $0x50] sm:$0xff]
      %v237 = vld [vmem:[%s211 + $0x58] sm:$0xff]
      %v238 = vld [vmem:[%s211 + $0x60] sm:$0xff]
      %v239 = vld [vmem:[%s211 + $0x68] sm:$0xff]
      %v240 = vld [vmem:[%s211 + $0x70] sm:$0xf]
      %v241 = vld [vmem:[%s211 + $0x78] sm:$0xff]
      %v242 = vld [vmem:[%s211 + $0x80] sm:$0xff]
      %v243 = vld [vmem:[%s211 + $0x88] sm:$0xff]
      %v244 = vld [vmem:[%s211 + $0x90] sm:$0xff]
      %v245 = vld [vmem:[%s211 + $0x98] sm:$0xff]
      %v246 = vld [vmem:[%s211 + $0xa0] sm:$0xff]
      %v247 = vld [vmem:[%s211 + $0xa8] sm:$0xff]
      %v248 = vld [vmem:[%s211 + $0xb0] sm:$0xff]
      %v249 = vld [vmem:[%s211 + $0xb8] sm:$0xff]
      %v250 = vld [vmem:[%s211 + $0xc0] sm:$0xff]
      %v251 = vld [vmem:[%s211 + $0xc8] sm:$0xff]
      %v252 = vld [vmem:[%s211 + $0xd0] sm:$0xff]
      %v253 = vld [vmem:[%s211 + $0xd8] sm:$0xff]
      %v254 = vld [vmem:[%s211 + $0xe0] sm:$0xff]
      %v255 = vld [vmem:[%s211 + $0xe8] sm:$0xf]
      %v256 = vld [vmem:[%s211 + $0xf0] sm:$0xff]
      %v257 = vld [vmem:[%s211 + $0xf8] sm:$0xff]
      %v258 = vld [vmem:[%s211 + $0x100] sm:$0xff]
      %v259 = vld [vmem:[%s211 + $0x108] sm:$0xff]
      %v260 = vld [vmem:[%s211 + $0x110] sm:$0xff]
      %v261 = vld [vmem:[%s211 + $0x118] sm:$0xff]
      %v262 = vld [vmem:[%s211 + $0x120] sm:$0xff]
      %v263 = vld [vmem:[%s211 + $0x128] sm:$0xff]
      %v264 = vld [vmem:[%s211 + $0x130] sm:$0xff]
      %v265 = vld [vmem:[%s211 + $0x138] sm:$0xff]
      %v266 = vld [vmem:[%s211 + $0x140] sm:$0xff]
      %v267 = vld [vmem:[%s211 + $0x148] sm:$0xff]
      %v268 = vld [vmem:[%s211 + $0x150] sm:$0xff]
      %v269 = vld [vmem:[%s211 + $0x158] sm:$0xff]
      %v270 = vld [vmem:[%s211 + $0x160] sm:$0xf]
      %v271 = vld [vmem:[%s211 + $0x168] sm:$0xff]
      %v272 = vld [vmem:[%s211 + $0x170] sm:$0xff]
      %v273 = vld [vmem:[%s211 + $0x178] sm:$0xff]
      %v274 = vld [vmem:[%s211 + $0x180] sm:$0xff]
      %v275 = vld [vmem:[%s211 + $0x188] sm:$0xff]
      %v276 = vld [vmem:[%s211 + $0x190] sm:$0xff]
      %v277 = vld [vmem:[%s211 + $0x198] sm:$0xff]
      %v278 = vld [vmem:[%s211 + $0x1a0] sm:$0xff]
      %v279 = vld [vmem:[%s211 + $0x1a8] sm:$0xff]
      %v280 = vld [vmem:[%s211 + $0x1b0] sm:$0xff]
      %v281 = vld [vmem:[%s211 + $0x1b8] sm:$0xff]
      %v282 = vld [vmem:[%s211 + $0x1c0] sm:$0xff]
      %v283 = vld [vmem:[%s211 + $0x1c8] sm:$0xff]
      %v284 = vld [vmem:[%s211 + $0x1d0] sm:$0xff]
      %v285 = vld [vmem:[%s211 + $0x1d8] sm:$0xf]
      %v286 = vld [vmem:[%s216] sm:$0x1]
      %v287 = vld [vmem:[%s216 + $0x1] sm:$0x1]
      %v288 = vld [vmem:[%s216 + $0x2] sm:$0x1]
      %v289 = vld [vmem:[%s216 + $0x3] sm:$0x1]
      %v290 = vld [vmem:[%s2] sm:$0x3]
      %v291 = vld [vmem:[%s3] sm:$0x3]
      %v292 = vlaneseq
      %v293 = vshrl.u32 %v292, 7
      %v294 = vadd.s32 %v293, 8
      %v295 = vadd.s32 %v293, 16
      %v296 = vadd.s32 %v293, 24
      %v297 = vadd.s32 %v293, 32
      %v298 = vadd.s32 %v293, 40
      %v299 = vadd.s32 %v293, 48
      %v300 = vadd.s32 %v293, 56
      %v301 = vadd.s32 %v293, 64
      %v302 = vadd.s32 %v293, 72
      %v303 = vadd.s32 %v293, 80
      %v304 = vadd.s32 %v293, 88
      %v305 = vadd.s32 %v293, 96
      %v306 = vadd.s32 %v293, 104
      %v307 = vadd.s32 %v293, 112
      %v308 = vlaneseq
      %v309 = vand.u32 %v308, 127
      %vm310 = vcmp.lt.s32.totalorder %v309, 58
      %v311 = vmul.u32 %v309, 2
      %vm312 = vcmp.eq.s32.totalorder %v293, %v311
      %vm313 = vcmp.eq.s32.totalorder %v294, %v311
      %vm314 = vcmp.eq.s32.totalorder %v295, %v311
      %vm315 = vcmp.eq.s32.totalorder %v296, %v311
      %vm316 = vcmp.eq.s32.totalorder %v297, %v311
      %vm317 = vcmp.eq.s32.totalorder %v298, %v311
      %vm318 = vcmp.eq.s32.totalorder %v299, %v311
      %vm319 = vcmp.eq.s32.totalorder %v300, %v311
      %vm320 = vcmp.eq.s32.totalorder %v301, %v311
      %vm321 = vcmp.eq.s32.totalorder %v302, %v311
      %vm322 = vcmp.eq.s32.totalorder %v303, %v311
      %vm323 = vcmp.eq.s32.totalorder %v304, %v311
      %vm324 = vcmp.eq.s32.totalorder %v305, %v311
      %vm325 = vcmp.eq.s32.totalorder %v306, %v311
      %vm326 = vcmp.eq.s32.totalorder %v307, %v311
      %vm327 = vmand %vm310, %vm312
      %vm328 = vmand %vm310, %vm313
      %vm329 = vmand %vm310, %vm314
      %vm330 = vmand %vm310, %vm315
      %vm331 = vmand %vm310, %vm316
      %vm332 = vmand %vm310, %vm317
      %vm333 = vmand %vm310, %vm318
      %vm334 = vmand %vm310, %vm319
      %vm335 = vmand %vm310, %vm320
      %vm336 = vmand %vm310, %vm321
      %vm337 = vmand %vm310, %vm322
      %vm338 = vmand %vm310, %vm323
      %vm339 = vmand %vm310, %vm324
      %vm340 = vmand %vm310, %vm325
      %vm341 = vmand %vm310, %vm326
      %vm342 = vcmp.ge.s32.totalorder %v309, 58
      %v343 = vsub.s32 %v311, 115
      %vm344 = vcmp.eq.s32.totalorder %v293, %v343
      %vm345 = vcmp.eq.s32.totalorder %v294, %v343
      %vm346 = vcmp.eq.s32.totalorder %v295, %v343
      %vm347 = vcmp.eq.s32.totalorder %v296, %v343
      %vm348 = vcmp.eq.s32.totalorder %v297, %v343
      %vm349 = vcmp.eq.s32.totalorder %v298, %v343
      %vm350 = vcmp.eq.s32.totalorder %v299, %v343
      %vm351 = vcmp.eq.s32.totalorder %v300, %v343
      %vm352 = vcmp.eq.s32.totalorder %v301, %v343
      %vm353 = vcmp.eq.s32.totalorder %v302, %v343
      %vm354 = vcmp.eq.s32.totalorder %v303, %v343
      %vm355 = vcmp.eq.s32.totalorder %v304, %v343
      %vm356 = vcmp.eq.s32.totalorder %v305, %v343
      %vm357 = vcmp.eq.s32.totalorder %v306, %v343
      %vm358 = vcmp.eq.s32.totalorder %v307, %v343
      %vm359 = vmand %vm342, %vm344
      %vm360 = vmand %vm342, %vm345
      %vm361 = vmand %vm342, %vm346
      %vm362 = vmand %vm342, %vm347
      %vm363 = vmand %vm342, %vm348
      %vm364 = vmand %vm342, %vm349
      %vm365 = vmand %vm342, %vm350
      %vm366 = vmand %vm342, %vm351
      %vm367 = vmand %vm342, %vm352
      %vm368 = vmand %vm342, %vm353
      %vm369 = vmand %vm342, %vm354
      %vm370 = vmand %vm342, %vm355
      %vm371 = vmand %vm342, %vm356
      %vm372 = vmand %vm342, %vm357
      %vm373 = vmand %vm342, %vm358
      %vm374 = vmor %vm327, %vm359
      %vm375 = vmor %vm328, %vm360
      %vm376 = vmor %vm329, %vm361
      %vm377 = vmor %vm330, %vm362
      %vm378 = vmor %vm331, %vm363
      %vm379 = vmor %vm332, %vm364
      %vm380 = vmor %vm333, %vm365
      %vm381 = vmor %vm334, %vm366
      %vm382 = vmor %vm335, %vm367
      %vm383 = vmor %vm336, %vm368
      %vm384 = vmor %vm337, %vm369
      %vm385 = vmor %vm338, %vm370
      %vm386 = vmor %vm339, %vm371
      %vm387 = vmor %vm340, %vm372
      %vm388 = vmor %vm341, %vm373
      %v389 = vsel %vm374, 1.0, 0.0
      %v390 = vsel %vm375, 1.0, 0.0
      %v391 = vsel %vm376, 1.0, 0.0
      %v392 = vsel %vm377, 1.0, 0.0
      %v393 = vsel %vm378, 1.0, 0.0
      %v394 = vsel %vm379, 1.0, 0.0
      %v395 = vsel %vm380, 1.0, 0.0
      %v396 = vsel %vm381, 1.0, 0.0
      %v397 = vsel %vm382, 1.0, 0.0
      %v398 = vsel %vm383, 1.0, 0.0
      %v399 = vsel %vm384, 1.0, 0.0
      %v400 = vsel %vm385, 1.0, 0.0
      %v401 = vsel %vm386, 1.0, 0.0
      %v402 = vsel %vm387, 1.0, 0.0
      %v403 = vsel %vm388, 1.0, 0.0
      %v404 = vpack.c.bf16 %v390, %v389
      %v405 = vpack.c.bf16 %v392, %v391
      %v406 = vpack.c.bf16 %v394, %v393
      %v407 = vpack.c.bf16 %v396, %v395
      %v408 = vpack.c.bf16 %v398, %v397
      %v409 = vpack.c.bf16 %v400, %v399
      %v410 = vpack.c.bf16 %v402, %v401
      %v411 = vpack.c.bf16 %v403, %v403
      %v412 = vpack.c.bf16 %v227, %v226
      %v413 = vpack.c.bf16 %v229, %v228
      %v414 = vpack.c.bf16 %v231, %v230
      %v415 = vpack.c.bf16 %v233, %v232
      %v416 = vpack.c.bf16 %v235, %v234
      %v417 = vpack.c.bf16 %v237, %v236
      %v418 = vpack.c.bf16 %v239, %v238
      %v419 = vpack.c.bf16 %v240, %v240
      %v420 = vpack.c.bf16 %v242, %v241
      %v421 = vpack.c.bf16 %v244, %v243
      %v422 = vpack.c.bf16 %v246, %v245
      %v423 = vpack.c.bf16 %v248, %v247
      %v424 = vpack.c.bf16 %v250, %v249
      %v425 = vpack.c.bf16 %v252, %v251
      %v426 = vpack.c.bf16 %v254, %v253
      %v427 = vpack.c.bf16 %v255, %v255
      %v428 = vpack.c.bf16 %v257, %v256
      %v429 = vpack.c.bf16 %v259, %v258
      %v430 = vpack.c.bf16 %v261, %v260
      %v431 = vpack.c.bf16 %v263, %v262
      %v432 = vpack.c.bf16 %v265, %v264
      %v433 = vpack.c.bf16 %v267, %v266
      %v434 = vpack.c.bf16 %v269, %v268
      %v435 = vpack.c.bf16 %v270, %v270
      %v436 = vpack.c.bf16 %v272, %v271
      %v437 = vpack.c.bf16 %v274, %v273
      %v438 = vpack.c.bf16 %v276, %v275
      %v439 = vpack.c.bf16 %v278, %v277
      %v440 = vpack.c.bf16 %v280, %v279
      %v441 = vpack.c.bf16 %v282, %v281
      %v442 = vpack.c.bf16 %v284, %v283
      %v443 = vpack.c.bf16 %v285, %v285
      %v444 = vunpack.c.l.bf16 %v412
      %v445 = vunpack.c.h.bf16 %v412
      %v446 = vunpack.c.l.bf16 %v413
      %v447 = vunpack.c.h.bf16 %v413
      %v448 = vunpack.c.l.bf16 %v414
      %v449 = vunpack.c.h.bf16 %v414
      %v450 = vunpack.c.l.bf16 %v415
      %v451 = vunpack.c.h.bf16 %v415
      %v452 = vunpack.c.l.bf16 %v416
      %v453 = vunpack.c.h.bf16 %v416
      %v454 = vunpack.c.l.bf16 %v417
      %v455 = vunpack.c.h.bf16 %v417
      %v456 = vunpack.c.l.bf16 %v418
      %v457 = vunpack.c.h.bf16 %v418
      %v458 = vunpack.c.l.bf16 %v419
      %v459 = vunpack.c.l.bf16 %v420
      %v460 = vunpack.c.h.bf16 %v420
      %v461 = vunpack.c.l.bf16 %v421
      %v462 = vunpack.c.h.bf16 %v421
      %v463 = vunpack.c.l.bf16 %v422
      %v464 = vunpack.c.h.bf16 %v422
      %v465 = vunpack.c.l.bf16 %v423
      %v466 = vunpack.c.h.bf16 %v423
      %v467 = vunpack.c.l.bf16 %v424
      %v468 = vunpack.c.h.bf16 %v424
      %v469 = vunpack.c.l.bf16 %v425
      %v470 = vunpack.c.h.bf16 %v425
      %v471 = vunpack.c.l.bf16 %v426
      %v472 = vunpack.c.h.bf16 %v426
      %v473 = vunpack.c.l.bf16 %v427
      %v474 = vunpack.c.l.bf16 %v428
      %v475 = vunpack.c.h.bf16 %v428
      %v476 = vunpack.c.l.bf16 %v429
      %v477 = vunpack.c.h.bf16 %v429
      %v478 = vunpack.c.l.bf16 %v430
      %v479 = vunpack.c.h.bf16 %v430
      %v480 = vunpack.c.l.bf16 %v431
      %v481 = vunpack.c.h.bf16 %v431
      %v482 = vunpack.c.l.bf16 %v432
      %v483 = vunpack.c.h.bf16 %v432
      %v484 = vunpack.c.l.bf16 %v433
      %v485 = vunpack.c.h.bf16 %v433
      %v486 = vunpack.c.l.bf16 %v434
      %v487 = vunpack.c.h.bf16 %v434
      %v488 = vunpack.c.l.bf16 %v435
      %v489 = vunpack.c.l.bf16 %v436
      %v490 = vunpack.c.h.bf16 %v436
      %v491 = vunpack.c.l.bf16 %v437
      %v492 = vunpack.c.h.bf16 %v437
      %v493 = vunpack.c.l.bf16 %v438
      %v494 = vunpack.c.h.bf16 %v438
      %v495 = vunpack.c.l.bf16 %v439
      %v496 = vunpack.c.h.bf16 %v439
      %v497 = vunpack.c.l.bf16 %v440
      %v498 = vunpack.c.h.bf16 %v440
      %v499 = vunpack.c.l.bf16 %v441
      %v500 = vunpack.c.h.bf16 %v441
      %v501 = vunpack.c.l.bf16 %v442
      %v502 = vunpack.c.h.bf16 %v442
      %v503 = vunpack.c.l.bf16 %v443
      %v504 = vsub.f32 %v226, %v444
      %v505 = vsub.f32 %v227, %v445
      %v506 = vsub.f32 %v228, %v446
      %v507 = vsub.f32 %v229, %v447
      %v508 = vsub.f32 %v230, %v448
      %v509 = vsub.f32 %v231, %v449
      %v510 = vsub.f32 %v232, %v450
      %v511 = vsub.f32 %v233, %v451
      %v512 = vsub.f32 %v234, %v452
      %v513 = vsub.f32 %v235, %v453
      %v514 = vsub.f32 %v236, %v454
      %v515 = vsub.f32 %v237, %v455
      %v516 = vsub.f32 %v238, %v456
      %v517 = vsub.f32 %v239, %v457
      %v518 = vsub.f32 %v240, %v458
      %v519 = vsub.f32 %v241, %v459
      %v520 = vsub.f32 %v242, %v460
      %v521 = vsub.f32 %v243, %v461
      %v522 = vsub.f32 %v244, %v462
      %v523 = vsub.f32 %v245, %v463
      %v524 = vsub.f32 %v246, %v464
      %v525 = vsub.f32 %v247, %v465
      %v526 = vsub.f32 %v248, %v466
      %v527 = vsub.f32 %v249, %v467
      %v528 = vsub.f32 %v250, %v468
      %v529 = vsub.f32 %v251, %v469
      %v530 = vsub.f32 %v252, %v470
      %v531 = vsub.f32 %v253, %v471
      %v532 = vsub.f32 %v254, %v472
      %v533 = vsub.f32 %v255, %v473
      %v534 = vsub.f32 %v256, %v474
      %v535 = vsub.f32 %v257, %v475
      %v536 = vsub.f32 %v258, %v476
      %v537 = vsub.f32 %v259, %v477
      %v538 = vsub.f32 %v260, %v478
      %v539 = vsub.f32 %v261, %v479
      %v540 = vsub.f32 %v262, %v480
      %v541 = vsub.f32 %v263, %v481
      %v542 = vsub.f32 %v264, %v482
      %v543 = vsub.f32 %v265, %v483
      %v544 = vsub.f32 %v266, %v484
      %v545 = vsub.f32 %v267, %v485
      %v546 = vsub.f32 %v268, %v486
      %v547 = vsub.f32 %v269, %v487
      %v548 = vsub.f32 %v270, %v488
      %v549 = vsub.f32 %v271, %v489
      %v550 = vsub.f32 %v272, %v490
      %v551 = vsub.f32 %v273, %v491
      %v552 = vsub.f32 %v274, %v492
      %v553 = vsub.f32 %v275, %v493
      %v554 = vsub.f32 %v276, %v494
      %v555 = vsub.f32 %v277, %v495
      %v556 = vsub.f32 %v278, %v496
      %v557 = vsub.f32 %v279, %v497
      %v558 = vsub.f32 %v280, %v498
      %v559 = vsub.f32 %v281, %v499
      %v560 = vsub.f32 %v282, %v500
      %v561 = vsub.f32 %v283, %v501
      %v562 = vsub.f32 %v284, %v502
      %v563 = vsub.f32 %v285, %v503
      %v564 = vpack.c.bf16 %v505, %v504
      %v565 = vpack.c.bf16 %v507, %v506
      %v566 = vpack.c.bf16 %v509, %v508
      %v567 = vpack.c.bf16 %v511, %v510
      %v568 = vpack.c.bf16 %v513, %v512
      %v569 = vpack.c.bf16 %v515, %v514
      %v570 = vpack.c.bf16 %v517, %v516
      %v571 = vpack.c.bf16 %v518, %v518
      %v572 = vpack.c.bf16 %v520, %v519
      %v573 = vpack.c.bf16 %v522, %v521
      %v574 = vpack.c.bf16 %v524, %v523
      %v575 = vpack.c.bf16 %v526, %v525
      %v576 = vpack.c.bf16 %v528, %v527
      %v577 = vpack.c.bf16 %v530, %v529
      %v578 = vpack.c.bf16 %v532, %v531
      %v579 = vpack.c.bf16 %v533, %v533
      %v580 = vpack.c.bf16 %v535, %v534
      %v581 = vpack.c.bf16 %v537, %v536
      %v582 = vpack.c.bf16 %v539, %v538
      %v583 = vpack.c.bf16 %v541, %v540
      %v584 = vpack.c.bf16 %v543, %v542
      %v585 = vpack.c.bf16 %v545, %v544
      %v586 = vpack.c.bf16 %v547, %v546
      %v587 = vpack.c.bf16 %v548, %v548
      %v588 = vpack.c.bf16 %v550, %v549
      %v589 = vpack.c.bf16 %v552, %v551
      %v590 = vpack.c.bf16 %v554, %v553
      %v591 = vpack.c.bf16 %v556, %v555
      %v592 = vpack.c.bf16 %v558, %v557
      %v593 = vpack.c.bf16 %v560, %v559
      %v594 = vpack.c.bf16 %v562, %v561
      %v595 = vpack.c.bf16 %v563, %v563
      %v596 = vunpack.c.l.bf16 %v564
      %v597 = vunpack.c.h.bf16 %v564
      %v598 = vunpack.c.l.bf16 %v565
      %v599 = vunpack.c.h.bf16 %v565
      %v600 = vunpack.c.l.bf16 %v566
      %v601 = vunpack.c.h.bf16 %v566
      %v602 = vunpack.c.l.bf16 %v567
      %v603 = vunpack.c.h.bf16 %v567
      %v604 = vunpack.c.l.bf16 %v568
      %v605 = vunpack.c.h.bf16 %v568
      %v606 = vunpack.c.l.bf16 %v569
      %v607 = vunpack.c.h.bf16 %v569
      %v608 = vunpack.c.l.bf16 %v570
      %v609 = vunpack.c.h.bf16 %v570
      %v610 = vunpack.c.l.bf16 %v571
      %v611 = vunpack.c.l.bf16 %v572
      %v612 = vunpack.c.h.bf16 %v572
      %v613 = vunpack.c.l.bf16 %v573
      %v614 = vunpack.c.h.bf16 %v573
      %v615 = vunpack.c.l.bf16 %v574
      %v616 = vunpack.c.h.bf16 %v574
      %v617 = vunpack.c.l.bf16 %v575
      %v618 = vunpack.c.h.bf16 %v575
      %v619 = vunpack.c.l.bf16 %v576
      %v620 = vunpack.c.h.bf16 %v576
      %v621 = vunpack.c.l.bf16 %v577
      %v622 = vunpack.c.h.bf16 %v577
      %v623 = vunpack.c.l.bf16 %v578
      %v624 = vunpack.c.h.bf16 %v578
      %v625 = vunpack.c.l.bf16 %v579
      %v626 = vunpack.c.l.bf16 %v580
      %v627 = vunpack.c.h.bf16 %v580
      %v628 = vunpack.c.l.bf16 %v581
      %v629 = vunpack.c.h.bf16 %v581
      %v630 = vunpack.c.l.bf16 %v582
      %v631 = vunpack.c.h.bf16 %v582
      %v632 = vunpack.c.l.bf16 %v583
      %v633 = vunpack.c.h.bf16 %v583
      %v634 = vunpack.c.l.bf16 %v584
      %v635 = vunpack.c.h.bf16 %v584
      %v636 = vunpack.c.l.bf16 %v585
      %v637 = vunpack.c.h.bf16 %v585
      %v638 = vunpack.c.l.bf16 %v586
      %v639 = vunpack.c.h.bf16 %v586
      %v640 = vunpack.c.l.bf16 %v587
      %v641 = vunpack.c.l.bf16 %v588
      %v642 = vunpack.c.h.bf16 %v588
      %v643 = vunpack.c.l.bf16 %v589
      %v644 = vunpack.c.h.bf16 %v589
      %v645 = vunpack.c.l.bf16 %v590
      %v646 = vunpack.c.h.bf16 %v590
      %v647 = vunpack.c.l.bf16 %v591
      %v648 = vunpack.c.h.bf16 %v591
      %v649 = vunpack.c.l.bf16 %v592
      %v650 = vunpack.c.h.bf16 %v592
      %v651 = vunpack.c.l.bf16 %v593
      %v652 = vunpack.c.h.bf16 %v593
      %v653 = vunpack.c.l.bf16 %v594
      %v654 = vunpack.c.h.bf16 %v594
      %v655 = vunpack.c.l.bf16 %v595
      %v656 = vsub.f32 %v504, %v596
      %v657 = vsub.f32 %v505, %v597
      %v658 = vsub.f32 %v506, %v598
      %v659 = vsub.f32 %v507, %v599
      %v660 = vsub.f32 %v508, %v600
      %v661 = vsub.f32 %v509, %v601
      %v662 = vsub.f32 %v510, %v602
      %v663 = vsub.f32 %v511, %v603
      %v664 = vsub.f32 %v512, %v604
      %v665 = vsub.f32 %v513, %v605
      %v666 = vsub.f32 %v514, %v606
      %v667 = vsub.f32 %v515, %v607
      %v668 = vsub.f32 %v516, %v608
      %v669 = vsub.f32 %v517, %v609
      %v670 = vsub.f32 %v518, %v610
      %v671 = vsub.f32 %v519, %v611
      %v672 = vsub.f32 %v520, %v612
      %v673 = vsub.f32 %v521, %v613
      %v674 = vsub.f32 %v522, %v614
      %v675 = vsub.f32 %v523, %v615
      %v676 = vsub.f32 %v524, %v616
      %v677 = vsub.f32 %v525, %v617
      %v678 = vsub.f32 %v526, %v618
      %v679 = vsub.f32 %v527, %v619
      %v680 = vsub.f32 %v528, %v620
      %v681 = vsub.f32 %v529, %v621
      %v682 = vsub.f32 %v530, %v622
      %v683 = vsub.f32 %v531, %v623
      %v684 = vsub.f32 %v532, %v624
      %v685 = vsub.f32 %v533, %v625
      %v686 = vsub.f32 %v534, %v626
      %v687 = vsub.f32 %v535, %v627
      %v688 = vsub.f32 %v536, %v628
      %v689 = vsub.f32 %v537, %v629
      %v690 = vsub.f32 %v538, %v630
      %v691 = vsub.f32 %v539, %v631
      %v692 = vsub.f32 %v540, %v632
      %v693 = vsub.f32 %v541, %v633
      %v694 = vsub.f32 %v542, %v634
      %v695 = vsub.f32 %v543, %v635
      %v696 = vsub.f32 %v544, %v636
      %v697 = vsub.f32 %v545, %v637
      %v698 = vsub.f32 %v546, %v638
      %v699 = vsub.f32 %v547, %v639
      %v700 = vsub.f32 %v548, %v640
      %v701 = vsub.f32 %v549, %v641
      %v702 = vsub.f32 %v550, %v642
      %v703 = vsub.f32 %v551, %v643
      %v704 = vsub.f32 %v552, %v644
      %v705 = vsub.f32 %v553, %v645
      %v706 = vsub.f32 %v554, %v646
      %v707 = vsub.f32 %v555, %v647
      %v708 = vsub.f32 %v556, %v648
      %v709 = vsub.f32 %v557, %v649
      %v710 = vsub.f32 %v558, %v650
      %v711 = vsub.f32 %v559, %v651
      %v712 = vsub.f32 %v560, %v652
      %v713 = vsub.f32 %v561, %v653
      %v714 = vsub.f32 %v562, %v654
      %v715 = vsub.f32 %v563, %v655
      %v716 = vpack.c.bf16 %v657, %v656
      %v717 = vpack.c.bf16 %v659, %v658
      %v718 = vpack.c.bf16 %v661, %v660
      %v719 = vpack.c.bf16 %v663, %v662
      %v720 = vpack.c.bf16 %v665, %v664
      %v721 = vpack.c.bf16 %v667, %v666
      %v722 = vpack.c.bf16 %v669, %v668
      %v723 = vpack.c.bf16 %v670, %v670
      %v724 = vpack.c.bf16 %v672, %v671
      %v725 = vpack.c.bf16 %v674, %v673
      %v726 = vpack.c.bf16 %v676, %v675
      %v727 = vpack.c.bf16 %v678, %v677
      %v728 = vpack.c.bf16 %v680, %v679
      %v729 = vpack.c.bf16 %v682, %v681
      %v730 = vpack.c.bf16 %v684, %v683
      %v731 = vpack.c.bf16 %v685, %v685
      %v732 = vpack.c.bf16 %v687, %v686
      %v733 = vpack.c.bf16 %v689, %v688
      %v734 = vpack.c.bf16 %v691, %v690
      %v735 = vpack.c.bf16 %v693, %v692
      %v736 = vpack.c.bf16 %v695, %v694
      %v737 = vpack.c.bf16 %v697, %v696
      %v738 = vpack.c.bf16 %v699, %v698
      %v739 = vpack.c.bf16 %v700, %v700
      %v740 = vpack.c.bf16 %v702, %v701
      %v741 = vpack.c.bf16 %v704, %v703
      %v742 = vpack.c.bf16 %v706, %v705
      %v743 = vpack.c.bf16 %v708, %v707
      %v744 = vpack.c.bf16 %v710, %v709
      %v745 = vpack.c.bf16 %v712, %v711
      %v746 = vpack.c.bf16 %v714, %v713
      %v747 = vpack.c.bf16 %v715, %v715
      %vm748 = vcmask 949248
      %v750 = vsel %vm748, %v564, 0
      %v753 = vsel %vm748, %v565, 0
      %v756 = vsel %vm748, %v566, 0
      %v759 = vsel %vm748, %v567, 0
      %v762 = vsel %vm748, %v568, 0
      %v765 = vsel %vm748, %v569, 0
      %v768 = vsel %vm748, %v570, 0
      %v771 = vsel %vm748, %v571, 0
      %vm773 = vcmask 1041408
      %v775 = vsel %vm773, %v411, 0
      %777 = vmatprep.subr.bf16.mxu0 0
      %778 = vmatpush1.bf16.msra.mxu0 %v775
      %779 = vmatprep.subr.bf16.mxu0 0
      %780 = vmatpush1.bf16.msra.mxu0 %v410
      %781 = vmatprep.subr.bf16.mxu0 0
      %782 = vmatpush1.bf16.msra.mxu0 %v409
      %783 = vmatprep.subr.bf16.mxu0 0
      %784 = vmatpush1.bf16.msra.mxu0 %v408
      %785 = vmatprep.subr.bf16.mxu0 0
      %786 = vmatpush1.bf16.msra.mxu0 %v407
      %787 = vmatprep.subr.bf16.mxu0 0
      %788 = vmatpush1.bf16.msra.mxu0 %v406
      %789 = vmatprep.subr.bf16.mxu0 0
      %790 = vmatpush1.bf16.msra.mxu0 %v405
      %791 = vmatprep.subr.bf16.mxu0 0
      %792 = vmatpush1.bf16.msra.mxu0 %v404
      %793 = vmatprep.subr.bf16.mxu0 0
      %794 = vmatpush2.bf16.msra.mxu0 0
      %795 = vmatprep.subr.bf16.mxu0 0
      %796 = vmatpush2.bf16.msra.mxu0 0
      %797 = vmatprep.subr.bf16.mxu0 0
      %798 = vmatpush2.bf16.msra.mxu0 0
      %799 = vmatprep.subr.bf16.mxu0 0
      %800 = vmatpush2.bf16.msra.mxu0 0
      %801 = vmatprep.subr.bf16.mxu0 0
      %802 = vmatpush2.bf16.msra.mxu0 0
      %803 = vmatprep.subr.bf16.mxu0 0
      %804 = vmatpush2.bf16.msra.mxu0 0
      %805 = vmatprep.subr.bf16.mxu0 0
      %806 = vmatpush2.bf16.msra.mxu0 0
      %807 = vmatprep.subr.bf16.mxu0 0
      %808 = vmatpush2.bf16.msra.mxu0 0
      %809 = vmatprep.mubr.bf16.mxu0 0
      %810 = vmatmul.mubr.bf16.gmra.mxu0 %v750
      %v811 = vpop.f32.mrf.mxu0
      %v812 = vadd.f32 0.0, %v811
      %v813 = vpop.f32.mrf.mxu0
      %v814 = vpop.f32.mrf.mxu0
      %v815 = vadd.f32 0.0, %v814
      %v816 = vpop.f32.mrf.mxu0
      %817 = vmatprep.mubr.bf16.mxu0 0
      %818 = vmatmul.mubr.bf16.gmra.mxu0 %v753
      %v819 = vpop.f32.mrf.mxu0
      %v820 = vadd.f32 0.0, %v819
      %v821 = vpop.f32.mrf.mxu0
      %v822 = vpop.f32.mrf.mxu0
      %v823 = vadd.f32 0.0, %v822
      %v824 = vpop.f32.mrf.mxu0
      %825 = vmatprep.mubr.bf16.mxu0 0
      %826 = vmatmul.mubr.bf16.gmra.mxu0 %v756
      %v827 = vpop.f32.mrf.mxu0
      %v828 = vadd.f32 0.0, %v827
      %v829 = vpop.f32.mrf.mxu0
      %v830 = vpop.f32.mrf.mxu0
      %v831 = vadd.f32 0.0, %v830
      %v832 = vpop.f32.mrf.mxu0
      %833 = vmatprep.mubr.bf16.mxu0 0
      %834 = vmatmul.mubr.bf16.gmra.mxu0 %v759
      %v835 = vpop.f32.mrf.mxu0
      %v836 = vadd.f32 0.0, %v835
      %v837 = vpop.f32.mrf.mxu0
      %v838 = vpop.f32.mrf.mxu0
      %v839 = vadd.f32 0.0, %v838
      %v840 = vpop.f32.mrf.mxu0
      %841 = vmatprep.mubr.bf16.mxu0 0
      %842 = vmatmul.mubr.bf16.gmra.mxu0 %v762
      %v843 = vpop.f32.mrf.mxu0
      %v844 = vadd.f32 0.0, %v843
      %v845 = vpop.f32.mrf.mxu0
      %v846 = vpop.f32.mrf.mxu0
      %v847 = vadd.f32 0.0, %v846
      %v848 = vpop.f32.mrf.mxu0
      %849 = vmatprep.mubr.bf16.mxu0 0
      %850 = vmatmul.mubr.bf16.gmra.mxu0 %v765
      %v851 = vpop.f32.mrf.mxu0
      %v852 = vadd.f32 0.0, %v851
      %v853 = vpop.f32.mrf.mxu0
      %v854 = vpop.f32.mrf.mxu0
      %v855 = vadd.f32 0.0, %v854
      %v856 = vpop.f32.mrf.mxu0
      %857 = vmatprep.mubr.bf16.mxu0 0
      %858 = vmatmul.mubr.bf16.gmra.mxu0 %v768
      %v859 = vpop.f32.mrf.mxu0
      %v860 = vadd.f32 0.0, %v859
      %v861 = vpop.f32.mrf.mxu0
      %v862 = vpop.f32.mrf.mxu0
      %v863 = vadd.f32 0.0, %v862
      %v864 = vpop.f32.mrf.mxu0
      %865 = vmatprep.mubr.bf16.mxu0 0
      %866 = vmatmul.mubr.bf16.gmra.mxu0 %v771
      %v867 = vpop.f32.mrf.mxu0
      %v868 = vadd.f32 0.0, %v867
      %v869 = vpop.f32.mrf.mxu0
      %v870 = vpop.f32.mrf.mxu0
      %v871 = vpop.f32.mrf.mxu0
      %872 = vdwg.mxu0
      %v874 = vsel %vm748, %v572, 0
      %v877 = vsel %vm748, %v573, 0
      %v880 = vsel %vm748, %v574, 0
      %v883 = vsel %vm748, %v575, 0
      %v886 = vsel %vm748, %v576, 0
      %v889 = vsel %vm748, %v577, 0
      %v892 = vsel %vm748, %v578, 0
      %v895 = vsel %vm748, %v579, 0
      %897 = vmatprep.subr.bf16.mxu0 0
      %898 = vmatpush1.bf16.msra.mxu0 %v775
      %899 = vmatprep.subr.bf16.mxu0 0
      %900 = vmatpush1.bf16.msra.mxu0 %v410
      %901 = vmatprep.subr.bf16.mxu0 0
      %902 = vmatpush1.bf16.msra.mxu0 %v409
      %903 = vmatprep.subr.bf16.mxu0 0
      %904 = vmatpush1.bf16.msra.mxu0 %v408
      %905 = vmatprep.subr.bf16.mxu0 0
      %906 = vmatpush1.bf16.msra.mxu0 %v407
      %907 = vmatprep.subr.bf16.mxu0 0
      %908 = vmatpush1.bf16.msra.mxu0 %v406
      %909 = vmatprep.subr.bf16.mxu0 0
      %910 = vmatpush1.bf16.msra.mxu0 %v405
      %911 = vmatprep.subr.bf16.mxu0 0
      %912 = vmatpush1.bf16.msra.mxu0 %v404
      %913 = vmatprep.subr.bf16.mxu0 0
      %914 = vmatpush2.bf16.msra.mxu0 0
      %915 = vmatprep.subr.bf16.mxu0 0
      %916 = vmatpush2.bf16.msra.mxu0 0
      %917 = vmatprep.subr.bf16.mxu0 0
      %918 = vmatpush2.bf16.msra.mxu0 0
      %919 = vmatprep.subr.bf16.mxu0 0
      %920 = vmatpush2.bf16.msra.mxu0 0
      %921 = vmatprep.subr.bf16.mxu0 0
      %922 = vmatpush2.bf16.msra.mxu0 0
      %923 = vmatprep.subr.bf16.mxu0 0
      %924 = vmatpush2.bf16.msra.mxu0 0
      %925 = vmatprep.subr.bf16.mxu0 0
      %926 = vmatpush2.bf16.msra.mxu0 0
      %927 = vmatprep.subr.bf16.mxu0 0
      %928 = vmatpush2.bf16.msra.mxu0 0
      %929 = vmatprep.mubr.bf16.mxu0 0
      %930 = vmatmul.mubr.bf16.gmra.mxu0 %v874
      %v931 = vpop.f32.mrf.mxu0
      %v932 = vadd.f32 0.0, %v931
      %v933 = vpop.f32.mrf.mxu0
      %v934 = vpop.f32.mrf.mxu0
      %v935 = vadd.f32 0.0, %v934
      %v936 = vpop.f32.mrf.mxu0
      %937 = vmatprep.mubr.bf16.mxu0 0
      %938 = vmatmul.mubr.bf16.gmra.mxu0 %v877
      %v939 = vpop.f32.mrf.mxu0
      %v940 = vadd.f32 0.0, %v939
      %v941 = vpop.f32.mrf.mxu0
      %v942 = vpop.f32.mrf.mxu0
      %v943 = vadd.f32 0.0, %v942
      %v944 = vpop.f32.mrf.mxu0
      %945 = vmatprep.mubr.bf16.mxu0 0
      %946 = vmatmul.mubr.bf16.gmra.mxu0 %v880
      %v947 = vpop.f32.mrf.mxu0
      %v948 = vadd.f32 0.0, %v947
      %v949 = vpop.f32.mrf.mxu0
      %v950 = vpop.f32.mrf.mxu0
      %v951 = vadd.f32 0.0, %v950
      %v952 = vpop.f32.mrf.mxu0
      %953 = vmatprep.mubr.bf16.mxu0 0
      %954 = vmatmul.mubr.bf16.gmra.mxu0 %v883
      %v955 = vpop.f32.mrf.mxu0
      %v956 = vadd.f32 0.0, %v955
      %v957 = vpop.f32.mrf.mxu0
      %v958 = vpop.f32.mrf.mxu0
      %v959 = vadd.f32 0.0, %v958
      %v960 = vpop.f32.mrf.mxu0
      %961 = vmatprep.mubr.bf16.mxu0 0
      %962 = vmatmul.mubr.bf16.gmra.mxu0 %v886
      %v963 = vpop.f32.mrf.mxu0
      %v964 = vadd.f32 0.0, %v963
      %v965 = vpop.f32.mrf.mxu0
      %v966 = vpop.f32.mrf.mxu0
      %v967 = vadd.f32 0.0, %v966
      %v968 = vpop.f32.mrf.mxu0
      %969 = vmatprep.mubr.bf16.mxu0 0
      %970 = vmatmul.mubr.bf16.gmra.mxu0 %v889
      %v971 = vpop.f32.mrf.mxu0
      %v972 = vadd.f32 0.0, %v971
      %v973 = vpop.f32.mrf.mxu0
      %v974 = vpop.f32.mrf.mxu0
      %v975 = vadd.f32 0.0, %v974
      %v976 = vpop.f32.mrf.mxu0
      %977 = vmatprep.mubr.bf16.mxu0 0
      %978 = vmatmul.mubr.bf16.gmra.mxu0 %v892
      %v979 = vpop.f32.mrf.mxu0
      %v980 = vadd.f32 0.0, %v979
      %v981 = vpop.f32.mrf.mxu0
      %v982 = vpop.f32.mrf.mxu0
      %v983 = vadd.f32 0.0, %v982
      %v984 = vpop.f32.mrf.mxu0
      %985 = vmatprep.mubr.bf16.mxu0 0
      %986 = vmatmul.mubr.bf16.gmra.mxu0 %v895
      %v987 = vpop.f32.mrf.mxu0
      %v988 = vadd.f32 0.0, %v987
      %v989 = vpop.f32.mrf.mxu0
      %v990 = vpop.f32.mrf.mxu0
      %v991 = vpop.f32.mrf.mxu0
      %992 = vdwg.mxu0
      %v994 = vsel %vm748, %v580, 0
      %v997 = vsel %vm748, %v581, 0
      %v1000 = vsel %vm748, %v582, 0
      %v1003 = vsel %vm748, %v583, 0
      %v1006 = vsel %vm748, %v584, 0
      %v1009 = vsel %vm748, %v585, 0
      %v1012 = vsel %vm748, %v586, 0
      %v1015 = vsel %vm748, %v587, 0
      %1017 = vmatprep.subr.bf16.mxu0 0
      %1018 = vmatpush1.bf16.msra.mxu0 %v775
      %1019 = vmatprep.subr.bf16.mxu0 0
      %1020 = vmatpush1.bf16.msra.mxu0 %v410
      %1021 = vmatprep.subr.bf16.mxu0 0
      %1022 = vmatpush1.bf16.msra.mxu0 %v409
      %1023 = vmatprep.subr.bf16.mxu0 0
      %1024 = vmatpush1.bf16.msra.mxu0 %v408
      %1025 = vmatprep.subr.bf16.mxu0 0
      %1026 = vmatpush1.bf16.msra.mxu0 %v407
      %1027 = vmatprep.subr.bf16.mxu0 0
      %1028 = vmatpush1.bf16.msra.mxu0 %v406
      %1029 = vmatprep.subr.bf16.mxu0 0
      %1030 = vmatpush1.bf16.msra.mxu0 %v405
      %1031 = vmatprep.subr.bf16.mxu0 0
      %1032 = vmatpush1.bf16.msra.mxu0 %v404
      %1033 = vmatprep.subr.bf16.mxu0 0
      %1034 = vmatpush2.bf16.msra.mxu0 0
      %1035 = vmatprep.subr.bf16.mxu0 0
      %1036 = vmatpush2.bf16.msra.mxu0 0
      %1037 = vmatprep.subr.bf16.mxu0 0
      %1038 = vmatpush2.bf16.msra.mxu0 0
      %1039 = vmatprep.subr.bf16.mxu0 0
      %1040 = vmatpush2.bf16.msra.mxu0 0
      %1041 = vmatprep.subr.bf16.mxu0 0
      %1042 = vmatpush2.bf16.msra.mxu0 0
      %1043 = vmatprep.subr.bf16.mxu0 0
      %1044 = vmatpush2.bf16.msra.mxu0 0
      %1045 = vmatprep.subr.bf16.mxu0 0
      %1046 = vmatpush2.bf16.msra.mxu0 0
      %1047 = vmatprep.subr.bf16.mxu0 0
      %1048 = vmatpush2.bf16.msra.mxu0 0
      %1049 = vmatprep.mubr.bf16.mxu0 0
      %1050 = vmatmul.mubr.bf16.gmra.mxu0 %v994
      %v1051 = vpop.f32.mrf.mxu0
      %v1052 = vadd.f32 0.0, %v1051
      %v1053 = vpop.f32.mrf.mxu0
      %v1054 = vpop.f32.mrf.mxu0
      %v1055 = vadd.f32 0.0, %v1054
      %v1056 = vpop.f32.mrf.mxu0
      %1057 = vmatprep.mubr.bf16.mxu0 0
      %1058 = vmatmul.mubr.bf16.gmra.mxu0 %v997
      %v1059 = vpop.f32.mrf.mxu0
      %v1060 = vadd.f32 0.0, %v1059
      %v1061 = vpop.f32.mrf.mxu0
      %v1062 = vpop.f32.mrf.mxu0
      %v1063 = vadd.f32 0.0, %v1062
      %v1064 = vpop.f32.mrf.mxu0
      %1065 = vmatprep.mubr.bf16.mxu0 0
      %1066 = vmatmul.mubr.bf16.gmra.mxu0 %v1000
      %v1067 = vpop.f32.mrf.mxu0
      %v1068 = vadd.f32 0.0, %v1067
      %v1069 = vpop.f32.mrf.mxu0
      %v1070 = vpop.f32.mrf.mxu0
      %v1071 = vadd.f32 0.0, %v1070
      %v1072 = vpop.f32.mrf.mxu0
      %1073 = vmatprep.mubr.bf16.mxu0 0
      %1074 = vmatmul.mubr.bf16.gmra.mxu0 %v1003
      %v1075 = vpop.f32.mrf.mxu0
      %v1076 = vadd.f32 0.0, %v1075
      %v1077 = vpop.f32.mrf.mxu0
      %v1078 = vpop.f32.mrf.mxu0
      %v1079 = vadd.f32 0.0, %v1078
      %v1080 = vpop.f32.mrf.mxu0
      %1081 = vmatprep.mubr.bf16.mxu0 0
      %1082 = vmatmul.mubr.bf16.gmra.mxu0 %v1006
      %v1083 = vpop.f32.mrf.mxu0
      %v1084 = vadd.f32 0.0, %v1083
      %v1085 = vpop.f32.mrf.mxu0
      %v1086 = vpop.f32.mrf.mxu0
      %v1087 = vadd.f32 0.0, %v1086
      %v1088 = vpop.f32.mrf.mxu0
      %1089 = vmatprep.mubr.bf16.mxu0 0
      %1090 = vmatmul.mubr.bf16.gmra.mxu0 %v1009
      %v1091 = vpop.f32.mrf.mxu0
      %v1092 = vadd.f32 0.0, %v1091
      %v1093 = vpop.f32.mrf.mxu0
      %v1094 = vpop.f32.mrf.mxu0
      %v1095 = vadd.f32 0.0, %v1094
      %v1096 = vpop.f32.mrf.mxu0
      %1097 = vmatprep.mubr.bf16.mxu0 0
      %1098 = vmatmul.mubr.bf16.gmra.mxu0 %v1012
      %v1099 = vpop.f32.mrf.mxu0
      %v1100 = vadd.f32 0.0, %v1099
      %v1101 = vpop.f32.mrf.mxu0
      %v1102 = vpop.f32.mrf.mxu0
      %v1103 = vadd.f32 0.0, %v1102
      %v1104 = vpop.f32.mrf.mxu0
      %1105 = vmatprep.mubr.bf16.mxu0 0
      %1106 = vmatmul.mubr.bf16.gmra.mxu0 %v1015
      %v1107 = vpop.f32.mrf.mxu0
      %v1108 = vadd.f32 0.0, %v1107
      %v1109 = vpop.f32.mrf.mxu0
      %v1110 = vpop.f32.mrf.mxu0
      %v1111 = vpop.f32.mrf.mxu0
      %1112 = vdwg.mxu0
      %v1114 = vsel %vm748, %v588, 0
      %v1117 = vsel %vm748, %v589, 0
      %v1120 = vsel %vm748, %v590, 0
      %v1123 = vsel %vm748, %v591, 0
      %v1126 = vsel %vm748, %v592, 0
      %v1129 = vsel %vm748, %v593, 0
      %v1132 = vsel %vm748, %v594, 0
      %v1135 = vsel %vm748, %v595, 0
      %1137 = vmatprep.subr.bf16.mxu0 0
      %1138 = vmatpush1.bf16.msra.mxu0 %v775
      %1139 = vmatprep.subr.bf16.mxu0 0
      %1140 = vmatpush1.bf16.msra.mxu0 %v410
      %1141 = vmatprep.subr.bf16.mxu0 0
      %1142 = vmatpush1.bf16.msra.mxu0 %v409
      %1143 = vmatprep.subr.bf16.mxu0 0
      %1144 = vmatpush1.bf16.msra.mxu0 %v408
      %1145 = vmatprep.subr.bf16.mxu0 0
      %1146 = vmatpush1.bf16.msra.mxu0 %v407
      %1147 = vmatprep.subr.bf16.mxu0 0
      %1148 = vmatpush1.bf16.msra.mxu0 %v406
      %1149 = vmatprep.subr.bf16.mxu0 0
      %1150 = vmatpush1.bf16.msra.mxu0 %v405
      %1151 = vmatprep.subr.bf16.mxu0 0
      %1152 = vmatpush1.bf16.msra.mxu0 %v404
      %1153 = vmatprep.subr.bf16.mxu0 0
      %1154 = vmatpush2.bf16.msra.mxu0 0
      %1155 = vmatprep.subr.bf16.mxu0 0
      %1156 = vmatpush2.bf16.msra.mxu0 0
      %1157 = vmatprep.subr.bf16.mxu0 0
      %1158 = vmatpush2.bf16.msra.mxu0 0
      %1159 = vmatprep.subr.bf16.mxu0 0
      %1160 = vmatpush2.bf16.msra.mxu0 0
      %1161 = vmatprep.subr.bf16.mxu0 0
      %1162 = vmatpush2.bf16.msra.mxu0 0
      %1163 = vmatprep.subr.bf16.mxu0 0
      %1164 = vmatpush2.bf16.msra.mxu0 0
      %1165 = vmatprep.subr.bf16.mxu0 0
      %1166 = vmatpush2.bf16.msra.mxu0 0
      %1167 = vmatprep.subr.bf16.mxu0 0
      %1168 = vmatpush2.bf16.msra.mxu0 0
      %1169 = vmatprep.mubr.bf16.mxu0 0
      %1170 = vmatmul.mubr.bf16.gmra.mxu0 %v1114
      %v1171 = vpop.f32.mrf.mxu0
      %v1172 = vadd.f32 0.0, %v1171
      %v1173 = vpop.f32.mrf.mxu0
      %v1174 = vpop.f32.mrf.mxu0
      %v1175 = vadd.f32 0.0, %v1174
      %v1176 = vpop.f32.mrf.mxu0
      %1177 = vmatprep.mubr.bf16.mxu0 0
      %1178 = vmatmul.mubr.bf16.gmra.mxu0 %v1117
      %v1179 = vpop.f32.mrf.mxu0
      %v1180 = vadd.f32 0.0, %v1179
      %v1181 = vpop.f32.mrf.mxu0
      %v1182 = vpop.f32.mrf.mxu0
      %v1183 = vadd.f32 0.0, %v1182
      %v1184 = vpop.f32.mrf.mxu0
      %1185 = vmatprep.mubr.bf16.mxu0 0
      %1186 = vmatmul.mubr.bf16.gmra.mxu0 %v1120
      %v1187 = vpop.f32.mrf.mxu0
      %v1188 = vadd.f32 0.0, %v1187
      %v1189 = vpop.f32.mrf.mxu0
      %v1190 = vpop.f32.mrf.mxu0
      %v1191 = vadd.f32 0.0, %v1190
      %v1192 = vpop.f32.mrf.mxu0
      %1193 = vmatprep.mubr.bf16.mxu0 0
      %1194 = vmatmul.mubr.bf16.gmra.mxu0 %v1123
      %v1195 = vpop.f32.mrf.mxu0
      %v1196 = vadd.f32 0.0, %v1195
      %v1197 = vpop.f32.mrf.mxu0
      %v1198 = vpop.f32.mrf.mxu0
      %v1199 = vadd.f32 0.0, %v1198
      %v1200 = vpop.f32.mrf.mxu0
      %1201 = vmatprep.mubr.bf16.mxu0 0
      %1202 = vmatmul.mubr.bf16.gmra.mxu0 %v1126
      %v1203 = vpop.f32.mrf.mxu0
      %v1204 = vadd.f32 0.0, %v1203
      %v1205 = vpop.f32.mrf.mxu0
      %v1206 = vpop.f32.mrf.mxu0
      %v1207 = vadd.f32 0.0, %v1206
      %v1208 = vpop.f32.mrf.mxu0
      %1209 = vmatprep.mubr.bf16.mxu0 0
      %1210 = vmatmul.mubr.bf16.gmra.mxu0 %v1129
      %v1211 = vpop.f32.mrf.mxu0
      %v1212 = vadd.f32 0.0, %v1211
      %v1213 = vpop.f32.mrf.mxu0
      %v1214 = vpop.f32.mrf.mxu0
      %v1215 = vadd.f32 0.0, %v1214
      %v1216 = vpop.f32.mrf.mxu0
      %1217 = vmatprep.mubr.bf16.mxu0 0
      %1218 = vmatmul.mubr.bf16.gmra.mxu0 %v1132
      %v1219 = vpop.f32.mrf.mxu0
      %v1220 = vadd.f32 0.0, %v1219
      %v1221 = vpop.f32.mrf.mxu0
      %v1222 = vpop.f32.mrf.mxu0
      %v1223 = vadd.f32 0.0, %v1222
      %v1224 = vpop.f32.mrf.mxu0
      %1225 = vmatprep.mubr.bf16.mxu0 0
      %1226 = vmatmul.mubr.bf16.gmra.mxu0 %v1135
      %v1227 = vpop.f32.mrf.mxu0
      %v1228 = vadd.f32 0.0, %v1227
      %v1229 = vpop.f32.mrf.mxu0
      %v1230 = vpop.f32.mrf.mxu0
      %v1231 = vpop.f32.mrf.mxu0
      %1232 = vdwg.mxu0
      %v1234 = vsel %vm748, %v412, 0
      %v1237 = vsel %vm748, %v413, 0
      %v1240 = vsel %vm748, %v414, 0
      %v1243 = vsel %vm748, %v415, 0
      %v1246 = vsel %vm748, %v416, 0
      %v1249 = vsel %vm748, %v417, 0
      %v1252 = vsel %vm748, %v418, 0
      %v1255 = vsel %vm748, %v419, 0
      %1257 = vmatprep.subr.bf16.mxu0 0
      %1258 = vmatpush1.bf16.msra.mxu0 %v775
      %1259 = vmatprep.subr.bf16.mxu0 0
      %1260 = vmatpush1.bf16.msra.mxu0 %v410
      %1261 = vmatprep.subr.bf16.mxu0 0
      %1262 = vmatpush1.bf16.msra.mxu0 %v409
      %1263 = vmatprep.subr.bf16.mxu0 0
      %1264 = vmatpush1.bf16.msra.mxu0 %v408
      %1265 = vmatprep.subr.bf16.mxu0 0
      %1266 = vmatpush1.bf16.msra.mxu0 %v407
      %1267 = vmatprep.subr.bf16.mxu0 0
      %1268 = vmatpush1.bf16.msra.mxu0 %v406
      %1269 = vmatprep.subr.bf16.mxu0 0
      %1270 = vmatpush1.bf16.msra.mxu0 %v405
      %1271 = vmatprep.subr.bf16.mxu0 0
      %1272 = vmatpush1.bf16.msra.mxu0 %v404
      %1273 = vmatprep.subr.bf16.mxu0 0
      %1274 = vmatpush2.bf16.msra.mxu0 0
      %1275 = vmatprep.subr.bf16.mxu0 0
      %1276 = vmatpush2.bf16.msra.mxu0 0
      %1277 = vmatprep.subr.bf16.mxu0 0
      %1278 = vmatpush2.bf16.msra.mxu0 0
      %1279 = vmatprep.subr.bf16.mxu0 0
      %1280 = vmatpush2.bf16.msra.mxu0 0
      %1281 = vmatprep.subr.bf16.mxu0 0
      %1282 = vmatpush2.bf16.msra.mxu0 0
      %1283 = vmatprep.subr.bf16.mxu0 0
      %1284 = vmatpush2.bf16.msra.mxu0 0
      %1285 = vmatprep.subr.bf16.mxu0 0
      %1286 = vmatpush2.bf16.msra.mxu0 0
      %1287 = vmatprep.subr.bf16.mxu0 0
      %1288 = vmatpush2.bf16.msra.mxu0 0
      %1289 = vmatprep.mubr.bf16.mxu0 0
      %1290 = vmatmul.mubr.bf16.gmra.mxu0 %v1234
      %v1291 = vpop.f32.mrf.mxu0
      %v1292 = vadd.f32 %v812, %v1291
      %v1293 = vpop.f32.mrf.mxu0
      %v1294 = vpop.f32.mrf.mxu0
      %v1295 = vadd.f32 %v815, %v1294
      %v1296 = vpop.f32.mrf.mxu0
      %1297 = vmatprep.mubr.bf16.mxu0 0
      %1298 = vmatmul.mubr.bf16.gmra.mxu0 %v1237
      %v1299 = vpop.f32.mrf.mxu0
      %v1300 = vadd.f32 %v820, %v1299
      %v1301 = vpop.f32.mrf.mxu0
      %v1302 = vpop.f32.mrf.mxu0
      %v1303 = vadd.f32 %v823, %v1302
      %v1304 = vpop.f32.mrf.mxu0
      %1305 = vmatprep.mubr.bf16.mxu0 0
      %1306 = vmatmul.mubr.bf16.gmra.mxu0 %v1240
      %v1307 = vpop.f32.mrf.mxu0
      %v1308 = vadd.f32 %v828, %v1307
      %v1309 = vpop.f32.mrf.mxu0
      %v1310 = vpop.f32.mrf.mxu0
      %v1311 = vadd.f32 %v831, %v1310
      %v1312 = vpop.f32.mrf.mxu0
      %1313 = vmatprep.mubr.bf16.mxu0 0
      %1314 = vmatmul.mubr.bf16.gmra.mxu0 %v1243
      %v1315 = vpop.f32.mrf.mxu0
      %v1316 = vadd.f32 %v836, %v1315
      %v1317 = vpop.f32.mrf.mxu0
      %v1318 = vpop.f32.mrf.mxu0
      %v1319 = vadd.f32 %v839, %v1318
      %v1320 = vpop.f32.mrf.mxu0
      %1321 = vmatprep.mubr.bf16.mxu0 0
      %1322 = vmatmul.mubr.bf16.gmra.mxu0 %v1246
      %v1323 = vpop.f32.mrf.mxu0
      %v1324 = vadd.f32 %v844, %v1323
      %v1325 = vpop.f32.mrf.mxu0
      %v1326 = vpop.f32.mrf.mxu0
      %v1327 = vadd.f32 %v847, %v1326
      %v1328 = vpop.f32.mrf.mxu0
      %1329 = vmatprep.mubr.bf16.mxu0 0
      %1330 = vmatmul.mubr.bf16.gmra.mxu0 %v1249
      %v1331 = vpop.f32.mrf.mxu0
      %v1332 = vadd.f32 %v852, %v1331
      %v1333 = vpop.f32.mrf.mxu0
      %v1334 = vpop.f32.mrf.mxu0
      %v1335 = vadd.f32 %v855, %v1334
      %v1336 = vpop.f32.mrf.mxu0
      %1337 = vmatprep.mubr.bf16.mxu0 0
      %1338 = vmatmul.mubr.bf16.gmra.mxu0 %v1252
      %v1339 = vpop.f32.mrf.mxu0
      %v1340 = vadd.f32 %v860, %v1339
      %v1341 = vpop.f32.mrf.mxu0
      %v1342 = vpop.f32.mrf.mxu0
      %v1343 = vadd.f32 %v863, %v1342
      %v1344 = vpop.f32.mrf.mxu0
      %1345 = vmatprep.mubr.bf16.mxu0 0
      %1346 = vmatmul.mubr.bf16.gmra.mxu0 %v1255
      %v1347 = vpop.f32.mrf.mxu0
      %v1348 = vadd.f32 %v868, %v1347
      %v1349 = vpop.f32.mrf.mxu0
      %v1350 = vpop.f32.mrf.mxu0
      %v1351 = vpop.f32.mrf.mxu0
      %1352 = vdwg.mxu0
      %v1354 = vsel %vm748, %v420, 0
      %v1357 = vsel %vm748, %v421, 0
      %v1360 = vsel %vm748, %v422, 0
      %v1363 = vsel %vm748, %v423, 0
      %v1366 = vsel %vm748, %v424, 0
      %v1369 = vsel %vm748, %v425, 0
      %v1372 = vsel %vm748, %v426, 0
      %v1375 = vsel %vm748, %v427, 0
      %1377 = vmatprep.subr.bf16.mxu0 0
      %1378 = vmatpush1.bf16.msra.mxu0 %v775
      %1379 = vmatprep.subr.bf16.mxu0 0
      %1380 = vmatpush1.bf16.msra.mxu0 %v410
      %1381 = vmatprep.subr.bf16.mxu0 0
      %1382 = vmatpush1.bf16.msra.mxu0 %v409
      %1383 = vmatprep.subr.bf16.mxu0 0
      %1384 = vmatpush1.bf16.msra.mxu0 %v408
      %1385 = vmatprep.subr.bf16.mxu0 0
      %1386 = vmatpush1.bf16.msra.mxu0 %v407
      %1387 = vmatprep.subr.bf16.mxu0 0
      %1388 = vmatpush1.bf16.msra.mxu0 %v406
      %1389 = vmatprep.subr.bf16.mxu0 0
      %1390 = vmatpush1.bf16.msra.mxu0 %v405
      %1391 = vmatprep.subr.bf16.mxu0 0
      %1392 = vmatpush1.bf16.msra.mxu0 %v404
      %1393 = vmatprep.subr.bf16.mxu0 0
      %1394 = vmatpush2.bf16.msra.mxu0 0
      %1395 = vmatprep.subr.bf16.mxu0 0
      %1396 = vmatpush2.bf16.msra.mxu0 0
      %1397 = vmatprep.subr.bf16.mxu0 0
      %1398 = vmatpush2.bf16.msra.mxu0 0
      %1399 = vmatprep.subr.bf16.mxu0 0
      %1400 = vmatpush2.bf16.msra.mxu0 0
      %1401 = vmatprep.subr.bf16.mxu0 0
      %1402 = vmatpush2.bf16.msra.mxu0 0
      %1403 = vmatprep.subr.bf16.mxu0 0
      %1404 = vmatpush2.bf16.msra.mxu0 0
      %1405 = vmatprep.subr.bf16.mxu0 0
      %1406 = vmatpush2.bf16.msra.mxu0 0
      %1407 = vmatprep.subr.bf16.mxu0 0
      %1408 = vmatpush2.bf16.msra.mxu0 0
      %1409 = vmatprep.mubr.bf16.mxu0 0
      %1410 = vmatmul.mubr.bf16.gmra.mxu0 %v1354
      %v1411 = vpop.f32.mrf.mxu0
      %v1412 = vadd.f32 %v932, %v1411
      %v1413 = vpop.f32.mrf.mxu0
      %v1414 = vpop.f32.mrf.mxu0
      %v1415 = vadd.f32 %v935, %v1414
      %v1416 = vpop.f32.mrf.mxu0
      %1417 = vmatprep.mubr.bf16.mxu0 0
      %1418 = vmatmul.mubr.bf16.gmra.mxu0 %v1357
      %v1419 = vpop.f32.mrf.mxu0
      %v1420 = vadd.f32 %v940, %v1419
      %v1421 = vpop.f32.mrf.mxu0
      %v1422 = vpop.f32.mrf.mxu0
      %v1423 = vadd.f32 %v943, %v1422
      %v1424 = vpop.f32.mrf.mxu0
      %1425 = vmatprep.mubr.bf16.mxu0 0
      %1426 = vmatmul.mubr.bf16.gmra.mxu0 %v1360
      %v1427 = vpop.f32.mrf.mxu0
      %v1428 = vadd.f32 %v948, %v1427
      %v1429 = vpop.f32.mrf.mxu0
      %v1430 = vpop.f32.mrf.mxu0
      %v1431 = vadd.f32 %v951, %v1430
      %v1432 = vpop.f32.mrf.mxu0
      %1433 = vmatprep.mubr.bf16.mxu0 0
      %1434 = vmatmul.mubr.bf16.gmra.mxu0 %v1363
      %v1435 = vpop.f32.mrf.mxu0
      %v1436 = vadd.f32 %v956, %v1435
      %v1437 = vpop.f32.mrf.mxu0
      %v1438 = vpop.f32.mrf.mxu0
      %v1439 = vadd.f32 %v959, %v1438
      %v1440 = vpop.f32.mrf.mxu0
      %1441 = vmatprep.mubr.bf16.mxu0 0
      %1442 = vmatmul.mubr.bf16.gmra.mxu0 %v1366
      %v1443 = vpop.f32.mrf.mxu0
      %v1444 = vadd.f32 %v964, %v1443
      %v1445 = vpop.f32.mrf.mxu0
      %v1446 = vpop.f32.mrf.mxu0
      %v1447 = vadd.f32 %v967, %v1446
      %v1448 = vpop.f32.mrf.mxu0
      %1449 = vmatprep.mubr.bf16.mxu0 0
      %1450 = vmatmul.mubr.bf16.gmra.mxu0 %v1369
      %v1451 = vpop.f32.mrf.mxu0
      %v1452 = vadd.f32 %v972, %v1451
      %v1453 = vpop.f32.mrf.mxu0
      %v1454 = vpop.f32.mrf.mxu0
      %v1455 = vadd.f32 %v975, %v1454
      %v1456 = vpop.f32.mrf.mxu0
      %1457 = vmatprep.mubr.bf16.mxu0 0
      %1458 = vmatmul.mubr.bf16.gmra.mxu0 %v1372
      %v1459 = vpop.f32.mrf.mxu0
      %v1460 = vadd.f32 %v980, %v1459
      %v1461 = vpop.f32.mrf.mxu0
      %v1462 = vpop.f32.mrf.mxu0
      %v1463 = vadd.f32 %v983, %v1462
      %v1464 = vpop.f32.mrf.mxu0
      %1465 = vmatprep.mubr.bf16.mxu0 0
      %1466 = vmatmul.mubr.bf16.gmra.mxu0 %v1375
      %v1467 = vpop.f32.mrf.mxu0
      %v1468 = vadd.f32 %v988, %v1467
      %v1469 = vpop.f32.mrf.mxu0
      %v1470 = vpop.f32.mrf.mxu0
      %v1471 = vpop.f32.mrf.mxu0
      %1472 = vdwg.mxu0
      %v1474 = vsel %vm748, %v428, 0
      %v1477 = vsel %vm748, %v429, 0
      %v1480 = vsel %vm748, %v430, 0
      %v1483 = vsel %vm748, %v431, 0
      %v1486 = vsel %vm748, %v432, 0
      %v1489 = vsel %vm748, %v433, 0
      %v1492 = vsel %vm748, %v434, 0
      %v1495 = vsel %vm748, %v435, 0
      %1497 = vmatprep.subr.bf16.mxu0 0
      %1498 = vmatpush1.bf16.msra.mxu0 %v775
      %1499 = vmatprep.subr.bf16.mxu0 0
      %1500 = vmatpush1.bf16.msra.mxu0 %v410
      %1501 = vmatprep.subr.bf16.mxu0 0
      %1502 = vmatpush1.bf16.msra.mxu0 %v409
      %1503 = vmatprep.subr.bf16.mxu0 0
      %1504 = vmatpush1.bf16.msra.mxu0 %v408
      %1505 = vmatprep.subr.bf16.mxu0 0
      %1506 = vmatpush1.bf16.msra.mxu0 %v407
      %1507 = vmatprep.subr.bf16.mxu0 0
      %1508 = vmatpush1.bf16.msra.mxu0 %v406
      %1509 = vmatprep.subr.bf16.mxu0 0
      %1510 = vmatpush1.bf16.msra.mxu0 %v405
      %1511 = vmatprep.subr.bf16.mxu0 0
      %1512 = vmatpush1.bf16.msra.mxu0 %v404
      %1513 = vmatprep.subr.bf16.mxu0 0
      %1514 = vmatpush2.bf16.msra.mxu0 0
      %1515 = vmatprep.subr.bf16.mxu0 0
      %1516 = vmatpush2.bf16.msra.mxu0 0
      %1517 = vmatprep.subr.bf16.mxu0 0
      %1518 = vmatpush2.bf16.msra.mxu0 0
      %1519 = vmatprep.subr.bf16.mxu0 0
      %1520 = vmatpush2.bf16.msra.mxu0 0
      %1521 = vmatprep.subr.bf16.mxu0 0
      %1522 = vmatpush2.bf16.msra.mxu0 0
      %1523 = vmatprep.subr.bf16.mxu0 0
      %1524 = vmatpush2.bf16.msra.mxu0 0
      %1525 = vmatprep.subr.bf16.mxu0 0
      %1526 = vmatpush2.bf16.msra.mxu0 0
      %1527 = vmatprep.subr.bf16.mxu0 0
      %1528 = vmatpush2.bf16.msra.mxu0 0
      %1529 = vmatprep.mubr.bf16.mxu0 0
      %1530 = vmatmul.mubr.bf16.gmra.mxu0 %v1474
      %v1531 = vpop.f32.mrf.mxu0
      %v1532 = vadd.f32 %v1052, %v1531
      %v1533 = vpop.f32.mrf.mxu0
      %v1534 = vpop.f32.mrf.mxu0
      %v1535 = vadd.f32 %v1055, %v1534
      %v1536 = vpop.f32.mrf.mxu0
      %1537 = vmatprep.mubr.bf16.mxu0 0
      %1538 = vmatmul.mubr.bf16.gmra.mxu0 %v1477
      %v1539 = vpop.f32.mrf.mxu0
      %v1540 = vadd.f32 %v1060, %v1539
      %v1541 = vpop.f32.mrf.mxu0
      %v1542 = vpop.f32.mrf.mxu0
      %v1543 = vadd.f32 %v1063, %v1542
      %v1544 = vpop.f32.mrf.mxu0
      %1545 = vmatprep.mubr.bf16.mxu0 0
      %1546 = vmatmul.mubr.bf16.gmra.mxu0 %v1480
      %v1547 = vpop.f32.mrf.mxu0
      %v1548 = vadd.f32 %v1068, %v1547
      %v1549 = vpop.f32.mrf.mxu0
      %v1550 = vpop.f32.mrf.mxu0
      %v1551 = vadd.f32 %v1071, %v1550
      %v1552 = vpop.f32.mrf.mxu0
      %1553 = vmatprep.mubr.bf16.mxu0 0
      %1554 = vmatmul.mubr.bf16.gmra.mxu0 %v1483
      %v1555 = vpop.f32.mrf.mxu0
      %v1556 = vadd.f32 %v1076, %v1555
      %v1557 = vpop.f32.mrf.mxu0
      %v1558 = vpop.f32.mrf.mxu0
      %v1559 = vadd.f32 %v1079, %v1558
      %v1560 = vpop.f32.mrf.mxu0
      %1561 = vmatprep.mubr.bf16.mxu0 0
      %1562 = vmatmul.mubr.bf16.gmra.mxu0 %v1486
      %v1563 = vpop.f32.mrf.mxu0
      %v1564 = vadd.f32 %v1084, %v1563
      %v1565 = vpop.f32.mrf.mxu0
      %v1566 = vpop.f32.mrf.mxu0
      %v1567 = vadd.f32 %v1087, %v1566
      %v1568 = vpop.f32.mrf.mxu0
      %1569 = vmatprep.mubr.bf16.mxu0 0
      %1570 = vmatmul.mubr.bf16.gmra.mxu0 %v1489
      %v1571 = vpop.f32.mrf.mxu0
      %v1572 = vadd.f32 %v1092, %v1571
      %v1573 = vpop.f32.mrf.mxu0
      %v1574 = vpop.f32.mrf.mxu0
      %v1575 = vadd.f32 %v1095, %v1574
      %v1576 = vpop.f32.mrf.mxu0
      %1577 = vmatprep.mubr.bf16.mxu0 0
      %1578 = vmatmul.mubr.bf16.gmra.mxu0 %v1492
      %v1579 = vpop.f32.mrf.mxu0
      %v1580 = vadd.f32 %v1100, %v1579
      %v1581 = vpop.f32.mrf.mxu0
      %v1582 = vpop.f32.mrf.mxu0
      %v1583 = vadd.f32 %v1103, %v1582
      %v1584 = vpop.f32.mrf.mxu0
      %1585 = vmatprep.mubr.bf16.mxu0 0
      %1586 = vmatmul.mubr.bf16.gmra.mxu0 %v1495
      %v1587 = vpop.f32.mrf.mxu0
      %v1588 = vadd.f32 %v1108, %v1587
      %v1589 = vpop.f32.mrf.mxu0
      %v1590 = vpop.f32.mrf.mxu0
      %v1591 = vpop.f32.mrf.mxu0
      %1592 = vdwg.mxu0
      %v1594 = vsel %vm748, %v436, 0
      %v1597 = vsel %vm748, %v437, 0
      %v1600 = vsel %vm748, %v438, 0
      %v1603 = vsel %vm748, %v439, 0
      %v1606 = vsel %vm748, %v440, 0
      %v1609 = vsel %vm748, %v441, 0
      %v1612 = vsel %vm748, %v442, 0
      %v1615 = vsel %vm748, %v443, 0
      %1617 = vmatprep.subr.bf16.mxu0 0
      %1618 = vmatpush1.bf16.msra.mxu0 %v775
      %1619 = vmatprep.subr.bf16.mxu0 0
      %1620 = vmatpush1.bf16.msra.mxu0 %v410
      %1621 = vmatprep.subr.bf16.mxu0 0
      %1622 = vmatpush1.bf16.msra.mxu0 %v409
      %1623 = vmatprep.subr.bf16.mxu0 0
      %1624 = vmatpush1.bf16.msra.mxu0 %v408
      %1625 = vmatprep.subr.bf16.mxu0 0
      %1626 = vmatpush1.bf16.msra.mxu0 %v407
      %1627 = vmatprep.subr.bf16.mxu0 0
      %1628 = vmatpush1.bf16.msra.mxu0 %v406
      %1629 = vmatprep.subr.bf16.mxu0 0
      %1630 = vmatpush1.bf16.msra.mxu0 %v405
      %1631 = vmatprep.subr.bf16.mxu0 0
      %1632 = vmatpush1.bf16.msra.mxu0 %v404
      %1633 = vmatprep.subr.bf16.mxu0 0
      %1634 = vmatpush2.bf16.msra.mxu0 0
      %1635 = vmatprep.subr.bf16.mxu0 0
      %1636 = vmatpush2.bf16.msra.mxu0 0
      %1637 = vmatprep.subr.bf16.mxu0 0
      %1638 = vmatpush2.bf16.msra.mxu0 0
      %1639 = vmatprep.subr.bf16.mxu0 0
      %1640 = vmatpush2.bf16.msra.mxu0 0
      %1641 = vmatprep.subr.bf16.mxu0 0
      %1642 = vmatpush2.bf16.msra.mxu0 0
      %1643 = vmatprep.subr.bf16.mxu0 0
      %1644 = vmatpush2.bf16.msra.mxu0 0
      %1645 = vmatprep.subr.bf16.mxu0 0
      %1646 = vmatpush2.bf16.msra.mxu0 0
      %1647 = vmatprep.subr.bf16.mxu0 0
      %1648 = vmatpush2.bf16.msra.mxu0 0
      %1649 = vmatprep.mubr.bf16.mxu0 0
      %1650 = vmatmul.mubr.bf16.gmra.mxu0 %v1594
      %v1651 = vpop.f32.mrf.mxu0
      %v1652 = vadd.f32 %v1172, %v1651
      %v1653 = vpop.f32.mrf.mxu0
      %v1654 = vpop.f32.mrf.mxu0
      %v1655 = vadd.f32 %v1175, %v1654
      %v1656 = vpop.f32.mrf.mxu0
      %1657 = vmatprep.mubr.bf16.mxu0 0
      %1658 = vmatmul.mubr.bf16.gmra.mxu0 %v1597
      %v1659 = vpop.f32.mrf.mxu0
      %v1660 = vadd.f32 %v1180, %v1659
      %v1661 = vpop.f32.mrf.mxu0
      %v1662 = vpop.f32.mrf.mxu0
      %v1663 = vadd.f32 %v1183, %v1662
      %v1664 = vpop.f32.mrf.mxu0
      %1665 = vmatprep.mubr.bf16.mxu0 0
      %1666 = vmatmul.mubr.bf16.gmra.mxu0 %v1600
      %v1667 = vpop.f32.mrf.mxu0
      %v1668 = vadd.f32 %v1188, %v1667
      %v1669 = vpop.f32.mrf.mxu0
      %v1670 = vpop.f32.mrf.mxu0
      %v1671 = vadd.f32 %v1191, %v1670
      %v1672 = vpop.f32.mrf.mxu0
      %1673 = vmatprep.mubr.bf16.mxu0 0
      %1674 = vmatmul.mubr.bf16.gmra.mxu0 %v1603
      %v1675 = vpop.f32.mrf.mxu0
      %v1676 = vadd.f32 %v1196, %v1675
      %v1677 = vpop.f32.mrf.mxu0
      %v1678 = vpop.f32.mrf.mxu0
      %v1679 = vadd.f32 %v1199, %v1678
      %v1680 = vpop.f32.mrf.mxu0
      %1681 = vmatprep.mubr.bf16.mxu0 0
      %1682 = vmatmul.mubr.bf16.gmra.mxu0 %v1606
      %v1683 = vpop.f32.mrf.mxu0
      %v1684 = vadd.f32 %v1204, %v1683
      %v1685 = vpop.f32.mrf.mxu0
      %v1686 = vpop.f32.mrf.mxu0
      %v1687 = vadd.f32 %v1207, %v1686
      %v1688 = vpop.f32.mrf.mxu0
      %1689 = vmatprep.mubr.bf16.mxu0 0
      %1690 = vmatmul.mubr.bf16.gmra.mxu0 %v1609
      %v1691 = vpop.f32.mrf.mxu0
      %v1692 = vadd.f32 %v1212, %v1691
      %v1693 = vpop.f32.mrf.mxu0
      %v1694 = vpop.f32.mrf.mxu0
      %v1695 = vadd.f32 %v1215, %v1694
      %v1696 = vpop.f32.mrf.mxu0
      %1697 = vmatprep.mubr.bf16.mxu0 0
      %1698 = vmatmul.mubr.bf16.gmra.mxu0 %v1612
      %v1699 = vpop.f32.mrf.mxu0
      %v1700 = vadd.f32 %v1220, %v1699
      %v1701 = vpop.f32.mrf.mxu0
      %v1702 = vpop.f32.mrf.mxu0
      %v1703 = vadd.f32 %v1223, %v1702
      %v1704 = vpop.f32.mrf.mxu0
      %1705 = vmatprep.mubr.bf16.mxu0 0
      %1706 = vmatmul.mubr.bf16.gmra.mxu0 %v1615
      %v1707 = vpop.f32.mrf.mxu0
      %v1708 = vadd.f32 %v1228, %v1707
      %v1709 = vpop.f32.mrf.mxu0
      %v1710 = vpop.f32.mrf.mxu0
      %v1711 = vpop.f32.mrf.mxu0
      %1712 = vdwg.mxu0
      %v1714 = vsel %vm748, %v716, 0
      %v1717 = vsel %vm748, %v717, 0
      %v1720 = vsel %vm748, %v718, 0
      %v1723 = vsel %vm748, %v719, 0
      %v1726 = vsel %vm748, %v720, 0
      %v1729 = vsel %vm748, %v721, 0
      %v1732 = vsel %vm748, %v722, 0
      %v1735 = vsel %vm748, %v723, 0
      %1737 = vmatprep.subr.bf16.mxu0 0
      %1738 = vmatpush1.bf16.msra.mxu0 %v775
      %1739 = vmatprep.subr.bf16.mxu0 0
      %1740 = vmatpush1.bf16.msra.mxu0 %v410
      %1741 = vmatprep.subr.bf16.mxu0 0
      %1742 = vmatpush1.bf16.msra.mxu0 %v409
      %1743 = vmatprep.subr.bf16.mxu0 0
      %1744 = vmatpush1.bf16.msra.mxu0 %v408
      %1745 = vmatprep.subr.bf16.mxu0 0
      %1746 = vmatpush1.bf16.msra.mxu0 %v407
      %1747 = vmatprep.subr.bf16.mxu0 0
      %1748 = vmatpush1.bf16.msra.mxu0 %v406
      %1749 = vmatprep.subr.bf16.mxu0 0
      %1750 = vmatpush1.bf16.msra.mxu0 %v405
      %1751 = vmatprep.subr.bf16.mxu0 0
      %1752 = vmatpush1.bf16.msra.mxu0 %v404
      %1753 = vmatprep.subr.bf16.mxu0 0
      %1754 = vmatpush2.bf16.msra.mxu0 0
      %1755 = vmatprep.subr.bf16.mxu0 0
      %1756 = vmatpush2.bf16.msra.mxu0 0
      %1757 = vmatprep.subr.bf16.mxu0 0
      %1758 = vmatpush2.bf16.msra.mxu0 0
      %1759 = vmatprep.subr.bf16.mxu0 0
      %1760 = vmatpush2.bf16.msra.mxu0 0
      %1761 = vmatprep.subr.bf16.mxu0 0
      %1762 = vmatpush2.bf16.msra.mxu0 0
      %1763 = vmatprep.subr.bf16.mxu0 0
      %1764 = vmatpush2.bf16.msra.mxu0 0
      %1765 = vmatprep.subr.bf16.mxu0 0
      %1766 = vmatpush2.bf16.msra.mxu0 0
      %1767 = vmatprep.subr.bf16.mxu0 0
      %1768 = vmatpush2.bf16.msra.mxu0 0
      %1769 = vmatprep.mubr.bf16.mxu0 0
      %1770 = vmatmul.mubr.bf16.gmra.mxu0 %v1714
      %v1771 = vpop.f32.mrf.mxu0
      %v1772 = vadd.f32 0.0, %v1771
      %v1773 = vpop.f32.mrf.mxu0
      %v1774 = vpop.f32.mrf.mxu0
      %v1775 = vadd.f32 0.0, %v1774
      %v1776 = vpop.f32.mrf.mxu0
      %1777 = vmatprep.mubr.bf16.mxu0 0
      %1778 = vmatmul.mubr.bf16.gmra.mxu0 %v1717
      %v1779 = vpop.f32.mrf.mxu0
      %v1780 = vadd.f32 0.0, %v1779
      %v1781 = vpop.f32.mrf.mxu0
      %v1782 = vpop.f32.mrf.mxu0
      %v1783 = vadd.f32 0.0, %v1782
      %v1784 = vpop.f32.mrf.mxu0
      %1785 = vmatprep.mubr.bf16.mxu0 0
      %1786 = vmatmul.mubr.bf16.gmra.mxu0 %v1720
      %v1787 = vpop.f32.mrf.mxu0
      %v1788 = vadd.f32 0.0, %v1787
      %v1789 = vpop.f32.mrf.mxu0
      %v1790 = vpop.f32.mrf.mxu0
      %v1791 = vadd.f32 0.0, %v1790
      %v1792 = vpop.f32.mrf.mxu0
      %1793 = vmatprep.mubr.bf16.mxu0 0
      %1794 = vmatmul.mubr.bf16.gmra.mxu0 %v1723
      %v1795 = vpop.f32.mrf.mxu0
      %v1796 = vadd.f32 0.0, %v1795
      %v1797 = vpop.f32.mrf.mxu0
      %v1798 = vpop.f32.mrf.mxu0
      %v1799 = vadd.f32 0.0, %v1798
      %v1800 = vpop.f32.mrf.mxu0
      %1801 = vmatprep.mubr.bf16.mxu0 0
      %1802 = vmatmul.mubr.bf16.gmra.mxu0 %v1726
      %v1803 = vpop.f32.mrf.mxu0
      %v1804 = vadd.f32 0.0, %v1803
      %v1805 = vpop.f32.mrf.mxu0
      %v1806 = vpop.f32.mrf.mxu0
      %v1807 = vadd.f32 0.0, %v1806
      %v1808 = vpop.f32.mrf.mxu0
      %1809 = vmatprep.mubr.bf16.mxu0 0
      %1810 = vmatmul.mubr.bf16.gmra.mxu0 %v1729
      %v1811 = vpop.f32.mrf.mxu0
      %v1812 = vadd.f32 0.0, %v1811
      %v1813 = vpop.f32.mrf.mxu0
      %v1814 = vpop.f32.mrf.mxu0
      %v1815 = vadd.f32 0.0, %v1814
      %v1816 = vpop.f32.mrf.mxu0
      %1817 = vmatprep.mubr.bf16.mxu0 0
      %1818 = vmatmul.mubr.bf16.gmra.mxu0 %v1732
      %v1819 = vpop.f32.mrf.mxu0
      %v1820 = vadd.f32 0.0, %v1819
      %v1821 = vpop.f32.mrf.mxu0
      %v1822 = vpop.f32.mrf.mxu0
      %v1823 = vadd.f32 0.0, %v1822
      %v1824 = vpop.f32.mrf.mxu0
      %1825 = vmatprep.mubr.bf16.mxu0 0
      %1826 = vmatmul.mubr.bf16.gmra.mxu0 %v1735
      %v1827 = vpop.f32.mrf.mxu0
      %v1828 = vadd.f32 0.0, %v1827
      %v1829 = vpop.f32.mrf.mxu0
      %v1830 = vpop.f32.mrf.mxu0
      %v1831 = vpop.f32.mrf.mxu0
      %1832 = vdwg.mxu0
      %v1834 = vsel %vm748, %v724, 0
      %v1837 = vsel %vm748, %v725, 0
      %v1840 = vsel %vm748, %v726, 0
      %v1843 = vsel %vm748, %v727, 0
      %v1846 = vsel %vm748, %v728, 0
      %v1849 = vsel %vm748, %v729, 0
      %v1852 = vsel %vm748, %v730, 0
      %v1855 = vsel %vm748, %v731, 0
      %1857 = vmatprep.subr.bf16.mxu0 0
      %1858 = vmatpush1.bf16.msra.mxu0 %v775
      %1859 = vmatprep.subr.bf16.mxu0 0
      %1860 = vmatpush1.bf16.msra.mxu0 %v410
      %1861 = vmatprep.subr.bf16.mxu0 0
      %1862 = vmatpush1.bf16.msra.mxu0 %v409
      %1863 = vmatprep.subr.bf16.mxu0 0
      %1864 = vmatpush1.bf16.msra.mxu0 %v408
      %1865 = vmatprep.subr.bf16.mxu0 0
      %1866 = vmatpush1.bf16.msra.mxu0 %v407
      %1867 = vmatprep.subr.bf16.mxu0 0
      %1868 = vmatpush1.bf16.msra.mxu0 %v406
      %1869 = vmatprep.subr.bf16.mxu0 0
      %1870 = vmatpush1.bf16.msra.mxu0 %v405
      %1871 = vmatprep.subr.bf16.mxu0 0
      %1872 = vmatpush1.bf16.msra.mxu0 %v404
      %1873 = vmatprep.subr.bf16.mxu0 0
      %1874 = vmatpush2.bf16.msra.mxu0 0
      %1875 = vmatprep.subr.bf16.mxu0 0
      %1876 = vmatpush2.bf16.msra.mxu0 0
      %1877 = vmatprep.subr.bf16.mxu0 0
      %1878 = vmatpush2.bf16.msra.mxu0 0
      %1879 = vmatprep.subr.bf16.mxu0 0
      %1880 = vmatpush2.bf16.msra.mxu0 0
      %1881 = vmatprep.subr.bf16.mxu0 0
      %1882 = vmatpush2.bf16.msra.mxu0 0
      %1883 = vmatprep.subr.bf16.mxu0 0
      %1884 = vmatpush2.bf16.msra.mxu0 0
      %1885 = vmatprep.subr.bf16.mxu0 0
      %1886 = vmatpush2.bf16.msra.mxu0 0
      %1887 = vmatprep.subr.bf16.mxu0 0
      %1888 = vmatpush2.bf16.msra.mxu0 0
      %1889 = vmatprep.mubr.bf16.mxu0 0
      %1890 = vmatmul.mubr.bf16.gmra.mxu0 %v1834
      %v1891 = vpop.f32.mrf.mxu0
      %v1892 = vadd.f32 0.0, %v1891
      %v1893 = vpop.f32.mrf.mxu0
      %v1894 = vpop.f32.mrf.mxu0
      %v1895 = vadd.f32 0.0, %v1894
      %v1896 = vpop.f32.mrf.mxu0
      %1897 = vmatprep.mubr.bf16.mxu0 0
      %1898 = vmatmul.mubr.bf16.gmra.mxu0 %v1837
      %v1899 = vpop.f32.mrf.mxu0
      %v1900 = vadd.f32 0.0, %v1899
      %v1901 = vpop.f32.mrf.mxu0
      %v1902 = vpop.f32.mrf.mxu0
      %v1903 = vadd.f32 0.0, %v1902
      %v1904 = vpop.f32.mrf.mxu0
      %1905 = vmatprep.mubr.bf16.mxu0 0
      %1906 = vmatmul.mubr.bf16.gmra.mxu0 %v1840
      %v1907 = vpop.f32.mrf.mxu0
      %v1908 = vadd.f32 0.0, %v1907
      %v1909 = vpop.f32.mrf.mxu0
      %v1910 = vpop.f32.mrf.mxu0
      %v1911 = vadd.f32 0.0, %v1910
      %v1912 = vpop.f32.mrf.mxu0
      %1913 = vmatprep.mubr.bf16.mxu0 0
      %1914 = vmatmul.mubr.bf16.gmra.mxu0 %v1843
      %v1915 = vpop.f32.mrf.mxu0
      %v1916 = vadd.f32 0.0, %v1915
      %v1917 = vpop.f32.mrf.mxu0
      %v1918 = vpop.f32.mrf.mxu0
      %v1919 = vadd.f32 0.0, %v1918
      %v1920 = vpop.f32.mrf.mxu0
      %1921 = vmatprep.mubr.bf16.mxu0 0
      %1922 = vmatmul.mubr.bf16.gmra.mxu0 %v1846
      %v1923 = vpop.f32.mrf.mxu0
      %v1924 = vadd.f32 0.0, %v1923
      %v1925 = vpop.f32.mrf.mxu0
      %v1926 = vpop.f32.mrf.mxu0
      %v1927 = vadd.f32 0.0, %v1926
      %v1928 = vpop.f32.mrf.mxu0
      %1929 = vmatprep.mubr.bf16.mxu0 0
      %1930 = vmatmul.mubr.bf16.gmra.mxu0 %v1849
      %v1931 = vpop.f32.mrf.mxu0
      %v1932 = vadd.f32 0.0, %v1931
      %v1933 = vpop.f32.mrf.mxu0
      %v1934 = vpop.f32.mrf.mxu0
      %v1935 = vadd.f32 0.0, %v1934
      %v1936 = vpop.f32.mrf.mxu0
      %1937 = vmatprep.mubr.bf16.mxu0 0
      %1938 = vmatmul.mubr.bf16.gmra.mxu0 %v1852
      %v1939 = vpop.f32.mrf.mxu0
      %v1940 = vadd.f32 0.0, %v1939
      %v1941 = vpop.f32.mrf.mxu0
      %v1942 = vpop.f32.mrf.mxu0
      %v1943 = vadd.f32 0.0, %v1942
      %v1944 = vpop.f32.mrf.mxu0
      %1945 = vmatprep.mubr.bf16.mxu0 0
      %1946 = vmatmul.mubr.bf16.gmra.mxu0 %v1855
      %v1947 = vpop.f32.mrf.mxu0
      %v1948 = vadd.f32 0.0, %v1947
      %v1949 = vpop.f32.mrf.mxu0
      %v1950 = vpop.f32.mrf.mxu0
      %v1951 = vpop.f32.mrf.mxu0
      %1952 = vdwg.mxu0
      %v1954 = vsel %vm748, %v732, 0
      %v1957 = vsel %vm748, %v733, 0
      %v1960 = vsel %vm748, %v734, 0
      %v1963 = vsel %vm748, %v735, 0
      %v1966 = vsel %vm748, %v736, 0
      %v1969 = vsel %vm748, %v737, 0
      %v1972 = vsel %vm748, %v738, 0
      %v1975 = vsel %vm748, %v739, 0
      %1977 = vmatprep.subr.bf16.mxu0 0
      %1978 = vmatpush1.bf16.msra.mxu0 %v775
      %1979 = vmatprep.subr.bf16.mxu0 0
      %1980 = vmatpush1.bf16.msra.mxu0 %v410
      %1981 = vmatprep.subr.bf16.mxu0 0
      %1982 = vmatpush1.bf16.msra.mxu0 %v409
      %1983 = vmatprep.subr.bf16.mxu0 0
      %1984 = vmatpush1.bf16.msra.mxu0 %v408
      %1985 = vmatprep.subr.bf16.mxu0 0
      %1986 = vmatpush1.bf16.msra.mxu0 %v407
      %1987 = vmatprep.subr.bf16.mxu0 0
      %1988 = vmatpush1.bf16.msra.mxu0 %v406
      %1989 = vmatprep.subr.bf16.mxu0 0
      %1990 = vmatpush1.bf16.msra.mxu0 %v405
      %1991 = vmatprep.subr.bf16.mxu0 0
      %1992 = vmatpush1.bf16.msra.mxu0 %v404
      %1993 = vmatprep.subr.bf16.mxu0 0
      %1994 = vmatpush2.bf16.msra.mxu0 0
      %1995 = vmatprep.subr.bf16.mxu0 0
      %1996 = vmatpush2.bf16.msra.mxu0 0
      %1997 = vmatprep.subr.bf16.mxu0 0
      %1998 = vmatpush2.bf16.msra.mxu0 0
      %1999 = vmatprep.subr.bf16.mxu0 0
      %2000 = vmatpush2.bf16.msra.mxu0 0
      %2001 = vmatprep.subr.bf16.mxu0 0
      %2002 = vmatpush2.bf16.msra.mxu0 0
      %2003 = vmatprep.subr.bf16.mxu0 0
      %2004 = vmatpush2.bf16.msra.mxu0 0
      %2005 = vmatprep.subr.bf16.mxu0 0
      %2006 = vmatpush2.bf16.msra.mxu0 0
      %2007 = vmatprep.subr.bf16.mxu0 0
      %2008 = vmatpush2.bf16.msra.mxu0 0
      %2009 = vmatprep.mubr.bf16.mxu0 0
      %2010 = vmatmul.mubr.bf16.gmra.mxu0 %v1954
      %v2011 = vpop.f32.mrf.mxu0
      %v2012 = vadd.f32 0.0, %v2011
      %v2013 = vpop.f32.mrf.mxu0
      %v2014 = vpop.f32.mrf.mxu0
      %v2015 = vadd.f32 0.0, %v2014
      %v2016 = vpop.f32.mrf.mxu0
      %2017 = vmatprep.mubr.bf16.mxu0 0
      %2018 = vmatmul.mubr.bf16.gmra.mxu0 %v1957
      %v2019 = vpop.f32.mrf.mxu0
      %v2020 = vadd.f32 0.0, %v2019
      %v2021 = vpop.f32.mrf.mxu0
      %v2022 = vpop.f32.mrf.mxu0
      %v2023 = vadd.f32 0.0, %v2022
      %v2024 = vpop.f32.mrf.mxu0
      %2025 = vmatprep.mubr.bf16.mxu0 0
      %2026 = vmatmul.mubr.bf16.gmra.mxu0 %v1960
      %v2027 = vpop.f32.mrf.mxu0
      %v2028 = vadd.f32 0.0, %v2027
      %v2029 = vpop.f32.mrf.mxu0
      %v2030 = vpop.f32.mrf.mxu0
      %v2031 = vadd.f32 0.0, %v2030
      %v2032 = vpop.f32.mrf.mxu0
      %2033 = vmatprep.mubr.bf16.mxu0 0
      %2034 = vmatmul.mubr.bf16.gmra.mxu0 %v1963
      %v2035 = vpop.f32.mrf.mxu0
      %v2036 = vadd.f32 0.0, %v2035
      %v2037 = vpop.f32.mrf.mxu0
      %v2038 = vpop.f32.mrf.mxu0
      %v2039 = vadd.f32 0.0, %v2038
      %v2040 = vpop.f32.mrf.mxu0
      %2041 = vmatprep.mubr.bf16.mxu0 0
      %2042 = vmatmul.mubr.bf16.gmra.mxu0 %v1966
      %v2043 = vpop.f32.mrf.mxu0
      %v2044 = vadd.f32 0.0, %v2043
      %v2045 = vpop.f32.mrf.mxu0
      %v2046 = vpop.f32.mrf.mxu0
      %v2047 = vadd.f32 0.0, %v2046
      %v2048 = vpop.f32.mrf.mxu0
      %2049 = vmatprep.mubr.bf16.mxu0 0
      %2050 = vmatmul.mubr.bf16.gmra.mxu0 %v1969
      %v2051 = vpop.f32.mrf.mxu0
      %v2052 = vadd.f32 0.0, %v2051
      %v2053 = vpop.f32.mrf.mxu0
      %v2054 = vpop.f32.mrf.mxu0
      %v2055 = vadd.f32 0.0, %v2054
      %v2056 = vpop.f32.mrf.mxu0
      %2057 = vmatprep.mubr.bf16.mxu0 0
      %2058 = vmatmul.mubr.bf16.gmra.mxu0 %v1972
      %v2059 = vpop.f32.mrf.mxu0
      %v2060 = vadd.f32 0.0, %v2059
      %v2061 = vpop.f32.mrf.mxu0
      %v2062 = vpop.f32.mrf.mxu0
      %v2063 = vadd.f32 0.0, %v2062
      %v2064 = vpop.f32.mrf.mxu0
      %2065 = vmatprep.mubr.bf16.mxu0 0
      %2066 = vmatmul.mubr.bf16.gmra.mxu0 %v1975
      %v2067 = vpop.f32.mrf.mxu0
      %v2068 = vadd.f32 0.0, %v2067
      %v2069 = vpop.f32.mrf.mxu0
      %v2070 = vpop.f32.mrf.mxu0
      %v2071 = vpop.f32.mrf.mxu0
      %2072 = vdwg.mxu0
      %v2074 = vsel %vm748, %v740, 0
      %v2077 = vsel %vm748, %v741, 0
      %v2080 = vsel %vm748, %v742, 0
      %v2083 = vsel %vm748, %v743, 0
      %v2086 = vsel %vm748, %v744, 0
      %v2089 = vsel %vm748, %v745, 0
      %v2092 = vsel %vm748, %v746, 0
      %v2095 = vsel %vm748, %v747, 0
      %2097 = vmatprep.subr.bf16.mxu0 0
      %2098 = vmatpush1.bf16.msra.mxu0 %v775
      %2099 = vmatprep.subr.bf16.mxu0 0
      %2100 = vmatpush1.bf16.msra.mxu0 %v410
      %2101 = vmatprep.subr.bf16.mxu0 0
      %2102 = vmatpush1.bf16.msra.mxu0 %v409
      %2103 = vmatprep.subr.bf16.mxu0 0
      %2104 = vmatpush1.bf16.msra.mxu0 %v408
      %2105 = vmatprep.subr.bf16.mxu0 0
      %2106 = vmatpush1.bf16.msra.mxu0 %v407
      %2107 = vmatprep.subr.bf16.mxu0 0
      %2108 = vmatpush1.bf16.msra.mxu0 %v406
      %2109 = vmatprep.subr.bf16.mxu0 0
      %2110 = vmatpush1.bf16.msra.mxu0 %v405
      %2111 = vmatprep.subr.bf16.mxu0 0
      %2112 = vmatpush1.bf16.msra.mxu0 %v404
      %2113 = vmatprep.subr.bf16.mxu0 0
      %2114 = vmatpush2.bf16.msra.mxu0 0
      %2115 = vmatprep.subr.bf16.mxu0 0
      %2116 = vmatpush2.bf16.msra.mxu0 0
      %2117 = vmatprep.subr.bf16.mxu0 0
      %2118 = vmatpush2.bf16.msra.mxu0 0
      %2119 = vmatprep.subr.bf16.mxu0 0
      %2120 = vmatpush2.bf16.msra.mxu0 0
      %2121 = vmatprep.subr.bf16.mxu0 0
      %2122 = vmatpush2.bf16.msra.mxu0 0
      %2123 = vmatprep.subr.bf16.mxu0 0
      %2124 = vmatpush2.bf16.msra.mxu0 0
      %2125 = vmatprep.subr.bf16.mxu0 0
      %2126 = vmatpush2.bf16.msra.mxu0 0
      %2127 = vmatprep.subr.bf16.mxu0 0
      %2128 = vmatpush2.bf16.msra.mxu0 0
      %2129 = vmatprep.mubr.bf16.mxu0 0
      %2130 = vmatmul.mubr.bf16.gmra.mxu0 %v2074
      %v2131 = vpop.f32.mrf.mxu0
      %v2132 = vadd.f32 0.0, %v2131
      %v2133 = vpop.f32.mrf.mxu0
      %v2134 = vpop.f32.mrf.mxu0
      %v2135 = vadd.f32 0.0, %v2134
      %v2136 = vpop.f32.mrf.mxu0
      %2137 = vmatprep.mubr.bf16.mxu0 0
      %2138 = vmatmul.mubr.bf16.gmra.mxu0 %v2077
      %v2139 = vpop.f32.mrf.mxu0
      %v2140 = vadd.f32 0.0, %v2139
      %v2141 = vpop.f32.mrf.mxu0
      %v2142 = vpop.f32.mrf.mxu0
      %v2143 = vadd.f32 0.0, %v2142
      %v2144 = vpop.f32.mrf.mxu0
      %2145 = vmatprep.mubr.bf16.mxu0 0
      %2146 = vmatmul.mubr.bf16.gmra.mxu0 %v2080
      %v2147 = vpop.f32.mrf.mxu0
      %v2148 = vadd.f32 0.0, %v2147
      %v2149 = vpop.f32.mrf.mxu0
      %v2150 = vpop.f32.mrf.mxu0
      %v2151 = vadd.f32 0.0, %v2150
      %v2152 = vpop.f32.mrf.mxu0
      %2153 = vmatprep.mubr.bf16.mxu0 0
      %2154 = vmatmul.mubr.bf16.gmra.mxu0 %v2083
      %v2155 = vpop.f32.mrf.mxu0
      %v2156 = vadd.f32 0.0, %v2155
      %v2157 = vpop.f32.mrf.mxu0
      %v2158 = vpop.f32.mrf.mxu0
      %v2159 = vadd.f32 0.0, %v2158
      %v2160 = vpop.f32.mrf.mxu0
      %2161 = vmatprep.mubr.bf16.mxu0 0
      %2162 = vmatmul.mubr.bf16.gmra.mxu0 %v2086
      %v2163 = vpop.f32.mrf.mxu0
      %v2164 = vadd.f32 0.0, %v2163
      %v2165 = vpop.f32.mrf.mxu0
      %v2166 = vpop.f32.mrf.mxu0
      %v2167 = vadd.f32 0.0, %v2166
      %v2168 = vpop.f32.mrf.mxu0
      %2169 = vmatprep.mubr.bf16.mxu0 0
      %2170 = vmatmul.mubr.bf16.gmra.mxu0 %v2089
      %v2171 = vpop.f32.mrf.mxu0
      %v2172 = vadd.f32 0.0, %v2171
      %v2173 = vpop.f32.mrf.mxu0
      %v2174 = vpop.f32.mrf.mxu0
      %v2175 = vadd.f32 0.0, %v2174
      %v2176 = vpop.f32.mrf.mxu0
      %2177 = vmatprep.mubr.bf16.mxu0 0
      %2178 = vmatmul.mubr.bf16.gmra.mxu0 %v2092
      %v2179 = vpop.f32.mrf.mxu0
      %v2180 = vadd.f32 0.0, %v2179
      %v2181 = vpop.f32.mrf.mxu0
      %v2182 = vpop.f32.mrf.mxu0
      %v2183 = vadd.f32 0.0, %v2182
      %v2184 = vpop.f32.mrf.mxu0
      %2185 = vmatprep.mubr.bf16.mxu0 0
      %2186 = vmatmul.mubr.bf16.gmra.mxu0 %v2095
      %v2187 = vpop.f32.mrf.mxu0
      %v2188 = vadd.f32 0.0, %v2187
      %v2189 = vpop.f32.mrf.mxu0
      %v2190 = vpop.f32.mrf.mxu0
      %v2191 = vpop.f32.mrf.mxu0
      %2192 = vdwg.mxu0
      %v2193 = vadd.f32 %v1292, %v1772
      %v2194 = vadd.f32 %v1295, %v1775
      %v2195 = vadd.f32 %v1300, %v1780
      %v2196 = vadd.f32 %v1303, %v1783
      %v2197 = vadd.f32 %v1308, %v1788
      %v2198 = vadd.f32 %v1311, %v1791
      %v2199 = vadd.f32 %v1316, %v1796
      %v2200 = vadd.f32 %v1319, %v1799
      %v2201 = vadd.f32 %v1324, %v1804
      %v2202 = vadd.f32 %v1327, %v1807
      %v2203 = vadd.f32 %v1332, %v1812
      %v2204 = vadd.f32 %v1335, %v1815
      %v2205 = vadd.f32 %v1340, %v1820
      %v2206 = vadd.f32 %v1343, %v1823
      %v2207 = vadd.f32 %v1348, %v1828
      %v2208 = vadd.f32 %v1412, %v1892
      %v2209 = vadd.f32 %v1415, %v1895
      %v2210 = vadd.f32 %v1420, %v1900
      %v2211 = vadd.f32 %v1423, %v1903
      %v2212 = vadd.f32 %v1428, %v1908
      %v2213 = vadd.f32 %v1431, %v1911
      %v2214 = vadd.f32 %v1436, %v1916
      %v2215 = vadd.f32 %v1439, %v1919
      %v2216 = vadd.f32 %v1444, %v1924
      %v2217 = vadd.f32 %v1447, %v1927
      %v2218 = vadd.f32 %v1452, %v1932
      %v2219 = vadd.f32 %v1455, %v1935
      %v2220 = vadd.f32 %v1460, %v1940
      %v2221 = vadd.f32 %v1463, %v1943
      %v2222 = vadd.f32 %v1468, %v1948
      %v2223 = vadd.f32 %v1532, %v2012
      %v2224 = vadd.f32 %v1535, %v2015
      %v2225 = vadd.f32 %v1540, %v2020
      %v2226 = vadd.f32 %v1543, %v2023
      %v2227 = vadd.f32 %v1548, %v2028
      %v2228 = vadd.f32 %v1551, %v2031
      %v2229 = vadd.f32 %v1556, %v2036
      %v2230 = vadd.f32 %v1559, %v2039
      %v2231 = vadd.f32 %v1564, %v2044
      %v2232 = vadd.f32 %v1567, %v2047
      %v2233 = vadd.f32 %v1572, %v2052
      %v2234 = vadd.f32 %v1575, %v2055
      %v2235 = vadd.f32 %v1580, %v2060
      %v2236 = vadd.f32 %v1583, %v2063
      %v2237 = vadd.f32 %v1588, %v2068
      %v2238 = vadd.f32 %v1652, %v2132
      %v2239 = vadd.f32 %v1655, %v2135
      %v2240 = vadd.f32 %v1660, %v2140
      %v2241 = vadd.f32 %v1663, %v2143
      %v2242 = vadd.f32 %v1668, %v2148
      %v2243 = vadd.f32 %v1671, %v2151
      %v2244 = vadd.f32 %v1676, %v2156
      %v2245 = vadd.f32 %v1679, %v2159
      %v2246 = vadd.f32 %v1684, %v2164
      %v2247 = vadd.f32 %v1687, %v2167
      %v2248 = vadd.f32 %v1692, %v2172
      %v2249 = vadd.f32 %v1695, %v2175
      %v2250 = vadd.f32 %v1700, %v2180
      %v2251 = vadd.f32 %v1703, %v2183
      %v2252 = vadd.f32 %v1708, %v2188
      %v2253 = vand.u32 2147483647, %v2193
      %v2254 = vand.u32 2147483647, %v2194
      %v2255 = vand.u32 2147483647, %v2195
      %v2256 = vand.u32 2147483647, %v2196
      %v2257 = vand.u32 2147483647, %v2197
      %v2258 = vand.u32 2147483647, %v2198
      %v2259 = vand.u32 2147483647, %v2199
      %v2260 = vand.u32 2147483647, %v2200
      %v2261 = vand.u32 2147483647, %v2201
      %v2262 = vand.u32 2147483647, %v2202
      %v2263 = vand.u32 2147483647, %v2203
      %v2264 = vand.u32 2147483647, %v2204
      %v2265 = vand.u32 2147483647, %v2205
      %v2266 = vand.u32 2147483647, %v2206
      %v2267 = vand.u32 2147483647, %v2207
      %v2268 = vand.u32 2147483647, %v2208
      %v2269 = vand.u32 2147483647, %v2209
      %v2270 = vand.u32 2147483647, %v2210
      %v2271 = vand.u32 2147483647, %v2211
      %v2272 = vand.u32 2147483647, %v2212
      %v2273 = vand.u32 2147483647, %v2213
      %v2274 = vand.u32 2147483647, %v2214
      %v2275 = vand.u32 2147483647, %v2215
      %v2276 = vand.u32 2147483647, %v2216
      %v2277 = vand.u32 2147483647, %v2217
      %v2278 = vand.u32 2147483647, %v2218
      %v2279 = vand.u32 2147483647, %v2219
      %v2280 = vand.u32 2147483647, %v2220
      %v2281 = vand.u32 2147483647, %v2221
      %v2282 = vand.u32 2147483647, %v2222
      %v2283 = vand.u32 2147483647, %v2223
      %v2284 = vand.u32 2147483647, %v2224
      %v2285 = vand.u32 2147483647, %v2225
      %v2286 = vand.u32 2147483647, %v2226
      %v2287 = vand.u32 2147483647, %v2227
      %v2288 = vand.u32 2147483647, %v2228
      %v2289 = vand.u32 2147483647, %v2229
      %v2290 = vand.u32 2147483647, %v2230
      %v2291 = vand.u32 2147483647, %v2231
      %v2292 = vand.u32 2147483647, %v2232
      %v2293 = vand.u32 2147483647, %v2233
      %v2294 = vand.u32 2147483647, %v2234
      %v2295 = vand.u32 2147483647, %v2235
      %v2296 = vand.u32 2147483647, %v2236
      %v2297 = vand.u32 2147483647, %v2237
      %v2298 = vand.u32 2147483647, %v2238
      %v2299 = vand.u32 2147483647, %v2239
      %v2300 = vand.u32 2147483647, %v2240
      %v2301 = vand.u32 2147483647, %v2241
      %v2302 = vand.u32 2147483647, %v2242
      %v2303 = vand.u32 2147483647, %v2243
      %v2304 = vand.u32 2147483647, %v2244
      %v2305 = vand.u32 2147483647, %v2245
      %v2306 = vand.u32 2147483647, %v2246
      %v2307 = vand.u32 2147483647, %v2247
      %v2308 = vand.u32 2147483647, %v2248
      %v2309 = vand.u32 2147483647, %v2249
      %v2310 = vand.u32 2147483647, %v2250
      %v2311 = vand.u32 2147483647, %v2251
      %v2312 = vand.u32 2147483647, %v2252
      %2373 = vrot.lane.b32.xlu0 %v2253, 70
      %v2374 = vpop.permute.xlu0 %2373
      %2375 = vrot.lane.b32.xlu0 %v2254, 70
      %v2376 = vpop.permute.xlu0 %2375
      %2377 = vrot.lane.b32.xlu0 %v2255, 70
      %v2378 = vpop.permute.xlu0 %2377
      %2379 = vrot.lane.b32.xlu0 %v2256, 70
      %v2380 = vpop.permute.xlu0 %2379
      %2381 = vrot.lane.b32.xlu0 %v2257, 70
      %v2382 = vpop.permute.xlu0 %2381
      %2383 = vrot.lane.b32.xlu0 %v2258, 70
      %v2384 = vpop.permute.xlu0 %2383
      %2385 = vrot.lane.b32.xlu0 %v2259, 70
      %v2386 = vpop.permute.xlu0 %2385
      %2387 = vrot.lane.b32.xlu0 %v2260, 70
      %v2388 = vpop.permute.xlu0 %2387
      %2389 = vrot.lane.b32.xlu0 %v2261, 70
      %v2390 = vpop.permute.xlu0 %2389
      %2391 = vrot.lane.b32.xlu0 %v2262, 70
      %v2392 = vpop.permute.xlu0 %2391
      %2393 = vrot.lane.b32.xlu0 %v2263, 70
      %v2394 = vpop.permute.xlu0 %2393
      %2395 = vrot.lane.b32.xlu0 %v2264, 70
      %v2396 = vpop.permute.xlu0 %2395
      %2397 = vrot.lane.b32.xlu0 %v2265, 70
      %v2398 = vpop.permute.xlu0 %2397
      %2399 = vrot.lane.b32.xlu0 %v2266, 70
      %v2400 = vpop.permute.xlu0 %2399
      %2401 = vrot.lane.b32.xlu0 %v2267, 70
      %v2402 = vpop.permute.xlu0 %2401
      %2403 = vrot.lane.b32.xlu0 %v2268, 70
      %v2404 = vpop.permute.xlu0 %2403
      %2405 = vrot.lane.b32.xlu0 %v2269, 70
      %v2406 = vpop.permute.xlu0 %2405
      %2407 = vrot.lane.b32.xlu0 %v2270, 70
      %v2408 = vpop.permute.xlu0 %2407
      %2409 = vrot.lane.b32.xlu0 %v2271, 70
      %v2410 = vpop.permute.xlu0 %2409
      %2411 = vrot.lane.b32.xlu0 %v2272, 70
      %v2412 = vpop.permute.xlu0 %2411
      %2413 = vrot.lane.b32.xlu0 %v2273, 70
      %v2414 = vpop.permute.xlu0 %2413
      %2415 = vrot.lane.b32.xlu0 %v2274, 70
      %v2416 = vpop.permute.xlu0 %2415
      %2417 = vrot.lane.b32.xlu0 %v2275, 70
      %v2418 = vpop.permute.xlu0 %2417
      %2419 = vrot.lane.b32.xlu0 %v2276, 70
      %v2420 = vpop.permute.xlu0 %2419
      %2421 = vrot.lane.b32.xlu0 %v2277, 70
      %v2422 = vpop.permute.xlu0 %2421
      %2423 = vrot.lane.b32.xlu0 %v2278, 70
      %v2424 = vpop.permute.xlu0 %2423
      %2425 = vrot.lane.b32.xlu0 %v2279, 70
      %v2426 = vpop.permute.xlu0 %2425
      %2427 = vrot.lane.b32.xlu0 %v2280, 70
      %v2428 = vpop.permute.xlu0 %2427
      %2429 = vrot.lane.b32.xlu0 %v2281, 70
      %v2430 = vpop.permute.xlu0 %2429
      %2431 = vrot.lane.b32.xlu0 %v2282, 70
      %v2432 = vpop.permute.xlu0 %2431
      %2433 = vrot.lane.b32.xlu0 %v2283, 70
      %v2434 = vpop.permute.xlu0 %2433
      %2435 = vrot.lane.b32.xlu0 %v2284, 70
      %v2436 = vpop.permute.xlu0 %2435
      %2437 = vrot.lane.b32.xlu0 %v2285, 70
      %v2438 = vpop.permute.xlu0 %2437
      %2439 = vrot.lane.b32.xlu0 %v2286, 70
      %v2440 = vpop.permute.xlu0 %2439
      %2441 = vrot.lane.b32.xlu0 %v2287, 70
      %v2442 = vpop.permute.xlu0 %2441
      %2443 = vrot.lane.b32.xlu0 %v2288, 70
      %v2444 = vpop.permute.xlu0 %2443
      %2445 = vrot.lane.b32.xlu0 %v2289, 70
      %v2446 = vpop.permute.xlu0 %2445
      %2447 = vrot.lane.b32.xlu0 %v2290, 70
      %v2448 = vpop.permute.xlu0 %2447
      %2449 = vrot.lane.b32.xlu0 %v2291, 70
      %v2450 = vpop.permute.xlu0 %2449
      %2451 = vrot.lane.b32.xlu0 %v2292, 70
      %v2452 = vpop.permute.xlu0 %2451
      %2453 = vrot.lane.b32.xlu0 %v2293, 70
      %v2454 = vpop.permute.xlu0 %2453
      %2455 = vrot.lane.b32.xlu0 %v2294, 70
      %v2456 = vpop.permute.xlu0 %2455
      %2457 = vrot.lane.b32.xlu0 %v2295, 70
      %v2458 = vpop.permute.xlu0 %2457
      %2459 = vrot.lane.b32.xlu0 %v2296, 70
      %v2460 = vpop.permute.xlu0 %2459
      %2461 = vrot.lane.b32.xlu0 %v2297, 70
      %v2462 = vpop.permute.xlu0 %2461
      %2463 = vrot.lane.b32.xlu0 %v2298, 70
      %v2464 = vpop.permute.xlu0 %2463
      %2465 = vrot.lane.b32.xlu0 %v2299, 70
      %v2466 = vpop.permute.xlu0 %2465
      %2467 = vrot.lane.b32.xlu0 %v2300, 70
      %v2468 = vpop.permute.xlu0 %2467
      %2469 = vrot.lane.b32.xlu0 %v2301, 70
      %v2470 = vpop.permute.xlu0 %2469
      %2471 = vrot.lane.b32.xlu0 %v2302, 70
      %v2472 = vpop.permute.xlu0 %2471
      %2473 = vrot.lane.b32.xlu0 %v2303, 70
      %v2474 = vpop.permute.xlu0 %2473
      %2475 = vrot.lane.b32.xlu0 %v2304, 70
      %v2476 = vpop.permute.xlu0 %2475
      %2477 = vrot.lane.b32.xlu0 %v2305, 70
      %v2478 = vpop.permute.xlu0 %2477
      %2479 = vrot.lane.b32.xlu0 %v2306, 70
      %v2480 = vpop.permute.xlu0 %2479
      %2481 = vrot.lane.b32.xlu0 %v2307, 70
      %v2482 = vpop.permute.xlu0 %2481
      %2483 = vrot.lane.b32.xlu0 %v2308, 70
      %v2484 = vpop.permute.xlu0 %2483
      %2485 = vrot.lane.b32.xlu0 %v2309, 70
      %v2486 = vpop.permute.xlu0 %2485
      %2487 = vrot.lane.b32.xlu0 %v2310, 70
      %v2488 = vpop.permute.xlu0 %2487
      %2489 = vrot.lane.b32.xlu0 %v2311, 70
      %v2490 = vpop.permute.xlu0 %2489
      %2491 = vrot.lane.b32.xlu0 %v2312, 70
      %v2492 = vpop.permute.xlu0 %2491
      %v2553 = vadd.f32 %v2253, %v2374
      %v2554 = vadd.f32 %v2254, %v2376
      %v2555 = vadd.f32 %v2255, %v2378
      %v2556 = vadd.f32 %v2256, %v2380
      %v2557 = vadd.f32 %v2257, %v2382
      %v2558 = vadd.f32 %v2258, %v2384
      %v2559 = vadd.f32 %v2259, %v2386
      %v2560 = vadd.f32 %v2260, %v2388
      %v2561 = vadd.f32 %v2261, %v2390
      %v2562 = vadd.f32 %v2262, %v2392
      %v2563 = vadd.f32 %v2263, %v2394
      %v2564 = vadd.f32 %v2264, %v2396
      %v2565 = vadd.f32 %v2265, %v2398
      %v2566 = vadd.f32 %v2266, %v2400
      %v2567 = vadd.f32 %v2267, %v2402
      %v2568 = vadd.f32 %v2268, %v2404
      %v2569 = vadd.f32 %v2269, %v2406
      %v2570 = vadd.f32 %v2270, %v2408
      %v2571 = vadd.f32 %v2271, %v2410
      %v2572 = vadd.f32 %v2272, %v2412
      %v2573 = vadd.f32 %v2273, %v2414
      %v2574 = vadd.f32 %v2274, %v2416
      %v2575 = vadd.f32 %v2275, %v2418
      %v2576 = vadd.f32 %v2276, %v2420
      %v2577 = vadd.f32 %v2277, %v2422
      %v2578 = vadd.f32 %v2278, %v2424
      %v2579 = vadd.f32 %v2279, %v2426
      %v2580 = vadd.f32 %v2280, %v2428
      %v2581 = vadd.f32 %v2281, %v2430
      %v2582 = vadd.f32 %v2282, %v2432
      %v2583 = vadd.f32 %v2283, %v2434
      %v2584 = vadd.f32 %v2284, %v2436
      %v2585 = vadd.f32 %v2285, %v2438
      %v2586 = vadd.f32 %v2286, %v2440
      %v2587 = vadd.f32 %v2287, %v2442
      %v2588 = vadd.f32 %v2288, %v2444
      %v2589 = vadd.f32 %v2289, %v2446
      %v2590 = vadd.f32 %v2290, %v2448
      %v2591 = vadd.f32 %v2291, %v2450
      %v2592 = vadd.f32 %v2292, %v2452
      %v2593 = vadd.f32 %v2293, %v2454
      %v2594 = vadd.f32 %v2294, %v2456
      %v2595 = vadd.f32 %v2295, %v2458
      %v2596 = vadd.f32 %v2296, %v2460
      %v2597 = vadd.f32 %v2297, %v2462
      %v2598 = vadd.f32 %v2298, %v2464
      %v2599 = vadd.f32 %v2299, %v2466
      %v2600 = vadd.f32 %v2300, %v2468
      %v2601 = vadd.f32 %v2301, %v2470
      %v2602 = vadd.f32 %v2302, %v2472
      %v2603 = vadd.f32 %v2303, %v2474
      %v2604 = vadd.f32 %v2304, %v2476
      %v2605 = vadd.f32 %v2305, %v2478
      %v2606 = vadd.f32 %v2306, %v2480
      %v2607 = vadd.f32 %v2307, %v2482
      %v2608 = vadd.f32 %v2308, %v2484
      %v2609 = vadd.f32 %v2309, %v2486
      %v2610 = vadd.f32 %v2310, %v2488
      %v2611 = vadd.f32 %v2311, %v2490
      %v2612 = vadd.f32 %v2312, %v2492
      %2673 = vrot.lane.b32.xlu0 %v2193, 70
      %v2674 = vpop.permute.xlu0 %2673
      %2675 = vrot.lane.b32.xlu0 %v2194, 70
      %v2676 = vpop.permute.xlu0 %2675
      %2677 = vrot.lane.b32.xlu0 %v2195, 70
      %v2678 = vpop.permute.xlu0 %2677
      %2679 = vrot.lane.b32.xlu0 %v2196, 70
      %v2680 = vpop.permute.xlu0 %2679
      %2681 = vrot.lane.b32.xlu0 %v2197, 70
      %v2682 = vpop.permute.xlu0 %2681
      %2683 = vrot.lane.b32.xlu0 %v2198, 70
      %v2684 = vpop.permute.xlu0 %2683
      %2685 = vrot.lane.b32.xlu0 %v2199, 70
      %v2686 = vpop.permute.xlu0 %2685
      %2687 = vrot.lane.b32.xlu0 %v2200, 70
      %v2688 = vpop.permute.xlu0 %2687
      %2689 = vrot.lane.b32.xlu0 %v2201, 70
      %v2690 = vpop.permute.xlu0 %2689
      %2691 = vrot.lane.b32.xlu0 %v2202, 70
      %v2692 = vpop.permute.xlu0 %2691
      %2693 = vrot.lane.b32.xlu0 %v2203, 70
      %v2694 = vpop.permute.xlu0 %2693
      %2695 = vrot.lane.b32.xlu0 %v2204, 70
      %v2696 = vpop.permute.xlu0 %2695
      %2697 = vrot.lane.b32.xlu0 %v2205, 70
      %v2698 = vpop.permute.xlu0 %2697
      %2699 = vrot.lane.b32.xlu0 %v2206, 70
      %v2700 = vpop.permute.xlu0 %2699
      %2701 = vrot.lane.b32.xlu0 %v2207, 70
      %v2702 = vpop.permute.xlu0 %2701
      %2703 = vrot.lane.b32.xlu0 %v2208, 70
      %v2704 = vpop.permute.xlu0 %2703
      %2705 = vrot.lane.b32.xlu0 %v2209, 70
      %v2706 = vpop.permute.xlu0 %2705
      %2707 = vrot.lane.b32.xlu0 %v2210, 70
      %v2708 = vpop.permute.xlu0 %2707
      %2709 = vrot.lane.b32.xlu0 %v2211, 70
      %v2710 = vpop.permute.xlu0 %2709
      %2711 = vrot.lane.b32.xlu0 %v2212, 70
      %v2712 = vpop.permute.xlu0 %2711
      %2713 = vrot.lane.b32.xlu0 %v2213, 70
      %v2714 = vpop.permute.xlu0 %2713
      %2715 = vrot.lane.b32.xlu0 %v2214, 70
      %v2716 = vpop.permute.xlu0 %2715
      %2717 = vrot.lane.b32.xlu0 %v2215, 70
      %v2718 = vpop.permute.xlu0 %2717
      %2719 = vrot.lane.b32.xlu0 %v2216, 70
      %v2720 = vpop.permute.xlu0 %2719
      %2721 = vrot.lane.b32.xlu0 %v2217, 70
      %v2722 = vpop.permute.xlu0 %2721
      %2723 = vrot.lane.b32.xlu0 %v2218, 70
      %v2724 = vpop.permute.xlu0 %2723
      %2725 = vrot.lane.b32.xlu0 %v2219, 70
      %v2726 = vpop.permute.xlu0 %2725
      %2727 = vrot.lane.b32.xlu0 %v2220, 70
      %v2728 = vpop.permute.xlu0 %2727
      %2729 = vrot.lane.b32.xlu0 %v2221, 70
      %v2730 = vpop.permute.xlu0 %2729
      %2731 = vrot.lane.b32.xlu0 %v2222, 70
      %v2732 = vpop.permute.xlu0 %2731
      %2733 = vrot.lane.b32.xlu0 %v2223, 70
      %v2734 = vpop.permute.xlu0 %2733
      %2735 = vrot.lane.b32.xlu0 %v2224, 70
      %v2736 = vpop.permute.xlu0 %2735
      %2737 = vrot.lane.b32.xlu0 %v2225, 70
      %v2738 = vpop.permute.xlu0 %2737
      %2739 = vrot.lane.b32.xlu0 %v2226, 70
      %v2740 = vpop.permute.xlu0 %2739
      %2741 = vrot.lane.b32.xlu0 %v2227, 70
      %v2742 = vpop.permute.xlu0 %2741
      %2743 = vrot.lane.b32.xlu0 %v2228, 70
      %v2744 = vpop.permute.xlu0 %2743
      %2745 = vrot.lane.b32.xlu0 %v2229, 70
      %v2746 = vpop.permute.xlu0 %2745
      %2747 = vrot.lane.b32.xlu0 %v2230, 70
      %v2748 = vpop.permute.xlu0 %2747
      %2749 = vrot.lane.b32.xlu0 %v2231, 70
      %v2750 = vpop.permute.xlu0 %2749
      %2751 = vrot.lane.b32.xlu0 %v2232, 70
      %v2752 = vpop.permute.xlu0 %2751
      %2753 = vrot.lane.b32.xlu0 %v2233, 70
      %v2754 = vpop.permute.xlu0 %2753
      %2755 = vrot.lane.b32.xlu0 %v2234, 70
      %v2756 = vpop.permute.xlu0 %2755
      %2757 = vrot.lane.b32.xlu0 %v2235, 70
      %v2758 = vpop.permute.xlu0 %2757
      %2759 = vrot.lane.b32.xlu0 %v2236, 70
      %v2760 = vpop.permute.xlu0 %2759
      %2761 = vrot.lane.b32.xlu0 %v2237, 70
      %v2762 = vpop.permute.xlu0 %2761
      %2763 = vrot.lane.b32.xlu0 %v2238, 70
      %v2764 = vpop.permute.xlu0 %2763
      %2765 = vrot.lane.b32.xlu0 %v2239, 70
      %v2766 = vpop.permute.xlu0 %2765
      %2767 = vrot.lane.b32.xlu0 %v2240, 70
      %v2768 = vpop.permute.xlu0 %2767
      %2769 = vrot.lane.b32.xlu0 %v2241, 70
      %v2770 = vpop.permute.xlu0 %2769
      %2771 = vrot.lane.b32.xlu0 %v2242, 70
      %v2772 = vpop.permute.xlu0 %2771
      %2773 = vrot.lane.b32.xlu0 %v2243, 70
      %v2774 = vpop.permute.xlu0 %2773
      %2775 = vrot.lane.b32.xlu0 %v2244, 70
      %v2776 = vpop.permute.xlu0 %2775
      %2777 = vrot.lane.b32.xlu0 %v2245, 70
      %v2778 = vpop.permute.xlu0 %2777
      %2779 = vrot.lane.b32.xlu0 %v2246, 70
      %v2780 = vpop.permute.xlu0 %2779
      %2781 = vrot.lane.b32.xlu0 %v2247, 70
      %v2782 = vpop.permute.xlu0 %2781
      %2783 = vrot.lane.b32.xlu0 %v2248, 70
      %v2784 = vpop.permute.xlu0 %2783
      %2785 = vrot.lane.b32.xlu0 %v2249, 70
      %v2786 = vpop.permute.xlu0 %2785
      %2787 = vrot.lane.b32.xlu0 %v2250, 70
      %v2788 = vpop.permute.xlu0 %2787
      %2789 = vrot.lane.b32.xlu0 %v2251, 70
      %v2790 = vpop.permute.xlu0 %2789
      %2791 = vrot.lane.b32.xlu0 %v2252, 70
      %v2792 = vpop.permute.xlu0 %2791
      %v2853 = vsub.f32 %v2193, %v2674
      %v2854 = vsub.f32 %v2194, %v2676
      %v2855 = vsub.f32 %v2195, %v2678
      %v2856 = vsub.f32 %v2196, %v2680
      %v2857 = vsub.f32 %v2197, %v2682
      %v2858 = vsub.f32 %v2198, %v2684
      %v2859 = vsub.f32 %v2199, %v2686
      %v2860 = vsub.f32 %v2200, %v2688
      %v2861 = vsub.f32 %v2201, %v2690
      %v2862 = vsub.f32 %v2202, %v2692
      %v2863 = vsub.f32 %v2203, %v2694
      %v2864 = vsub.f32 %v2204, %v2696
      %v2865 = vsub.f32 %v2205, %v2698
      %v2866 = vsub.f32 %v2206, %v2700
      %v2867 = vsub.f32 %v2207, %v2702
      %v2868 = vsub.f32 %v2208, %v2704
      %v2869 = vsub.f32 %v2209, %v2706
      %v2870 = vsub.f32 %v2210, %v2708
      %v2871 = vsub.f32 %v2211, %v2710
      %v2872 = vsub.f32 %v2212, %v2712
      %v2873 = vsub.f32 %v2213, %v2714
      %v2874 = vsub.f32 %v2214, %v2716
      %v2875 = vsub.f32 %v2215, %v2718
      %v2876 = vsub.f32 %v2216, %v2720
      %v2877 = vsub.f32 %v2217, %v2722
      %v2878 = vsub.f32 %v2218, %v2724
      %v2879 = vsub.f32 %v2219, %v2726
      %v2880 = vsub.f32 %v2220, %v2728
      %v2881 = vsub.f32 %v2221, %v2730
      %v2882 = vsub.f32 %v2222, %v2732
      %v2883 = vsub.f32 %v2223, %v2734
      %v2884 = vsub.f32 %v2224, %v2736
      %v2885 = vsub.f32 %v2225, %v2738
      %v2886 = vsub.f32 %v2226, %v2740
      %v2887 = vsub.f32 %v2227, %v2742
      %v2888 = vsub.f32 %v2228, %v2744
      %v2889 = vsub.f32 %v2229, %v2746
      %v2890 = vsub.f32 %v2230, %v2748
      %v2891 = vsub.f32 %v2231, %v2750
      %v2892 = vsub.f32 %v2232, %v2752
      %v2893 = vsub.f32 %v2233, %v2754
      %v2894 = vsub.f32 %v2234, %v2756
      %v2895 = vsub.f32 %v2235, %v2758
      %v2896 = vsub.f32 %v2236, %v2760
      %v2897 = vsub.f32 %v2237, %v2762
      %v2898 = vsub.f32 %v2238, %v2764
      %v2899 = vsub.f32 %v2239, %v2766
      %v2900 = vsub.f32 %v2240, %v2768
      %v2901 = vsub.f32 %v2241, %v2770
      %v2902 = vsub.f32 %v2242, %v2772
      %v2903 = vsub.f32 %v2243, %v2774
      %v2904 = vsub.f32 %v2244, %v2776
      %v2905 = vsub.f32 %v2245, %v2778
      %v2906 = vsub.f32 %v2246, %v2780
      %v2907 = vsub.f32 %v2247, %v2782
      %v2908 = vsub.f32 %v2248, %v2784
      %v2909 = vsub.f32 %v2249, %v2786
      %v2910 = vsub.f32 %v2250, %v2788
      %v2911 = vsub.f32 %v2251, %v2790
      %v2912 = vsub.f32 %v2252, %v2792
      %v2913 = vand.u32 2147483647, %v2853
      %v2914 = vand.u32 2147483647, %v2854
      %v2915 = vand.u32 2147483647, %v2855
      %v2916 = vand.u32 2147483647, %v2856
      %v2917 = vand.u32 2147483647, %v2857
      %v2918 = vand.u32 2147483647, %v2858
      %v2919 = vand.u32 2147483647, %v2859
      %v2920 = vand.u32 2147483647, %v2860
      %v2921 = vand.u32 2147483647, %v2861
      %v2922 = vand.u32 2147483647, %v2862
      %v2923 = vand.u32 2147483647, %v2863
      %v2924 = vand.u32 2147483647, %v2864
      %v2925 = vand.u32 2147483647, %v2865
      %v2926 = vand.u32 2147483647, %v2866
      %v2927 = vand.u32 2147483647, %v2867
      %v2928 = vand.u32 2147483647, %v2868
      %v2929 = vand.u32 2147483647, %v2869
      %v2930 = vand.u32 2147483647, %v2870
      %v2931 = vand.u32 2147483647, %v2871
      %v2932 = vand.u32 2147483647, %v2872
      %v2933 = vand.u32 2147483647, %v2873
      %v2934 = vand.u32 2147483647, %v2874
      %v2935 = vand.u32 2147483647, %v2875
      %v2936 = vand.u32 2147483647, %v2876
      %v2937 = vand.u32 2147483647, %v2877
      %v2938 = vand.u32 2147483647, %v2878
      %v2939 = vand.u32 2147483647, %v2879
      %v2940 = vand.u32 2147483647, %v2880
      %v2941 = vand.u32 2147483647, %v2881
      %v2942 = vand.u32 2147483647, %v2882
      %v2943 = vand.u32 2147483647, %v2883
      %v2944 = vand.u32 2147483647, %v2884
      %v2945 = vand.u32 2147483647, %v2885
      %v2946 = vand.u32 2147483647, %v2886
      %v2947 = vand.u32 2147483647, %v2887
      %v2948 = vand.u32 2147483647, %v2888
      %v2949 = vand.u32 2147483647, %v2889
      %v2950 = vand.u32 2147483647, %v2890
      %v2951 = vand.u32 2147483647, %v2891
      %v2952 = vand.u32 2147483647, %v2892
      %v2953 = vand.u32 2147483647, %v2893
      %v2954 = vand.u32 2147483647, %v2894
      %v2955 = vand.u32 2147483647, %v2895
      %v2956 = vand.u32 2147483647, %v2896
      %v2957 = vand.u32 2147483647, %v2897
      %v2958 = vand.u32 2147483647, %v2898
      %v2959 = vand.u32 2147483647, %v2899
      %v2960 = vand.u32 2147483647, %v2900
      %v2961 = vand.u32 2147483647, %v2901
      %v2962 = vand.u32 2147483647, %v2902
      %v2963 = vand.u32 2147483647, %v2903
      %v2964 = vand.u32 2147483647, %v2904
      %v2965 = vand.u32 2147483647, %v2905
      %v2966 = vand.u32 2147483647, %v2906
      %v2967 = vand.u32 2147483647, %v2907
      %v2968 = vand.u32 2147483647, %v2908
      %v2969 = vand.u32 2147483647, %v2909
      %v2970 = vand.u32 2147483647, %v2910
      %v2971 = vand.u32 2147483647, %v2911
      %v2972 = vand.u32 2147483647, %v2912
      %v2973 = vmul.f32 %v2553, %v2913
      %v2974 = vmul.f32 %v2554, %v2914
      %v2975 = vmul.f32 %v2555, %v2915
      %v2976 = vmul.f32 %v2556, %v2916
      %v2977 = vmul.f32 %v2557, %v2917
      %v2978 = vmul.f32 %v2558, %v2918
      %v2979 = vmul.f32 %v2559, %v2919
      %v2980 = vmul.f32 %v2560, %v2920
      %v2981 = vmul.f32 %v2561, %v2921
      %v2982 = vmul.f32 %v2562, %v2922
      %v2983 = vmul.f32 %v2563, %v2923
      %v2984 = vmul.f32 %v2564, %v2924
      %v2985 = vmul.f32 %v2565, %v2925
      %v2986 = vmul.f32 %v2566, %v2926
      %v2987 = vmul.f32 %v2567, %v2927
      %v2988 = vmul.f32 %v2568, %v2928
      %v2989 = vmul.f32 %v2569, %v2929
      %v2990 = vmul.f32 %v2570, %v2930
      %v2991 = vmul.f32 %v2571, %v2931
      %v2992 = vmul.f32 %v2572, %v2932
      %v2993 = vmul.f32 %v2573, %v2933
      %v2994 = vmul.f32 %v2574, %v2934
      %v2995 = vmul.f32 %v2575, %v2935
      %v2996 = vmul.f32 %v2576, %v2936
      %v2997 = vmul.f32 %v2577, %v2937
      %v2998 = vmul.f32 %v2578, %v2938
      %v2999 = vmul.f32 %v2579, %v2939
      %v3000 = vmul.f32 %v2580, %v2940
      %v3001 = vmul.f32 %v2581, %v2941
      %v3002 = vmul.f32 %v2582, %v2942
      %v3003 = vmul.f32 %v2583, %v2943
      %v3004 = vmul.f32 %v2584, %v2944
      %v3005 = vmul.f32 %v2585, %v2945
      %v3006 = vmul.f32 %v2586, %v2946
      %v3007 = vmul.f32 %v2587, %v2947
      %v3008 = vmul.f32 %v2588, %v2948
      %v3009 = vmul.f32 %v2589, %v2949
      %v3010 = vmul.f32 %v2590, %v2950
      %v3011 = vmul.f32 %v2591, %v2951
      %v3012 = vmul.f32 %v2592, %v2952
      %v3013 = vmul.f32 %v2593, %v2953
      %v3014 = vmul.f32 %v2594, %v2954
      %v3015 = vmul.f32 %v2595, %v2955
      %v3016 = vmul.f32 %v2596, %v2956
      %v3017 = vmul.f32 %v2597, %v2957
      %v3018 = vmul.f32 %v2598, %v2958
      %v3019 = vmul.f32 %v2599, %v2959
      %v3020 = vmul.f32 %v2600, %v2960
      %v3021 = vmul.f32 %v2601, %v2961
      %v3022 = vmul.f32 %v2602, %v2962
      %v3023 = vmul.f32 %v2603, %v2963
      %v3024 = vmul.f32 %v2604, %v2964
      %v3025 = vmul.f32 %v2605, %v2965
      %v3026 = vmul.f32 %v2606, %v2966
      %v3027 = vmul.f32 %v2607, %v2967
      %v3028 = vmul.f32 %v2608, %v2968
      %v3029 = vmul.f32 %v2609, %v2969
      %v3030 = vmul.f32 %v2610, %v2970
      %v3031 = vmul.f32 %v2611, %v2971
      %v3032 = vmul.f32 %v2612, %v2972
      %3033 = vst.msk [vmem:[#allocation2] sm:$0xff] %vm748, %v226
      %3034 = vst.msk [vmem:[#allocation2 + $0x10] sm:$0xff] %vm748, %v227
      %3035 = vst.msk [vmem:[#allocation2 + $0x20] sm:$0xff] %vm748, %v228
      %3036 = vst.msk [vmem:[#allocation2 + $0x30] sm:$0xff] %vm748, %v229
      %3037 = vst.msk [vmem:[#allocation2 + $0x40] sm:$0xff] %vm748, %v230
      %3038 = vst.msk [vmem:[#allocation2 + $0x50] sm:$0xff] %vm748, %v231
      %3039 = vst.msk [vmem:[#allocation2 + $0x60] sm:$0xff] %vm748, %v232
      %3040 = vst.msk [vmem:[#allocation2 + $0x70] sm:$0xff] %vm748, %v233
      %3041 = vst.msk [vmem:[#allocation2 + $0x80] sm:$0xff] %vm748, %v234
      %3042 = vst.msk [vmem:[#allocation2 + $0x90] sm:$0xff] %vm748, %v235
      %3043 = vst.msk [vmem:[#allocation2 + $0xa0] sm:$0xff] %vm748, %v236
      %3044 = vst.msk [vmem:[#allocation2 + $0xb0] sm:$0xff] %vm748, %v237
      %3045 = vst.msk [vmem:[#allocation2 + $0xc0] sm:$0xff] %vm748, %v238
      %3046 = vst.msk [vmem:[#allocation2 + $0xd0] sm:$0xff] %vm748, %v239
      %vm3047 = vcmask 945152
      %3048 = vst.msk [vmem:[#allocation2 + $0xe0] sm:$0xf] %vm3047, %v240
      %3049 = vst.msk [vmem:[#allocation2 + $0xf0] sm:$0xff] %vm748, %v241
      %3050 = vst.msk [vmem:[#allocation2 + $0x100] sm:$0xff] %vm748, %v242
      %3051 = vst.msk [vmem:[#allocation2 + $0x110] sm:$0xff] %vm748, %v243
      %3052 = vst.msk [vmem:[#allocation2 + $0x120] sm:$0xff] %vm748, %v244
      %3053 = vst.msk [vmem:[#allocation2 + $0x130] sm:$0xff] %vm748, %v245
      %3054 = vst.msk [vmem:[#allocation2 + $0x140] sm:$0xff] %vm748, %v246
      %3055 = vst.msk [vmem:[#allocation2 + $0x150] sm:$0xff] %vm748, %v247
      %3056 = vst.msk [vmem:[#allocation2 + $0x160] sm:$0xff] %vm748, %v248
      %3057 = vst.msk [vmem:[#allocation2 + $0x170] sm:$0xff] %vm748, %v249
      %3058 = vst.msk [vmem:[#allocation2 + $0x180] sm:$0xff] %vm748, %v250
      %3059 = vst.msk [vmem:[#allocation2 + $0x190] sm:$0xff] %vm748, %v251
      %3060 = vst.msk [vmem:[#allocation2 + $0x1a0] sm:$0xff] %vm748, %v252
      %3061 = vst.msk [vmem:[#allocation2 + $0x1b0] sm:$0xff] %vm748, %v253
      %3062 = vst.msk [vmem:[#allocation2 + $0x1c0] sm:$0xff] %vm748, %v254
      %3063 = vst.msk [vmem:[#allocation2 + $0x1d0] sm:$0xf] %vm3047, %v255
      %3064 = vst.msk [vmem:[#allocation2 + $0x1e0] sm:$0xff] %vm748, %v256
      %3065 = vst.msk [vmem:[#allocation2 + $0x1f0] sm:$0xff] %vm748, %v257
      %3066 = vst.msk [vmem:[#allocation2 + $0x200] sm:$0xff] %vm748, %v258
      %3067 = vst.msk [vmem:[#allocation2 + $0x210] sm:$0xff] %vm748, %v259
      %3068 = vst.msk [vmem:[#allocation2 + $0x220] sm:$0xff] %vm748, %v260
      %3069 = vst.msk [vmem:[#allocation2 + $0x230] sm:$0xff] %vm748, %v261
      %3070 = vst.msk [vmem:[#allocation2 + $0x240] sm:$0xff] %vm748, %v262
      %3071 = vst.msk [vmem:[#allocation2 + $0x250] sm:$0xff] %vm748, %v263
      %3072 = vst.msk [vmem:[#allocation2 + $0x260] sm:$0xff] %vm748, %v264
      %3073 = vst.msk [vmem:[#allocation2 + $0x270] sm:$0xff] %vm748, %v265
      %3074 = vst.msk [vmem:[#allocation2 + $0x280] sm:$0xff] %vm748, %v266
      %3075 = vst.msk [vmem:[#allocation2 + $0x290] sm:$0xff] %vm748, %v267
      %3076 = vst.msk [vmem:[#allocation2 + $0x2a0] sm:$0xff] %vm748, %v268
      %3077 = vst.msk [vmem:[#allocation2 + $0x2b0] sm:$0xff] %vm748, %v269
      %3078 = vst.msk [vmem:[#allocation2 + $0x2c0] sm:$0xf] %vm3047, %v270
      %3079 = vst.msk [vmem:[#allocation2 + $0x2d0] sm:$0xff] %vm748, %v271
      %3080 = vst.msk [vmem:[#allocation2 + $0x2e0] sm:$0xff] %vm748, %v272
      %3081 = vst.msk [vmem:[#allocation2 + $0x2f0] sm:$0xff] %vm748, %v273
      %3082 = vst.msk [vmem:[#allocation2 + $0x300] sm:$0xff] %vm748, %v274
      %3083 = vst.msk [vmem:[#allocation2 + $0x310] sm:$0xff] %vm748, %v275
      %3084 = vst.msk [vmem:[#allocation2 + $0x320] sm:$0xff] %vm748, %v276
      %3085 = vst.msk [vmem:[#allocation2 + $0x330] sm:$0xff] %vm748, %v277
      %3086 = vst.msk [vmem:[#allocation2 + $0x340] sm:$0xff] %vm748, %v278
      %3087 = vst.msk [vmem:[#allocation2 + $0x350] sm:$0xff] %vm748, %v279
      %3088 = vst.msk [vmem:[#allocation2 + $0x360] sm:$0xff] %vm748, %v280
      %3089 = vst.msk [vmem:[#allocation2 + $0x370] sm:$0xff] %vm748, %v281
      %3090 = vst.msk [vmem:[#allocation2 + $0x380] sm:$0xff] %vm748, %v282
      %3091 = vst.msk [vmem:[#allocation2 + $0x390] sm:$0xff] %vm748, %v283
      %3092 = vst.msk [vmem:[#allocation2 + $0x3a0] sm:$0xff] %vm748, %v284
      %3093 = vst.msk [vmem:[#allocation2 + $0x3b0] sm:$0xf] %vm3047, %v285
      %v3098 = vlaneseq
      %v3099 = vshrl.u32 %v3098, 7
      %v3100 = vsub.s32 0, %v3099
      %v3101 = vrot.slane %v286, %v3100
      %v3102 = vlaneseq
      %v3103 = vshrl.u32 %v3102, 7
      %v3104 = vsub.s32 0, %v3103
      %v3105 = vrot.slane %v287, %v3104
      %v3106 = vlaneseq
      %v3107 = vshrl.u32 %v3106, 7
      %v3108 = vsub.s32 0, %v3107
      %v3109 = vrot.slane %v288, %v3108
      %v3110 = vlaneseq
      %v3111 = vshrl.u32 %v3110, 7
      %v3112 = vsub.s32 0, %v3111
      %v3113 = vrot.slane %v289, %v3112
      %3114 = vrot.lane.b32.xlu0 %v3101, 116
      %v3115 = vpop.permute.xlu0 %3114
      %3116 = vrot.lane.b32.xlu0 %v3105, 116
      %v3117 = vpop.permute.xlu0 %3116
      %3118 = vrot.lane.b32.xlu0 %v3109, 116
      %v3119 = vpop.permute.xlu0 %3118
      %3120 = vrot.lane.b32.xlu0 %v3113, 116
      %v3121 = vpop.permute.xlu0 %3120
      %vm3126 = vcmask 982944
      %3127 = vst.msk [vmem:[#allocation2] sm:$0xff] %vm3126, %v3115
      %3128 = vst.msk [vmem:[#allocation2 + $0x10] sm:$0xff] %vm3126, %v3115
      %3129 = vst.msk [vmem:[#allocation2 + $0x20] sm:$0xff] %vm3126, %v3115
      %3130 = vst.msk [vmem:[#allocation2 + $0x30] sm:$0xff] %vm3126, %v3115
      %3131 = vst.msk [vmem:[#allocation2 + $0x40] sm:$0xff] %vm3126, %v3115
      %3132 = vst.msk [vmem:[#allocation2 + $0x50] sm:$0xff] %vm3126, %v3115
      %3133 = vst.msk [vmem:[#allocation2 + $0x60] sm:$0xff] %vm3126, %v3115
      %3134 = vst.msk [vmem:[#allocation2 + $0x70] sm:$0xff] %vm3126, %v3115
      %3135 = vst.msk [vmem:[#allocation2 + $0x80] sm:$0xff] %vm3126, %v3115
      %3136 = vst.msk [vmem:[#allocation2 + $0x90] sm:$0xff] %vm3126, %v3115
      %3137 = vst.msk [vmem:[#allocation2 + $0xa0] sm:$0xff] %vm3126, %v3115
      %3138 = vst.msk [vmem:[#allocation2 + $0xb0] sm:$0xff] %vm3126, %v3115
      %3139 = vst.msk [vmem:[#allocation2 + $0xc0] sm:$0xff] %vm3126, %v3115
      %3140 = vst.msk [vmem:[#allocation2 + $0xd0] sm:$0xff] %vm3126, %v3115
      %vm3141 = vcmask 978848
      %3142 = vst.msk [vmem:[#allocation2 + $0xe0] sm:$0xf] %vm3141, %v3115
      %3143 = vst.msk [vmem:[#allocation2 + $0xf0] sm:$0xff] %vm3126, %v3117
      %3144 = vst.msk [vmem:[#allocation2 + $0x100] sm:$0xff] %vm3126, %v3117
      %3145 = vst.msk [vmem:[#allocation2 + $0x110] sm:$0xff] %vm3126, %v3117
      %3146 = vst.msk [vmem:[#allocation2 + $0x120] sm:$0xff] %vm3126, %v3117
      %3147 = vst.msk [vmem:[#allocation2 + $0x130] sm:$0xff] %vm3126, %v3117
      %3148 = vst.msk [vmem:[#allocation2 + $0x140] sm:$0xff] %vm3126, %v3117
      %3149 = vst.msk [vmem:[#allocation2 + $0x150] sm:$0xff] %vm3126, %v3117
      %3150 = vst.msk [vmem:[#allocation2 + $0x160] sm:$0xff] %vm3126, %v3117
      %3151 = vst.msk [vmem:[#allocation2 + $0x170] sm:$0xff] %vm3126, %v3117
      %3152 = vst.msk [vmem:[#allocation2 + $0x180] sm:$0xff] %vm3126, %v3117
      %3153 = vst.msk [vmem:[#allocation2 + $0x190] sm:$0xff] %vm3126, %v3117
      %3154 = vst.msk [vmem:[#allocation2 + $0x1a0] sm:$0xff] %vm3126, %v3117
      %3155 = vst.msk [vmem:[#allocation2 + $0x1b0] sm:$0xff] %vm3126, %v3117
      %3156 = vst.msk [vmem:[#allocation2 + $0x1c0] sm:$0xff] %vm3126, %v3117
      %3157 = vst.msk [vmem:[#allocation2 + $0x1d0] sm:$0xf] %vm3141, %v3117
      %3158 = vst.msk [vmem:[#allocation2 + $0x1e0] sm:$0xff] %vm3126, %v3119
      %3159 = vst.msk [vmem:[#allocation2 + $0x1f0] sm:$0xff] %vm3126, %v3119
      %3160 = vst.msk [vmem:[#allocation2 + $0x200] sm:$0xff] %vm3126, %v3119
      %3161 = vst.msk [vmem:[#allocation2 + $0x210] sm:$0xff] %vm3126, %v3119
      %3162 = vst.msk [vmem:[#allocation2 + $0x220] sm:$0xff] %vm3126, %v3119
      %3163 = vst.msk [vmem:[#allocation2 + $0x230] sm:$0xff] %vm3126, %v3119
      %3164 = vst.msk [vmem:[#allocation2 + $0x240] sm:$0xff] %vm3126, %v3119
      %3165 = vst.msk [vmem:[#allocation2 + $0x250] sm:$0xff] %vm3126, %v3119
      %3166 = vst.msk [vmem:[#allocation2 + $0x260] sm:$0xff] %vm3126, %v3119
      %3167 = vst.msk [vmem:[#allocation2 + $0x270] sm:$0xff] %vm3126, %v3119
      %3168 = vst.msk [vmem:[#allocation2 + $0x280] sm:$0xff] %vm3126, %v3119
      %3169 = vst.msk [vmem:[#allocation2 + $0x290] sm:$0xff] %vm3126, %v3119
      %3170 = vst.msk [vmem:[#allocation2 + $0x2a0] sm:$0xff] %vm3126, %v3119
      %3171 = vst.msk [vmem:[#allocation2 + $0x2b0] sm:$0xff] %vm3126, %v3119
      %3172 = vst.msk [vmem:[#allocation2 + $0x2c0] sm:$0xf] %vm3141, %v3119
      %3173 = vst.msk [vmem:[#allocation2 + $0x2d0] sm:$0xff] %vm3126, %v3121
      %3174 = vst.msk [vmem:[#allocation2 + $0x2e0] sm:$0xff] %vm3126, %v3121
      %3175 = vst.msk [vmem:[#allocation2 + $0x2f0] sm:$0xff] %vm3126, %v3121
      %3176 = vst.msk [vmem:[#allocation2 + $0x300] sm:$0xff] %vm3126, %v3121
      %3177 = vst.msk [vmem:[#allocation2 + $0x310] sm:$0xff] %vm3126, %v3121
      %3178 = vst.msk [vmem:[#allocation2 + $0x320] sm:$0xff] %vm3126, %v3121
      %3179 = vst.msk [vmem:[#allocation2 + $0x330] sm:$0xff] %vm3126, %v3121
      %3180 = vst.msk [vmem:[#allocation2 + $0x340] sm:$0xff] %vm3126, %v3121
      %3181 = vst.msk [vmem:[#allocation2 + $0x350] sm:$0xff] %vm3126, %v3121
      %3182 = vst.msk [vmem:[#allocation2 + $0x360] sm:$0xff] %vm3126, %v3121
      %3183 = vst.msk [vmem:[#allocation2 + $0x370] sm:$0xff] %vm3126, %v3121
      %3184 = vst.msk [vmem:[#allocation2 + $0x380] sm:$0xff] %vm3126, %v3121
      %3185 = vst.msk [vmem:[#allocation2 + $0x390] sm:$0xff] %vm3126, %v3121
      %3186 = vst.msk [vmem:[#allocation2 + $0x3a0] sm:$0xff] %vm3126, %v3121
      %3187 = vst.msk [vmem:[#allocation2 + $0x3b0] sm:$0xf] %vm3141, %v3121
      %3248 = vrot.lane.b32.xlu0 %v2973, 120
      %v3249 = vpop.permute.xlu0 %3248
      %3250 = vrot.lane.b32.xlu0 %v2974, 120
      %v3251 = vpop.permute.xlu0 %3250
      %3252 = vrot.lane.b32.xlu0 %v2975, 120
      %v3253 = vpop.permute.xlu0 %3252
      %3254 = vrot.lane.b32.xlu0 %v2976, 120
      %v3255 = vpop.permute.xlu0 %3254
      %3256 = vrot.lane.b32.xlu0 %v2977, 120
      %v3257 = vpop.permute.xlu0 %3256
      %3258 = vrot.lane.b32.xlu0 %v2978, 120
      %v3259 = vpop.permute.xlu0 %3258
      %3260 = vrot.lane.b32.xlu0 %v2979, 120
      %v3261 = vpop.permute.xlu0 %3260
      %3262 = vrot.lane.b32.xlu0 %v2980, 120
      %v3263 = vpop.permute.xlu0 %3262
      %3264 = vrot.lane.b32.xlu0 %v2981, 120
      %v3265 = vpop.permute.xlu0 %3264
      %3266 = vrot.lane.b32.xlu0 %v2982, 120
      %v3267 = vpop.permute.xlu0 %3266
      %3268 = vrot.lane.b32.xlu0 %v2983, 120
      %v3269 = vpop.permute.xlu0 %3268
      %3270 = vrot.lane.b32.xlu0 %v2984, 120
      %v3271 = vpop.permute.xlu0 %3270
      %3272 = vrot.lane.b32.xlu0 %v2985, 120
      %v3273 = vpop.permute.xlu0 %3272
      %3274 = vrot.lane.b32.xlu0 %v2986, 120
      %v3275 = vpop.permute.xlu0 %3274
      %3276 = vrot.lane.b32.xlu0 %v2987, 120
      %v3277 = vpop.permute.xlu0 %3276
      %3278 = vrot.lane.b32.xlu0 %v2988, 120
      %v3279 = vpop.permute.xlu0 %3278
      %3280 = vrot.lane.b32.xlu0 %v2989, 120
      %v3281 = vpop.permute.xlu0 %3280
      %3282 = vrot.lane.b32.xlu0 %v2990, 120
      %v3283 = vpop.permute.xlu0 %3282
      %3284 = vrot.lane.b32.xlu0 %v2991, 120
      %v3285 = vpop.permute.xlu0 %3284
      %3286 = vrot.lane.b32.xlu0 %v2992, 120
      %v3287 = vpop.permute.xlu0 %3286
      %3288 = vrot.lane.b32.xlu0 %v2993, 120
      %v3289 = vpop.permute.xlu0 %3288
      %3290 = vrot.lane.b32.xlu0 %v2994, 120
      %v3291 = vpop.permute.xlu0 %3290
      %3292 = vrot.lane.b32.xlu0 %v2995, 120
      %v3293 = vpop.permute.xlu0 %3292
      %3294 = vrot.lane.b32.xlu0 %v2996, 120
      %v3295 = vpop.permute.xlu0 %3294
      %3296 = vrot.lane.b32.xlu0 %v2997, 120
      %v3297 = vpop.permute.xlu0 %3296
      %3298 = vrot.lane.b32.xlu0 %v2998, 120
      %v3299 = vpop.permute.xlu0 %3298
      %3300 = vrot.lane.b32.xlu0 %v2999, 120
      %v3301 = vpop.permute.xlu0 %3300
      %3302 = vrot.lane.b32.xlu0 %v3000, 120
      %v3303 = vpop.permute.xlu0 %3302
      %3304 = vrot.lane.b32.xlu0 %v3001, 120
      %v3305 = vpop.permute.xlu0 %3304
      %3306 = vrot.lane.b32.xlu0 %v3002, 120
      %v3307 = vpop.permute.xlu0 %3306
      %3308 = vrot.lane.b32.xlu0 %v3003, 120
      %v3309 = vpop.permute.xlu0 %3308
      %3310 = vrot.lane.b32.xlu0 %v3004, 120
      %v3311 = vpop.permute.xlu0 %3310
      %3312 = vrot.lane.b32.xlu0 %v3005, 120
      %v3313 = vpop.permute.xlu0 %3312
      %3314 = vrot.lane.b32.xlu0 %v3006, 120
      %v3315 = vpop.permute.xlu0 %3314
      %3316 = vrot.lane.b32.xlu0 %v3007, 120
      %v3317 = vpop.permute.xlu0 %3316
      %3318 = vrot.lane.b32.xlu0 %v3008, 120
      %v3319 = vpop.permute.xlu0 %3318
      %3320 = vrot.lane.b32.xlu0 %v3009, 120
      %v3321 = vpop.permute.xlu0 %3320
      %3322 = vrot.lane.b32.xlu0 %v3010, 120
      %v3323 = vpop.permute.xlu0 %3322
      %3324 = vrot.lane.b32.xlu0 %v3011, 120
      %v3325 = vpop.permute.xlu0 %3324
      %3326 = vrot.lane.b32.xlu0 %v3012, 120
      %v3327 = vpop.permute.xlu0 %3326
      %3328 = vrot.lane.b32.xlu0 %v3013, 120
      %v3329 = vpop.permute.xlu0 %3328
      %3330 = vrot.lane.b32.xlu0 %v3014, 120
      %v3331 = vpop.permute.xlu0 %3330
      %3332 = vrot.lane.b32.xlu0 %v3015, 120
      %v3333 = vpop.permute.xlu0 %3332
      %3334 = vrot.lane.b32.xlu0 %v3016, 120
      %v3335 = vpop.permute.xlu0 %3334
      %3336 = vrot.lane.b32.xlu0 %v3017, 120
      %v3337 = vpop.permute.xlu0 %3336
      %3338 = vrot.lane.b32.xlu0 %v3018, 120
      %v3339 = vpop.permute.xlu0 %3338
      %3340 = vrot.lane.b32.xlu0 %v3019, 120
      %v3341 = vpop.permute.xlu0 %3340
      %3342 = vrot.lane.b32.xlu0 %v3020, 120
      %v3343 = vpop.permute.xlu0 %3342
      %3344 = vrot.lane.b32.xlu0 %v3021, 120
      %v3345 = vpop.permute.xlu0 %3344
      %3346 = vrot.lane.b32.xlu0 %v3022, 120
      %v3347 = vpop.permute.xlu0 %3346
      %3348 = vrot.lane.b32.xlu0 %v3023, 120
      %v3349 = vpop.permute.xlu0 %3348
      %3350 = vrot.lane.b32.xlu0 %v3024, 120
      %v3351 = vpop.permute.xlu0 %3350
      %3352 = vrot.lane.b32.xlu0 %v3025, 120
      %v3353 = vpop.permute.xlu0 %3352
      %3354 = vrot.lane.b32.xlu0 %v3026, 120
      %v3355 = vpop.permute.xlu0 %3354
      %3356 = vrot.lane.b32.xlu0 %v3027, 120
      %v3357 = vpop.permute.xlu0 %3356
      %3358 = vrot.lane.b32.xlu0 %v3028, 120
      %v3359 = vpop.permute.xlu0 %3358
      %3360 = vrot.lane.b32.xlu0 %v3029, 120
      %v3361 = vpop.permute.xlu0 %3360
      %3362 = vrot.lane.b32.xlu0 %v3030, 120
      %v3363 = vpop.permute.xlu0 %3362
      %3364 = vrot.lane.b32.xlu0 %v3031, 120
      %v3365 = vpop.permute.xlu0 %3364
      %3366 = vrot.lane.b32.xlu0 %v3032, 120
      %v3367 = vpop.permute.xlu0 %3366
      %vm3428 = vcmask 1048512
      %3429 = vst.msk [vmem:[#allocation2] sm:$0xff] %vm3428, %v3249
      %vm3430 = vcmask 408576
      %3431 = vst.msk [vmem:[#allocation2 + $0x8] sm:$0xff] %vm3430, %v3249
      %3432 = vst.msk [vmem:[#allocation2 + $0x10] sm:$0xff] %vm3428, %v3251
      %3433 = vst.msk [vmem:[#allocation2 + $0x18] sm:$0xff] %vm3430, %v3251
      %3434 = vst.msk [vmem:[#allocation2 + $0x20] sm:$0xff] %vm3428, %v3253
      %3435 = vst.msk [vmem:[#allocation2 + $0x28] sm:$0xff] %vm3430, %v3253
      %3436 = vst.msk [vmem:[#allocation2 + $0x30] sm:$0xff] %vm3428, %v3255
      %3437 = vst.msk [vmem:[#allocation2 + $0x38] sm:$0xff] %vm3430, %v3255
      %3438 = vst.msk [vmem:[#allocation2 + $0x40] sm:$0xff] %vm3428, %v3257
      %3439 = vst.msk [vmem:[#allocation2 + $0x48] sm:$0xff] %vm3430, %v3257
      %3440 = vst.msk [vmem:[#allocation2 + $0x50] sm:$0xff] %vm3428, %v3259
      %3441 = vst.msk [vmem:[#allocation2 + $0x58] sm:$0xff] %vm3430, %v3259
      %3442 = vst.msk [vmem:[#allocation2 + $0x60] sm:$0xff] %vm3428, %v3261
      %3443 = vst.msk [vmem:[#allocation2 + $0x68] sm:$0xff] %vm3430, %v3261
      %3444 = vst.msk [vmem:[#allocation2 + $0x70] sm:$0xff] %vm3428, %v3263
      %3445 = vst.msk [vmem:[#allocation2 + $0x78] sm:$0xff] %vm3430, %v3263
      %3446 = vst.msk [vmem:[#allocation2 + $0x80] sm:$0xff] %vm3428, %v3265
      %3447 = vst.msk [vmem:[#allocation2 + $0x88] sm:$0xff] %vm3430, %v3265
      %3448 = vst.msk [vmem:[#allocation2 + $0x90] sm:$0xff] %vm3428, %v3267
      %3449 = vst.msk [vmem:[#allocation2 + $0x98] sm:$0xff] %vm3430, %v3267
      %3450 = vst.msk [vmem:[#allocation2 + $0xa0] sm:$0xff] %vm3428, %v3269
      %3451 = vst.msk [vmem:[#allocation2 + $0xa8] sm:$0xff] %vm3430, %v3269
      %3452 = vst.msk [vmem:[#allocation2 + $0xb0] sm:$0xff] %vm3428, %v3271
      %3453 = vst.msk [vmem:[#allocation2 + $0xb8] sm:$0xff] %vm3430, %v3271
      %3454 = vst.msk [vmem:[#allocation2 + $0xc0] sm:$0xff] %vm3428, %v3273
      %3455 = vst.msk [vmem:[#allocation2 + $0xc8] sm:$0xff] %vm3430, %v3273
      %3456 = vst.msk [vmem:[#allocation2 + $0xd0] sm:$0xff] %vm3428, %v3275
      %3457 = vst.msk [vmem:[#allocation2 + $0xd8] sm:$0xff] %vm3430, %v3275
      %vm3458 = vcmask 1044416
      %3459 = vst.msk [vmem:[#allocation2 + $0xe0] sm:$0xf] %vm3458, %v3277
      %vm3460 = vcmask 404480
      %3461 = vst.msk [vmem:[#allocation2 + $0xe8] sm:$0xf] %vm3460, %v3277
      %3462 = vst.msk [vmem:[#allocation2 + $0xf0] sm:$0xff] %vm3428, %v3279
      %3463 = vst.msk [vmem:[#allocation2 + $0xf8] sm:$0xff] %vm3430, %v3279
      %3464 = vst.msk [vmem:[#allocation2 + $0x100] sm:$0xff] %vm3428, %v3281
      %3465 = vst.msk [vmem:[#allocation2 + $0x108] sm:$0xff] %vm3430, %v3281
      %3466 = vst.msk [vmem:[#allocation2 + $0x110] sm:$0xff] %vm3428, %v3283
      %3467 = vst.msk [vmem:[#allocation2 + $0x118] sm:$0xff] %vm3430, %v3283
      %3468 = vst.msk [vmem:[#allocation2 + $0x120] sm:$0xff] %vm3428, %v3285
      %3469 = vst.msk [vmem:[#allocation2 + $0x128] sm:$0xff] %vm3430, %v3285
      %3470 = vst.msk [vmem:[#allocation2 + $0x130] sm:$0xff] %vm3428, %v3287
      %3471 = vst.msk [vmem:[#allocation2 + $0x138] sm:$0xff] %vm3430, %v3287
      %3472 = vst.msk [vmem:[#allocation2 + $0x140] sm:$0xff] %vm3428, %v3289
      %3473 = vst.msk [vmem:[#allocation2 + $0x148] sm:$0xff] %vm3430, %v3289
      %3474 = vst.msk [vmem:[#allocation2 + $0x150] sm:$0xff] %vm3428, %v3291
      %3475 = vst.msk [vmem:[#allocation2 + $0x158] sm:$0xff] %vm3430, %v3291
      %3476 = vst.msk [vmem:[#allocation2 + $0x160] sm:$0xff] %vm3428, %v3293
      %3477 = vst.msk [vmem:[#allocation2 + $0x168] sm:$0xff] %vm3430, %v3293
      %3478 = vst.msk [vmem:[#allocation2 + $0x170] sm:$0xff] %vm3428, %v3295
      %3479 = vst.msk [vmem:[#allocation2 + $0x178] sm:$0xff] %vm3430, %v3295
      %3480 = vst.msk [vmem:[#allocation2 + $0x180] sm:$0xff] %vm3428, %v3297
      %3481 = vst.msk [vmem:[#allocation2 + $0x188] sm:$0xff] %vm3430, %v3297
      %3482 = vst.msk [vmem:[#allocation2 + $0x190] sm:$0xff] %vm3428, %v3299
      %3483 = vst.msk [vmem:[#allocation2 + $0x198] sm:$0xff] %vm3430, %v3299
      %3484 = vst.msk [vmem:[#allocation2 + $0x1a0] sm:$0xff] %vm3428, %v3301
      %3485 = vst.msk [vmem:[#allocation2 + $0x1a8] sm:$0xff] %vm3430, %v3301
      %3486 = vst.msk [vmem:[#allocation2 + $0x1b0] sm:$0xff] %vm3428, %v3303
      %3487 = vst.msk [vmem:[#allocation2 + $0x1b8] sm:$0xff] %vm3430, %v3303
      %3488 = vst.msk [vmem:[#allocation2 + $0x1c0] sm:$0xff] %vm3428, %v3305
      %3489 = vst.msk [vmem:[#allocation2 + $0x1c8] sm:$0xff] %vm3430, %v3305
      %3490 = vst.msk [vmem:[#allocation2 + $0x1d0] sm:$0xf] %vm3458, %v3307
      %3491 = vst.msk [vmem:[#allocation2 + $0x1d8] sm:$0xf] %vm3460, %v3307
      %3492 = vst.msk [vmem:[#allocation2 + $0x1e0] sm:$0xff] %vm3428, %v3309
      %3493 = vst.msk [vmem:[#allocation2 + $0x1e8] sm:$0xff] %vm3430, %v3309
      %3494 = vst.msk [vmem:[#allocation2 + $0x1f0] sm:$0xff] %vm3428, %v3311
      %3495 = vst.msk [vmem:[#allocation2 + $0x1f8] sm:$0xff] %vm3430, %v3311
      %3496 = vst.msk [vmem:[#allocation2 + $0x200] sm:$0xff] %vm3428, %v3313
      %3497 = vst.msk [vmem:[#allocation2 + $0x208] sm:$0xff] %vm3430, %v3313
      %3498 = vst.msk [vmem:[#allocation2 + $0x210] sm:$0xff] %vm3428, %v3315
      %3499 = vst.msk [vmem:[#allocation2 + $0x218] sm:$0xff] %vm3430, %v3315
      %3500 = vst.msk [vmem:[#allocation2 + $0x220] sm:$0xff] %vm3428, %v3317
      %3501 = vst.msk [vmem:[#allocation2 + $0x228] sm:$0xff] %vm3430, %v3317
      %3502 = vst.msk [vmem:[#allocation2 + $0x230] sm:$0xff] %vm3428, %v3319
      %3503 = vst.msk [vmem:[#allocation2 + $0x238] sm:$0xff] %vm3430, %v3319
      %3504 = vst.msk [vmem:[#allocation2 + $0x240] sm:$0xff] %vm3428, %v3321
      %3505 = vst.msk [vmem:[#allocation2 + $0x248] sm:$0xff] %vm3430, %v3321
      %3506 = vst.msk [vmem:[#allocation2 + $0x250] sm:$0xff] %vm3428, %v3323
      %3507 = vst.msk [vmem:[#allocation2 + $0x258] sm:$0xff] %vm3430, %v3323
      %3508 = vst.msk [vmem:[#allocation2 + $0x260] sm:$0xff] %vm3428, %v3325
      %3509 = vst.msk [vmem:[#allocation2 + $0x268] sm:$0xff] %vm3430, %v3325
      %3510 = vst.msk [vmem:[#allocation2 + $0x270] sm:$0xff] %vm3428, %v3327
      %3511 = vst.msk [vmem:[#allocation2 + $0x278] sm:$0xff] %vm3430, %v3327
      %3512 = vst.msk [vmem:[#allocation2 + $0x280] sm:$0xff] %vm3428, %v3329
      %3513 = vst.msk [vmem:[#allocation2 + $0x288] sm:$0xff] %vm3430, %v3329
      %3514 = vst.msk [vmem:[#allocation2 + $0x290] sm:$0xff] %vm3428, %v3331
      %3515 = vst.msk [vmem:[#allocation2 + $0x298] sm:$0xff] %vm3430, %v3331
      %3516 = vst.msk [vmem:[#allocation2 + $0x2a0] sm:$0xff] %vm3428, %v3333
      %3517 = vst.msk [vmem:[#allocation2 + $0x2a8] sm:$0xff] %vm3430, %v3333
      %3518 = vst.msk [vmem:[#allocation2 + $0x2b0] sm:$0xff] %vm3428, %v3335
      %3519 = vst.msk [vmem:[#allocation2 + $0x2b8] sm:$0xff] %vm3430, %v3335
      %3520 = vst.msk [vmem:[#allocation2 + $0x2c0] sm:$0xf] %vm3458, %v3337
      %3521 = vst.msk [vmem:[#allocation2 + $0x2c8] sm:$0xf] %vm3460, %v3337
      %3522 = vst.msk [vmem:[#allocation2 + $0x2d0] sm:$0xff] %vm3428, %v3339
      %3523 = vst.msk [vmem:[#allocation2 + $0x2d8] sm:$0xff] %vm3430, %v3339
      %3524 = vst.msk [vmem:[#allocation2 + $0x2e0] sm:$0xff] %vm3428, %v3341
      %3525 = vst.msk [vmem:[#allocation2 + $0x2e8] sm:$0xff] %vm3430, %v3341
      %3526 = vst.msk [vmem:[#allocation2 + $0x2f0] sm:$0xff] %vm3428, %v3343
      %3527 = vst.msk [vmem:[#allocation2 + $0x2f8] sm:$0xff] %vm3430, %v3343
      %3528 = vst.msk [vmem:[#allocation2 + $0x300] sm:$0xff] %vm3428, %v3345
      %3529 = vst.msk [vmem:[#allocation2 + $0x308] sm:$0xff] %vm3430, %v3345
      %3530 = vst.msk [vmem:[#allocation2 + $0x310] sm:$0xff] %vm3428, %v3347
      %3531 = vst.msk [vmem:[#allocation2 + $0x318] sm:$0xff] %vm3430, %v3347
      %3532 = vst.msk [vmem:[#allocation2 + $0x320] sm:$0xff] %vm3428, %v3349
      %3533 = vst.msk [vmem:[#allocation2 + $0x328] sm:$0xff] %vm3430, %v3349
      %3534 = vst.msk [vmem:[#allocation2 + $0x330] sm:$0xff] %vm3428, %v3351
      %3535 = vst.msk [vmem:[#allocation2 + $0x338] sm:$0xff] %vm3430, %v3351
      %3536 = vst.msk [vmem:[#allocation2 + $0x340] sm:$0xff] %vm3428, %v3353
      %3537 = vst.msk [vmem:[#allocation2 + $0x348] sm:$0xff] %vm3430, %v3353
      %3538 = vst.msk [vmem:[#allocation2 + $0x350] sm:$0xff] %vm3428, %v3355
      %3539 = vst.msk [vmem:[#allocation2 + $0x358] sm:$0xff] %vm3430, %v3355
      %3540 = vst.msk [vmem:[#allocation2 + $0x360] sm:$0xff] %vm3428, %v3357
      %3541 = vst.msk [vmem:[#allocation2 + $0x368] sm:$0xff] %vm3430, %v3357
      %3542 = vst.msk [vmem:[#allocation2 + $0x370] sm:$0xff] %vm3428, %v3359
      %3543 = vst.msk [vmem:[#allocation2 + $0x378] sm:$0xff] %vm3430, %v3359
      %3544 = vst.msk [vmem:[#allocation2 + $0x380] sm:$0xff] %vm3428, %v3361
      %3545 = vst.msk [vmem:[#allocation2 + $0x388] sm:$0xff] %vm3430, %v3361
      %3546 = vst.msk [vmem:[#allocation2 + $0x390] sm:$0xff] %vm3428, %v3363
      %3547 = vst.msk [vmem:[#allocation2 + $0x398] sm:$0xff] %vm3430, %v3363
      %3548 = vst.msk [vmem:[#allocation2 + $0x3a0] sm:$0xff] %vm3428, %v3365
      %3549 = vst.msk [vmem:[#allocation2 + $0x3a8] sm:$0xff] %vm3430, %v3365
      %3550 = vst.msk [vmem:[#allocation2 + $0x3b0] sm:$0xf] %vm3458, %v3367
      %3551 = vst.msk [vmem:[#allocation2 + $0x3b8] sm:$0xf] %vm3460, %v3367
      %v3552 = vld [vmem:[#allocation2] sm:$0xff]
      %v3553 = vld [vmem:[#allocation2 + $0x8] sm:$0xff]
      %v3554 = vld [vmem:[#allocation2 + $0x10] sm:$0xff]
      %v3555 = vld [vmem:[#allocation2 + $0x18] sm:$0xff]
      %v3556 = vld [vmem:[#allocation2 + $0x20] sm:$0xff]
      %v3557 = vld [vmem:[#allocation2 + $0x28] sm:$0xff]
      %v3558 = vld [vmem:[#allocation2 + $0x30] sm:$0xff]
      %v3559 = vld [vmem:[#allocation2 + $0x38] sm:$0xff]
      %v3560 = vld [vmem:[#allocation2 + $0x40] sm:$0xff]
      %v3561 = vld [vmem:[#allocation2 + $0x48] sm:$0xff]
      %v3562 = vld [vmem:[#allocation2 + $0x50] sm:$0xff]
      %v3563 = vld [vmem:[#allocation2 + $0x58] sm:$0xff]
      %v3564 = vld [vmem:[#allocation2 + $0x60] sm:$0xff]
      %v3565 = vld [vmem:[#allocation2 + $0x68] sm:$0xff]
      %v3566 = vld [vmem:[#allocation2 + $0x70] sm:$0xff]
      %v3567 = vld [vmem:[#allocation2 + $0x78] sm:$0xff]
      %v3568 = vld [vmem:[#allocation2 + $0x80] sm:$0xff]
      %v3569 = vld [vmem:[#allocation2 + $0x88] sm:$0xff]
      %v3570 = vld [vmem:[#allocation2 + $0x90] sm:$0xff]
      %v3571 = vld [vmem:[#allocation2 + $0x98] sm:$0xff]
      %v3572 = vld [vmem:[#allocation2 + $0xa0] sm:$0xff]
      %v3573 = vld [vmem:[#allocation2 + $0xa8] sm:$0xff]
      %v3574 = vld [vmem:[#allocation2 + $0xb0] sm:$0xff]
      %v3575 = vld [vmem:[#allocation2 + $0xb8] sm:$0xff]
      %v3576 = vld [vmem:[#allocation2 + $0xc0] sm:$0xff]
      %v3577 = vld [vmem:[#allocation2 + $0xc8] sm:$0xff]
      %v3578 = vld [vmem:[#allocation2 + $0xd0] sm:$0xff]
      %v3579 = vld [vmem:[#allocation2 + $0xd8] sm:$0xff]
      %v3580 = vld [vmem:[#allocation2 + $0xe0] sm:$0xf]
      %v3581 = vld [vmem:[#allocation2 + $0xe8] sm:$0xf]
      %v3582 = vld [vmem:[#allocation2 + $0xf0] sm:$0xff]
      %v3583 = vld [vmem:[#allocation2 + $0xf8] sm:$0xff]
      %v3584 = vld [vmem:[#allocation2 + $0x100] sm:$0xff]
      %v3585 = vld [vmem:[#allocation2 + $0x108] sm:$0xff]
      %v3586 = vld [vmem:[#allocation2 + $0x110] sm:$0xff]
      %v3587 = vld [vmem:[#allocation2 + $0x118] sm:$0xff]
      %v3588 = vld [vmem:[#allocation2 + $0x120] sm:$0xff]
      %v3589 = vld [vmem:[#allocation2 + $0x128] sm:$0xff]
      %v3590 = vld [vmem:[#allocation2 + $0x130] sm:$0xff]
      %v3591 = vld [vmem:[#allocation2 + $0x138] sm:$0xff]
      %v3592 = vld [vmem:[#allocation2 + $0x140] sm:$0xff]
      %v3593 = vld [vmem:[#allocation2 + $0x148] sm:$0xff]
      %v3594 = vld [vmem:[#allocation2 + $0x150] sm:$0xff]
      %v3595 = vld [vmem:[#allocation2 + $0x158] sm:$0xff]
      %v3596 = vld [vmem:[#allocation2 + $0x160] sm:$0xff]
      %v3597 = vld [vmem:[#allocation2 + $0x168] sm:$0xff]
      %v3598 = vld [vmem:[#allocation2 + $0x170] sm:$0xff]
      %v3599 = vld [vmem:[#allocation2 + $0x178] sm:$0xff]
      %v3600 = vld [vmem:[#allocation2 + $0x180] sm:$0xff]
      %v3601 = vld [vmem:[#allocation2 + $0x188] sm:$0xff]
      %v3602 = vld [vmem:[#allocation2 + $0x190] sm:$0xff]
      %v3603 = vld [vmem:[#allocation2 + $0x198] sm:$0xff]
      %v3604 = vld [vmem:[#allocation2 + $0x1a0] sm:$0xff]
      %v3605 = vld [vmem:[#allocation2 + $0x1a8] sm:$0xff]
      %v3606 = vld [vmem:[#allocation2 + $0x1b0] sm:$0xff]
      %v3607 = vld [vmem:[#allocation2 + $0x1b8] sm:$0xff]
      %v3608 = vld [vmem:[#allocation2 + $0x1c0] sm:$0xff]
      %v3609 = vld [vmem:[#allocation2 + $0x1c8] sm:$0xff]
      %v3610 = vld [vmem:[#allocation2 + $0x1d0] sm:$0xf]
      %v3611 = vld [vmem:[#allocation2 + $0x1d8] sm:$0xf]
      %v3612 = vld [vmem:[#allocation2 + $0x1e0] sm:$0xff]
      %v3613 = vld [vmem:[#allocation2 + $0x1e8] sm:$0xff]
      %v3614 = vld [vmem:[#allocation2 + $0x1f0] sm:$0xff]
      %v3615 = vld [vmem:[#allocation2 + $0x1f8] sm:$0xff]
      %v3616 = vld [vmem:[#allocation2 + $0x200] sm:$0xff]
      %v3617 = vld [vmem:[#allocation2 + $0x208] sm:$0xff]
      %v3618 = vld [vmem:[#allocation2 + $0x210] sm:$0xff]
      %v3619 = vld [vmem:[#allocation2 + $0x218] sm:$0xff]
      %v3620 = vld [vmem:[#allocation2 + $0x220] sm:$0xff]
      %v3621 = vld [vmem:[#allocation2 + $0x228] sm:$0xff]
      %v3622 = vld [vmem:[#allocation2 + $0x230] sm:$0xff]
      %v3623 = vld [vmem:[#allocation2 + $0x238] sm:$0xff]
      %v3624 = vld [vmem:[#allocation2 + $0x240] sm:$0xff]
      %v3625 = vld [vmem:[#allocation2 + $0x248] sm:$0xff]
      %v3626 = vld [vmem:[#allocation2 + $0x250] sm:$0xff]
      %v3627 = vld [vmem:[#allocation2 + $0x258] sm:$0xff]
      %v3628 = vld [vmem:[#allocation2 + $0x260] sm:$0xff]
      %v3629 = vld [vmem:[#allocation2 + $0x268] sm:$0xff]
      %v3630 = vld [vmem:[#allocation2 + $0x270] sm:$0xff]
      %v3631 = vld [vmem:[#allocation2 + $0x278] sm:$0xff]
      %v3632 = vld [vmem:[#allocation2 + $0x280] sm:$0xff]
      %v3633 = vld [vmem:[#allocation2 + $0x288] sm:$0xff]
      %v3634 = vld [vmem:[#allocation2 + $0x290] sm:$0xff]
      %v3635 = vld [vmem:[#allocation2 + $0x298] sm:$0xff]
      %v3636 = vld [vmem:[#allocation2 + $0x2a0] sm:$0xff]
      %v3637 = vld [vmem:[#allocation2 + $0x2a8] sm:$0xff]
      %v3638 = vld [vmem:[#allocation2 + $0x2b0] sm:$0xff]
      %v3639 = vld [vmem:[#allocation2 + $0x2b8] sm:$0xff]
      %v3640 = vld [vmem:[#allocation2 + $0x2c0] sm:$0xf]
      %v3641 = vld [vmem:[#allocation2 + $0x2c8] sm:$0xf]
      %v3642 = vld [vmem:[#allocation2 + $0x2d0] sm:$0xff]
      %v3643 = vld [vmem:[#allocation2 + $0x2d8] sm:$0xff]
      %v3644 = vld [vmem:[#allocation2 + $0x2e0] sm:$0xff]
      %v3645 = vld [vmem:[#allocation2 + $0x2e8] sm:$0xff]
      %v3646 = vld [vmem:[#allocation2 + $0x2f0] sm:$0xff]
      %v3647 = vld [vmem:[#allocation2 + $0x2f8] sm:$0xff]
      %v3648 = vld [vmem:[#allocation2 + $0x300] sm:$0xff]
      %v3649 = vld [vmem:[#allocation2 + $0x308] sm:$0xff]
      %v3650 = vld [vmem:[#allocation2 + $0x310] sm:$0xff]
      %v3651 = vld [vmem:[#allocation2 + $0x318] sm:$0xff]
      %v3652 = vld [vmem:[#allocation2 + $0x320] sm:$0xff]
      %v3653 = vld [vmem:[#allocation2 + $0x328] sm:$0xff]
      %v3654 = vld [vmem:[#allocation2 + $0x330] sm:$0xff]
      %v3655 = vld [vmem:[#allocation2 + $0x338] sm:$0xff]
      %v3656 = vld [vmem:[#allocation2 + $0x340] sm:$0xff]
      %v3657 = vld [vmem:[#allocation2 + $0x348] sm:$0xff]
      %v3658 = vld [vmem:[#allocation2 + $0x350] sm:$0xff]
      %v3659 = vld [vmem:[#allocation2 + $0x358] sm:$0xff]
      %v3660 = vld [vmem:[#allocation2 + $0x360] sm:$0xff]
      %v3661 = vld [vmem:[#allocation2 + $0x368] sm:$0xff]
      %v3662 = vld [vmem:[#allocation2 + $0x370] sm:$0xff]
      %v3663 = vld [vmem:[#allocation2 + $0x378] sm:$0xff]
      %v3664 = vld [vmem:[#allocation2 + $0x380] sm:$0xff]
      %v3665 = vld [vmem:[#allocation2 + $0x388] sm:$0xff]
      %v3666 = vld [vmem:[#allocation2 + $0x390] sm:$0xff]
      %v3667 = vld [vmem:[#allocation2 + $0x398] sm:$0xff]
      %v3668 = vld [vmem:[#allocation2 + $0x3a0] sm:$0xff]
      %v3669 = vld [vmem:[#allocation2 + $0x3a8] sm:$0xff]
      %v3670 = vld [vmem:[#allocation2 + $0x3b0] sm:$0xf]
      %v3671 = vld [vmem:[#allocation2 + $0x3b8] sm:$0xf]
      %v3672 = vsel %vm3430, %v3553, 0.0
      %v3673 = vadd.f32 %v3552, %v3672
      %3674 = vadd.xlane.f32.xlu0 %v3673
      %v3675 = vpop.xlane.xlu0 %3674
      %v3676 = vsel %vm3430, %v3555, 0.0
      %v3677 = vadd.f32 %v3554, %v3676
      %3678 = vadd.xlane.f32.xlu0 %v3677
      %v3679 = vpop.xlane.xlu0 %3678
      %v3680 = vsel %vm3430, %v3557, 0.0
      %v3681 = vadd.f32 %v3556, %v3680
      %3682 = vadd.xlane.f32.xlu0 %v3681
      %v3683 = vpop.xlane.xlu0 %3682
      %v3684 = vsel %vm3430, %v3559, 0.0
      %v3685 = vadd.f32 %v3558, %v3684
      %3686 = vadd.xlane.f32.xlu0 %v3685
      %v3687 = vpop.xlane.xlu0 %3686
      %v3688 = vsel %vm3430, %v3561, 0.0
      %v3689 = vadd.f32 %v3560, %v3688
      %3690 = vadd.xlane.f32.xlu0 %v3689
      %v3691 = vpop.xlane.xlu0 %3690
      %v3692 = vsel %vm3430, %v3563, 0.0
      %v3693 = vadd.f32 %v3562, %v3692
      %3694 = vadd.xlane.f32.xlu0 %v3693
      %v3695 = vpop.xlane.xlu0 %3694
      %v3696 = vsel %vm3430, %v3565, 0.0
      %v3697 = vadd.f32 %v3564, %v3696
      %3698 = vadd.xlane.f32.xlu0 %v3697
      %v3699 = vpop.xlane.xlu0 %3698
      %v3700 = vsel %vm3430, %v3567, 0.0
      %v3701 = vadd.f32 %v3566, %v3700
      %3702 = vadd.xlane.f32.xlu0 %v3701
      %v3703 = vpop.xlane.xlu0 %3702
      %v3704 = vsel %vm3430, %v3569, 0.0
      %v3705 = vadd.f32 %v3568, %v3704
      %3706 = vadd.xlane.f32.xlu0 %v3705
      %v3707 = vpop.xlane.xlu0 %3706
      %v3708 = vsel %vm3430, %v3571, 0.0
      %v3709 = vadd.f32 %v3570, %v3708
      %3710 = vadd.xlane.f32.xlu0 %v3709
      %v3711 = vpop.xlane.xlu0 %3710
      %v3712 = vsel %vm3430, %v3573, 0.0
      %v3713 = vadd.f32 %v3572, %v3712
      %3714 = vadd.xlane.f32.xlu0 %v3713
      %v3715 = vpop.xlane.xlu0 %3714
      %v3716 = vsel %vm3430, %v3575, 0.0
      %v3717 = vadd.f32 %v3574, %v3716
      %3718 = vadd.xlane.f32.xlu0 %v3717
      %v3719 = vpop.xlane.xlu0 %3718
      %v3720 = vsel %vm3430, %v3577, 0.0
      %v3721 = vadd.f32 %v3576, %v3720
      %3722 = vadd.xlane.f32.xlu0 %v3721
      %v3723 = vpop.xlane.xlu0 %3722
      %v3724 = vsel %vm3430, %v3579, 0.0
      %v3725 = vadd.f32 %v3578, %v3724
      %3726 = vadd.xlane.f32.xlu0 %v3725
      %v3727 = vpop.xlane.xlu0 %3726
      %vm3728 = vcmask 1043456
      %v3729 = vsel %vm3728, %v3580, 0.0
      %v3730 = vsel %vm3460, %v3581, 0.0
      %v3731 = vadd.f32 %v3729, %v3730
      %3732 = vadd.xlane.f32.xlu0 %v3731
      %v3733 = vpop.xlane.xlu0 %3732
      %v3734 = vsel %vm3430, %v3583, 0.0
      %v3735 = vadd.f32 %v3582, %v3734
      %3736 = vadd.xlane.f32.xlu0 %v3735
      %v3737 = vpop.xlane.xlu0 %3736
      %v3738 = vsel %vm3430, %v3585, 0.0
      %v3739 = vadd.f32 %v3584, %v3738
      %3740 = vadd.xlane.f32.xlu0 %v3739
      %v3741 = vpop.xlane.xlu0 %3740
      %v3742 = vsel %vm3430, %v3587, 0.0
      %v3743 = vadd.f32 %v3586, %v3742
      %3744 = vadd.xlane.f32.xlu0 %v3743
      %v3745 = vpop.xlane.xlu0 %3744
      %v3746 = vsel %vm3430, %v3589, 0.0
      %v3747 = vadd.f32 %v3588, %v3746
      %3748 = vadd.xlane.f32.xlu0 %v3747
      %v3749 = vpop.xlane.xlu0 %3748
      %v3750 = vsel %vm3430, %v3591, 0.0
      %v3751 = vadd.f32 %v3590, %v3750
      %3752 = vadd.xlane.f32.xlu0 %v3751
      %v3753 = vpop.xlane.xlu0 %3752
      %v3754 = vsel %vm3430, %v3593, 0.0
      %v3755 = vadd.f32 %v3592, %v3754
      %3756 = vadd.xlane.f32.xlu0 %v3755
      %v3757 = vpop.xlane.xlu0 %3756
      %v3758 = vsel %vm3430, %v3595, 0.0
      %v3759 = vadd.f32 %v3594, %v3758
      %3760 = vadd.xlane.f32.xlu0 %v3759
      %v3761 = vpop.xlane.xlu0 %3760
      %v3762 = vsel %vm3430, %v3597, 0.0
      %v3763 = vadd.f32 %v3596, %v3762
      %3764 = vadd.xlane.f32.xlu0 %v3763
      %v3765 = vpop.xlane.xlu0 %3764
      %v3766 = vsel %vm3430, %v3599, 0.0
      %v3767 = vadd.f32 %v3598, %v3766
      %3768 = vadd.xlane.f32.xlu0 %v3767
      %v3769 = vpop.xlane.xlu0 %3768
      %v3770 = vsel %vm3430, %v3601, 0.0
      %v3771 = vadd.f32 %v3600, %v3770
      %3772 = vadd.xlane.f32.xlu0 %v3771
      %v3773 = vpop.xlane.xlu0 %3772
      %v3774 = vsel %vm3430, %v3603, 0.0
      %v3775 = vadd.f32 %v3602, %v3774
      %3776 = vadd.xlane.f32.xlu0 %v3775
      %v3777 = vpop.xlane.xlu0 %3776
      %v3778 = vsel %vm3430, %v3605, 0.0
      %v3779 = vadd.f32 %v3604, %v3778
      %3780 = vadd.xlane.f32.xlu0 %v3779
      %v3781 = vpop.xlane.xlu0 %3780
      %v3782 = vsel %vm3430, %v3607, 0.0
      %v3783 = vadd.f32 %v3606, %v3782
      %3784 = vadd.xlane.f32.xlu0 %v3783
      %v3785 = vpop.xlane.xlu0 %3784
      %v3786 = vsel %vm3430, %v3609, 0.0
      %v3787 = vadd.f32 %v3608, %v3786
      %3788 = vadd.xlane.f32.xlu0 %v3787
      %v3789 = vpop.xlane.xlu0 %3788
      %v3790 = vsel %vm3728, %v3610, 0.0
      %v3791 = vsel %vm3460, %v3611, 0.0
      %v3792 = vadd.f32 %v3790, %v3791
      %3793 = vadd.xlane.f32.xlu0 %v3792
      %v3794 = vpop.xlane.xlu0 %3793
      %v3795 = vsel %vm3430, %v3613, 0.0
      %v3796 = vadd.f32 %v3612, %v3795
      %3797 = vadd.xlane.f32.xlu0 %v3796
      %v3798 = vpop.xlane.xlu0 %3797
      %v3799 = vsel %vm3430, %v3615, 0.0
      %v3800 = vadd.f32 %v3614, %v3799
      %3801 = vadd.xlane.f32.xlu0 %v3800
      %v3802 = vpop.xlane.xlu0 %3801
      %v3803 = vsel %vm3430, %v3617, 0.0
      %v3804 = vadd.f32 %v3616, %v3803
      %3805 = vadd.xlane.f32.xlu0 %v3804
      %v3806 = vpop.xlane.xlu0 %3805
      %v3807 = vsel %vm3430, %v3619, 0.0
      %v3808 = vadd.f32 %v3618, %v3807
      %3809 = vadd.xlane.f32.xlu0 %v3808
      %v3810 = vpop.xlane.xlu0 %3809
      %v3811 = vsel %vm3430, %v3621, 0.0
      %v3812 = vadd.f32 %v3620, %v3811
      %3813 = vadd.xlane.f32.xlu0 %v3812
      %v3814 = vpop.xlane.xlu0 %3813
      %v3815 = vsel %vm3430, %v3623, 0.0
      %v3816 = vadd.f32 %v3622, %v3815
      %3817 = vadd.xlane.f32.xlu0 %v3816
      %v3818 = vpop.xlane.xlu0 %3817
      %v3819 = vsel %vm3430, %v3625, 0.0
      %v3820 = vadd.f32 %v3624, %v3819
      %3821 = vadd.xlane.f32.xlu0 %v3820
      %v3822 = vpop.xlane.xlu0 %3821
      %v3823 = vsel %vm3430, %v3627, 0.0
      %v3824 = vadd.f32 %v3626, %v3823
      %3825 = vadd.xlane.f32.xlu0 %v3824
      %v3826 = vpop.xlane.xlu0 %3825
      %v3827 = vsel %vm3430, %v3629, 0.0
      %v3828 = vadd.f32 %v3628, %v3827
      %3829 = vadd.xlane.f32.xlu0 %v3828
      %v3830 = vpop.xlane.xlu0 %3829
      %v3831 = vsel %vm3430, %v3631, 0.0
      %v3832 = vadd.f32 %v3630, %v3831
      %3833 = vadd.xlane.f32.xlu0 %v3832
      %v3834 = vpop.xlane.xlu0 %3833
      %v3835 = vsel %vm3430, %v3633, 0.0
      %v3836 = vadd.f32 %v3632, %v3835
      %3837 = vadd.xlane.f32.xlu0 %v3836
      %v3838 = vpop.xlane.xlu0 %3837
      %v3839 = vsel %vm3430, %v3635, 0.0
      %v3840 = vadd.f32 %v3634, %v3839
      %3841 = vadd.xlane.f32.xlu0 %v3840
      %v3842 = vpop.xlane.xlu0 %3841
      %v3843 = vsel %vm3430, %v3637, 0.0
      %v3844 = vadd.f32 %v3636, %v3843
      %3845 = vadd.xlane.f32.xlu0 %v3844
      %v3846 = vpop.xlane.xlu0 %3845
      %v3847 = vsel %vm3430, %v3639, 0.0
      %v3848 = vadd.f32 %v3638, %v3847
      %3849 = vadd.xlane.f32.xlu0 %v3848
      %v3850 = vpop.xlane.xlu0 %3849
      %v3851 = vsel %vm3728, %v3640, 0.0
      %v3852 = vsel %vm3460, %v3641, 0.0
      %v3853 = vadd.f32 %v3851, %v3852
      %3854 = vadd.xlane.f32.xlu0 %v3853
      %v3855 = vpop.xlane.xlu0 %3854
      %v3856 = vsel %vm3430, %v3643, 0.0
      %v3857 = vadd.f32 %v3642, %v3856
      %3858 = vadd.xlane.f32.xlu0 %v3857
      %v3859 = vpop.xlane.xlu0 %3858
      %v3860 = vsel %vm3430, %v3645, 0.0
      %v3861 = vadd.f32 %v3644, %v3860
      %3862 = vadd.xlane.f32.xlu0 %v3861
      %v3863 = vpop.xlane.xlu0 %3862
      %v3864 = vsel %vm3430, %v3647, 0.0
      %v3865 = vadd.f32 %v3646, %v3864
      %3866 = vadd.xlane.f32.xlu0 %v3865
      %v3867 = vpop.xlane.xlu0 %3866
      %v3868 = vsel %vm3430, %v3649, 0.0
      %v3869 = vadd.f32 %v3648, %v3868
      %3870 = vadd.xlane.f32.xlu0 %v3869
      %v3871 = vpop.xlane.xlu0 %3870
      %v3872 = vsel %vm3430, %v3651, 0.0
      %v3873 = vadd.f32 %v3650, %v3872
      %3874 = vadd.xlane.f32.xlu0 %v3873
      %v3875 = vpop.xlane.xlu0 %3874
      %v3876 = vsel %vm3430, %v3653, 0.0
      %v3877 = vadd.f32 %v3652, %v3876
      %3878 = vadd.xlane.f32.xlu0 %v3877
      %v3879 = vpop.xlane.xlu0 %3878
      %v3880 = vsel %vm3430, %v3655, 0.0
      %v3881 = vadd.f32 %v3654, %v3880
      %3882 = vadd.xlane.f32.xlu0 %v3881
      %v3883 = vpop.xlane.xlu0 %3882
      %v3884 = vsel %vm3430, %v3657, 0.0
      %v3885 = vadd.f32 %v3656, %v3884
      %3886 = vadd.xlane.f32.xlu0 %v3885
      %v3887 = vpop.xlane.xlu0 %3886
      %v3888 = vsel %vm3430, %v3659, 0.0
      %v3889 = vadd.f32 %v3658, %v3888
      %3890 = vadd.xlane.f32.xlu0 %v3889
      %v3891 = vpop.xlane.xlu0 %3890
      %v3892 = vsel %vm3430, %v3661, 0.0
      %v3893 = vadd.f32 %v3660, %v3892
      %3894 = vadd.xlane.f32.xlu0 %v3893
      %v3895 = vpop.xlane.xlu0 %3894
      %v3896 = vsel %vm3430, %v3663, 0.0
      %v3897 = vadd.f32 %v3662, %v3896
      %3898 = vadd.xlane.f32.xlu0 %v3897
      %v3899 = vpop.xlane.xlu0 %3898
      %v3900 = vsel %vm3430, %v3665, 0.0
      %v3901 = vadd.f32 %v3664, %v3900
      %3902 = vadd.xlane.f32.xlu0 %v3901
      %v3903 = vpop.xlane.xlu0 %3902
      %v3904 = vsel %vm3430, %v3667, 0.0
      %v3905 = vadd.f32 %v3666, %v3904
      %3906 = vadd.xlane.f32.xlu0 %v3905
      %v3907 = vpop.xlane.xlu0 %3906
      %v3908 = vsel %vm3430, %v3669, 0.0
      %v3909 = vadd.f32 %v3668, %v3908
      %3910 = vadd.xlane.f32.xlu0 %v3909
      %v3911 = vpop.xlane.xlu0 %3910
      %v3912 = vsel %vm3728, %v3670, 0.0
      %v3913 = vsel %vm3460, %v3671, 0.0
      %v3914 = vadd.f32 %v3912, %v3913
      %3915 = vadd.xlane.f32.xlu0 %v3914
      %v3916 = vpop.xlane.xlu0 %3915
      %v3917 = vadd.f32 %v3675, %v3679
      %v3918 = vadd.f32 %v3917, %v3683
      %v3919 = vadd.f32 %v3918, %v3687
      %v3920 = vadd.f32 %v3919, %v3691
      %v3921 = vadd.f32 %v3920, %v3695
      %v3922 = vadd.f32 %v3921, %v3699
      %v3923 = vadd.f32 %v3922, %v3703
      %v3924 = vadd.f32 %v3923, %v3707
      %v3925 = vadd.f32 %v3924, %v3711
      %v3926 = vadd.f32 %v3925, %v3715
      %v3927 = vadd.f32 %v3926, %v3719
      %v3928 = vadd.f32 %v3927, %v3723
      %v3929 = vadd.f32 %v3928, %v3727
      %v3930 = vsel %vm3728, %v3733, 0.0
      %v3931 = vadd.f32 %v3929, %v3930
      %v3932 = vrot.slane %v3931, 4
      %v3933 = vadd.f32 %v3931, %v3932
      %v3934 = vrot.slane %v3933, 2
      %v3935 = vadd.f32 %v3933, %v3934
      %v3936 = vrot.slane %v3935, 1
      %v3937 = vadd.f32 %v3935, %v3936
      %v3938 = vadd.f32 %v3737, %v3741
      %v3939 = vadd.f32 %v3938, %v3745
      %v3940 = vadd.f32 %v3939, %v3749
      %v3941 = vadd.f32 %v3940, %v3753
      %v3942 = vadd.f32 %v3941, %v3757
      %v3943 = vadd.f32 %v3942, %v3761
      %v3944 = vadd.f32 %v3943, %v3765
      %v3945 = vadd.f32 %v3944, %v3769
      %v3946 = vadd.f32 %v3945, %v3773
      %v3947 = vadd.f32 %v3946, %v3777
      %v3948 = vadd.f32 %v3947, %v3781
      %v3949 = vadd.f32 %v3948, %v3785
      %v3950 = vadd.f32 %v3949, %v3789
      %v3951 = vsel %vm3728, %v3794, 0.0
      %v3952 = vadd.f32 %v3950, %v3951
      %v3953 = vrot.slane %v3952, 4
      %v3954 = vadd.f32 %v3952, %v3953
      %v3955 = vrot.slane %v3954, 2
      %v3956 = vadd.f32 %v3954, %v3955
      %v3957 = vrot.slane %v3956, 1
      %v3958 = vadd.f32 %v3956, %v3957
      %v3959 = vadd.f32 %v3798, %v3802
      %v3960 = vadd.f32 %v3959, %v3806
      %v3961 = vadd.f32 %v3960, %v3810
      %v3962 = vadd.f32 %v3961, %v3814
      %v3963 = vadd.f32 %v3962, %v3818
      %v3964 = vadd.f32 %v3963, %v3822
      %v3965 = vadd.f32 %v3964, %v3826
      %v3966 = vadd.f32 %v3965, %v3830
      %v3967 = vadd.f32 %v3966, %v3834
      %v3968 = vadd.f32 %v3967, %v3838
      %v3969 = vadd.f32 %v3968, %v3842
      %v3970 = vadd.f32 %v3969, %v3846
      %v3971 = vadd.f32 %v3970, %v3850
      %v3972 = vsel %vm3728, %v3855, 0.0
      %v3973 = vadd.f32 %v3971, %v3972
      %v3974 = vrot.slane %v3973, 4
      %v3975 = vadd.f32 %v3973, %v3974
      %v3976 = vrot.slane %v3975, 2
      %v3977 = vadd.f32 %v3975, %v3976
      %v3978 = vrot.slane %v3977, 1
      %v3979 = vadd.f32 %v3977, %v3978
      %v3980 = vadd.f32 %v3859, %v3863
      %v3981 = vadd.f32 %v3980, %v3867
      %v3982 = vadd.f32 %v3981, %v3871
      %v3983 = vadd.f32 %v3982, %v3875
      %v3984 = vadd.f32 %v3983, %v3879
      %v3985 = vadd.f32 %v3984, %v3883
      %v3986 = vadd.f32 %v3985, %v3887
      %v3987 = vadd.f32 %v3986, %v3891
      %v3988 = vadd.f32 %v3987, %v3895
      %v3989 = vadd.f32 %v3988, %v3899
      %v3990 = vadd.f32 %v3989, %v3903
      %v3991 = vadd.f32 %v3990, %v3907
      %v3992 = vadd.f32 %v3991, %v3911
      %v3993 = vsel %vm3728, %v3916, 0.0
      %v3994 = vadd.f32 %v3992, %v3993
      %v3995 = vrot.slane %v3994, 4
      %v3996 = vadd.f32 %v3994, %v3995
      %v3997 = vrot.slane %v3996, 2
      %v3998 = vadd.f32 %v3996, %v3997
      %v3999 = vrot.slane %v3998, 1
      %v4000 = vadd.f32 %v3998, %v3999
      %v4001 = vrcp.pop 20648.0
      %v4002 = vmul.f32 %v3937, %v4001
      %v4003 = vmul.f32 %v3958, %v4001
      %v4004 = vmul.f32 %v3979, %v4001
      %v4005 = vmul.f32 %v4000, %v4001
      %v4006 = vsub.f32 %v3552, %v4002
      %v4007 = vsub.f32 %v3553, %v4002
      %v4008 = vsub.f32 %v3554, %v4002
      %v4009 = vsub.f32 %v3555, %v4002
      %v4010 = vsub.f32 %v3556, %v4002
      %v4011 = vsub.f32 %v3557, %v4002
      %v4012 = vsub.f32 %v3558, %v4002
      %v4013 = vsub.f32 %v3559, %v4002
      %v4014 = vsub.f32 %v3560, %v4002
      %v4015 = vsub.f32 %v3561, %v4002
      %v4016 = vsub.f32 %v3562, %v4002
      %v4017 = vsub.f32 %v3563, %v4002
      %v4018 = vsub.f32 %v3564, %v4002
      %v4019 = vsub.f32 %v3565, %v4002
      %v4020 = vsub.f32 %v3566, %v4002
      %v4021 = vsub.f32 %v3567, %v4002
      %v4022 = vsub.f32 %v3568, %v4002
      %v4023 = vsub.f32 %v3569, %v4002
      %v4024 = vsub.f32 %v3570, %v4002
      %v4025 = vsub.f32 %v3571, %v4002
      %v4026 = vsub.f32 %v3572, %v4002
      %v4027 = vsub.f32 %v3573, %v4002
      %v4028 = vsub.f32 %v3574, %v4002
      %v4029 = vsub.f32 %v3575, %v4002
      %v4030 = vsub.f32 %v3576, %v4002
      %v4031 = vsub.f32 %v3577, %v4002
      %v4032 = vsub.f32 %v3578, %v4002
      %v4033 = vsub.f32 %v3579, %v4002
      %v4034 = vsub.f32 %v3580, %v4002
      %v4035 = vsub.f32 %v3581, %v4002
      %v4036 = vsub.f32 %v3582, %v4003
      %v4037 = vsub.f32 %v3583, %v4003
      %v4038 = vsub.f32 %v3584, %v4003
      %v4039 = vsub.f32 %v3585, %v4003
      %v4040 = vsub.f32 %v3586, %v4003
      %v4041 = vsub.f32 %v3587, %v4003
      %v4042 = vsub.f32 %v3588, %v4003
      %v4043 = vsub.f32 %v3589, %v4003
      %v4044 = vsub.f32 %v3590, %v4003
      %v4045 = vsub.f32 %v3591, %v4003
      %v4046 = vsub.f32 %v3592, %v4003
      %v4047 = vsub.f32 %v3593, %v4003
      %v4048 = vsub.f32 %v3594, %v4003
      %v4049 = vsub.f32 %v3595, %v4003
      %v4050 = vsub.f32 %v3596, %v4003
      %v4051 = vsub.f32 %v3597, %v4003
      %v4052 = vsub.f32 %v3598, %v4003
      %v4053 = vsub.f32 %v3599, %v4003
      %v4054 = vsub.f32 %v3600, %v4003
      %v4055 = vsub.f32 %v3601, %v4003
      %v4056 = vsub.f32 %v3602, %v4003
      %v4057 = vsub.f32 %v3603, %v4003
      %v4058 = vsub.f32 %v3604, %v4003
      %v4059 = vsub.f32 %v3605, %v4003
      %v4060 = vsub.f32 %v3606, %v4003
      %v4061 = vsub.f32 %v3607, %v4003
      %v4062 = vsub.f32 %v3608, %v4003
      %v4063 = vsub.f32 %v3609, %v4003
      %v4064 = vsub.f32 %v3610, %v4003
      %v4065 = vsub.f32 %v3611, %v4003
      %v4066 = vsub.f32 %v3612, %v4004
      %v4067 = vsub.f32 %v3613, %v4004
      %v4068 = vsub.f32 %v3614, %v4004
      %v4069 = vsub.f32 %v3615, %v4004
      %v4070 = vsub.f32 %v3616, %v4004
      %v4071 = vsub.f32 %v3617, %v4004
      %v4072 = vsub.f32 %v3618, %v4004
      %v4073 = vsub.f32 %v3619, %v4004
      %v4074 = vsub.f32 %v3620, %v4004
      %v4075 = vsub.f32 %v3621, %v4004
      %v4076 = vsub.f32 %v3622, %v4004
      %v4077 = vsub.f32 %v3623, %v4004
      %v4078 = vsub.f32 %v3624, %v4004
      %v4079 = vsub.f32 %v3625, %v4004
      %v4080 = vsub.f32 %v3626, %v4004
      %v4081 = vsub.f32 %v3627, %v4004
      %v4082 = vsub.f32 %v3628, %v4004
      %v4083 = vsub.f32 %v3629, %v4004
      %v4084 = vsub.f32 %v3630, %v4004
      %v4085 = vsub.f32 %v3631, %v4004
      %v4086 = vsub.f32 %v3632, %v4004
      %v4087 = vsub.f32 %v3633, %v4004
      %v4088 = vsub.f32 %v3634, %v4004
      %v4089 = vsub.f32 %v3635, %v4004
      %v4090 = vsub.f32 %v3636, %v4004
      %v4091 = vsub.f32 %v3637, %v4004
      %v4092 = vsub.f32 %v3638, %v4004
      %v4093 = vsub.f32 %v3639, %v4004
      %v4094 = vsub.f32 %v3640, %v4004
      %v4095 = vsub.f32 %v3641, %v4004
      %v4096 = vsub.f32 %v3642, %v4005
      %v4097 = vsub.f32 %v3643, %v4005
      %v4098 = vsub.f32 %v3644, %v4005
      %v4099 = vsub.f32 %v3645, %v4005
      %v4100 = vsub.f32 %v3646, %v4005
      %v4101 = vsub.f32 %v3647, %v4005
      %v4102 = vsub.f32 %v3648, %v4005
      %v4103 = vsub.f32 %v3649, %v4005
      %v4104 = vsub.f32 %v3650, %v4005
      %v4105 = vsub.f32 %v3651, %v4005
      %v4106 = vsub.f32 %v3652, %v4005
      %v4107 = vsub.f32 %v3653, %v4005
      %v4108 = vsub.f32 %v3654, %v4005
      %v4109 = vsub.f32 %v3655, %v4005
      %v4110 = vsub.f32 %v3656, %v4005
      %v4111 = vsub.f32 %v3657, %v4005
      %v4112 = vsub.f32 %v3658, %v4005
      %v4113 = vsub.f32 %v3659, %v4005
      %v4114 = vsub.f32 %v3660, %v4005
      %v4115 = vsub.f32 %v3661, %v4005
      %v4116 = vsub.f32 %v3662, %v4005
      %v4117 = vsub.f32 %v3663, %v4005
      %v4118 = vsub.f32 %v3664, %v4005
      %v4119 = vsub.f32 %v3665, %v4005
      %v4120 = vsub.f32 %v3666, %v4005
      %v4121 = vsub.f32 %v3667, %v4005
      %v4122 = vsub.f32 %v3668, %v4005
      %v4123 = vsub.f32 %v3669, %v4005
      %v4124 = vsub.f32 %v3670, %v4005
      %v4125 = vsub.f32 %v3671, %v4005
      %v4126 = vmul.f32 %v4006, %v4006
      %v4127 = vmul.f32 %v4007, %v4007
      %v4128 = vmul.f32 %v4008, %v4008
      %v4129 = vmul.f32 %v4009, %v4009
      %v4130 = vmul.f32 %v4010, %v4010
      %v4131 = vmul.f32 %v4011, %v4011
      %v4132 = vmul.f32 %v4012, %v4012
      %v4133 = vmul.f32 %v4013, %v4013
      %v4134 = vmul.f32 %v4014, %v4014
      %v4135 = vmul.f32 %v4015, %v4015
      %v4136 = vmul.f32 %v4016, %v4016
      %v4137 = vmul.f32 %v4017, %v4017
      %v4138 = vmul.f32 %v4018, %v4018
      %v4139 = vmul.f32 %v4019, %v4019
      %v4140 = vmul.f32 %v4020, %v4020
      %v4141 = vmul.f32 %v4021, %v4021
      %v4142 = vmul.f32 %v4022, %v4022
      %v4143 = vmul.f32 %v4023, %v4023
      %v4144 = vmul.f32 %v4024, %v4024
      %v4145 = vmul.f32 %v4025, %v4025
      %v4146 = vmul.f32 %v4026, %v4026
      %v4147 = vmul.f32 %v4027, %v4027
      %v4148 = vmul.f32 %v4028, %v4028
      %v4149 = vmul.f32 %v4029, %v4029
      %v4150 = vmul.f32 %v4030, %v4030
      %v4151 = vmul.f32 %v4031, %v4031
      %v4152 = vmul.f32 %v4032, %v4032
      %v4153 = vmul.f32 %v4033, %v4033
      %v4154 = vmul.f32 %v4034, %v4034
      %v4155 = vmul.f32 %v4035, %v4035
      %v4156 = vmul.f32 %v4036, %v4036
      %v4157 = vmul.f32 %v4037, %v4037
      %v4158 = vmul.f32 %v4038, %v4038
      %v4159 = vmul.f32 %v4039, %v4039
      %v4160 = vmul.f32 %v4040, %v4040
      %v4161 = vmul.f32 %v4041, %v4041
      %v4162 = vmul.f32 %v4042, %v4042
      %v4163 = vmul.f32 %v4043, %v4043
      %v4164 = vmul.f32 %v4044, %v4044
      %v4165 = vmul.f32 %v4045, %v4045
      %v4166 = vmul.f32 %v4046, %v4046
      %v4167 = vmul.f32 %v4047, %v4047
      %v4168 = vmul.f32 %v4048, %v4048
      %v4169 = vmul.f32 %v4049, %v4049
      %v4170 = vmul.f32 %v4050, %v4050
      %v4171 = vmul.f32 %v4051, %v4051
      %v4172 = vmul.f32 %v4052, %v4052
      %v4173 = vmul.f32 %v4053, %v4053
      %v4174 = vmul.f32 %v4054, %v4054
      %v4175 = vmul.f32 %v4055, %v4055
      %v4176 = vmul.f32 %v4056, %v4056
      %v4177 = vmul.f32 %v4057, %v4057
      %v4178 = vmul.f32 %v4058, %v4058
      %v4179 = vmul.f32 %v4059, %v4059
      %v4180 = vmul.f32 %v4060, %v4060
      %v4181 = vmul.f32 %v4061, %v4061
      %v4182 = vmul.f32 %v4062, %v4062
      %v4183 = vmul.f32 %v4063, %v4063
      %v4184 = vmul.f32 %v4064, %v4064
      %v4185 = vmul.f32 %v4065, %v4065
      %v4186 = vmul.f32 %v4066, %v4066
      %v4187 = vmul.f32 %v4067, %v4067
      %v4188 = vmul.f32 %v4068, %v4068
      %v4189 = vmul.f32 %v4069, %v4069
      %v4190 = vmul.f32 %v4070, %v4070
      %v4191 = vmul.f32 %v4071, %v4071
      %v4192 = vmul.f32 %v4072, %v4072
      %v4193 = vmul.f32 %v4073, %v4073
      %v4194 = vmul.f32 %v4074, %v4074
      %v4195 = vmul.f32 %v4075, %v4075
      %v4196 = vmul.f32 %v4076, %v4076
      %v4197 = vmul.f32 %v4077, %v4077
      %v4198 = vmul.f32 %v4078, %v4078
      %v4199 = vmul.f32 %v4079, %v4079
      %v4200 = vmul.f32 %v4080, %v4080
      %v4201 = vmul.f32 %v4081, %v4081
      %v4202 = vmul.f32 %v4082, %v4082
      %v4203 = vmul.f32 %v4083, %v4083
      %v4204 = vmul.f32 %v4084, %v4084
      %v4205 = vmul.f32 %v4085, %v4085
      %v4206 = vmul.f32 %v4086, %v4086
      %v4207 = vmul.f32 %v4087, %v4087
      %v4208 = vmul.f32 %v4088, %v4088
      %v4209 = vmul.f32 %v4089, %v4089
      %v4210 = vmul.f32 %v4090, %v4090
      %v4211 = vmul.f32 %v4091, %v4091
      %v4212 = vmul.f32 %v4092, %v4092
      %v4213 = vmul.f32 %v4093, %v4093
      %v4214 = vmul.f32 %v4094, %v4094
      %v4215 = vmul.f32 %v4095, %v4095
      %v4216 = vmul.f32 %v4096, %v4096
      %v4217 = vmul.f32 %v4097, %v4097
      %v4218 = vmul.f32 %v4098, %v4098
      %v4219 = vmul.f32 %v4099, %v4099
      %v4220 = vmul.f32 %v4100, %v4100
      %v4221 = vmul.f32 %v4101, %v4101
      %v4222 = vmul.f32 %v4102, %v4102
      %v4223 = vmul.f32 %v4103, %v4103
      %v4224 = vmul.f32 %v4104, %v4104
      %v4225 = vmul.f32 %v4105, %v4105
      %v4226 = vmul.f32 %v4106, %v4106
      %v4227 = vmul.f32 %v4107, %v4107
      %v4228 = vmul.f32 %v4108, %v4108
      %v4229 = vmul.f32 %v4109, %v4109
      %v4230 = vmul.f32 %v4110, %v4110
      %v4231 = vmul.f32 %v4111, %v4111
      %v4232 = vmul.f32 %v4112, %v4112
      %v4233 = vmul.f32 %v4113, %v4113
      %v4234 = vmul.f32 %v4114, %v4114
      %v4235 = vmul.f32 %v4115, %v4115
      %v4236 = vmul.f32 %v4116, %v4116
      %v4237 = vmul.f32 %v4117, %v4117
      %v4238 = vmul.f32 %v4118, %v4118
      %v4239 = vmul.f32 %v4119, %v4119
      %v4240 = vmul.f32 %v4120, %v4120
      %v4241 = vmul.f32 %v4121, %v4121
      %v4242 = vmul.f32 %v4122, %v4122
      %v4243 = vmul.f32 %v4123, %v4123
      %v4244 = vmul.f32 %v4124, %v4124
      %v4245 = vmul.f32 %v4125, %v4125
      %v4246 = vsel %vm3430, %v4127, 0.0
      %v4247 = vadd.f32 %v4126, %v4246
      %4248 = vadd.xlane.f32.xlu0 %v4247
      %v4249 = vpop.xlane.xlu0 %4248
      %v4250 = vsel %vm3430, %v4129, 0.0
      %v4251 = vadd.f32 %v4128, %v4250
      %4252 = vadd.xlane.f32.xlu0 %v4251
      %v4253 = vpop.xlane.xlu0 %4252
      %v4254 = vsel %vm3430, %v4131, 0.0
      %v4255 = vadd.f32 %v4130, %v4254
      %4256 = vadd.xlane.f32.xlu0 %v4255
      %v4257 = vpop.xlane.xlu0 %4256
      %v4258 = vsel %vm3430, %v4133, 0.0
      %v4259 = vadd.f32 %v4132, %v4258
      %4260 = vadd.xlane.f32.xlu0 %v4259
      %v4261 = vpop.xlane.xlu0 %4260
      %v4262 = vsel %vm3430, %v4135, 0.0
      %v4263 = vadd.f32 %v4134, %v4262
      %4264 = vadd.xlane.f32.xlu0 %v4263
      %v4265 = vpop.xlane.xlu0 %4264
      %v4266 = vsel %vm3430, %v4137, 0.0
      %v4267 = vadd.f32 %v4136, %v4266
      %4268 = vadd.xlane.f32.xlu0 %v4267
      %v4269 = vpop.xlane.xlu0 %4268
      %v4270 = vsel %vm3430, %v4139, 0.0
      %v4271 = vadd.f32 %v4138, %v4270
      %4272 = vadd.xlane.f32.xlu0 %v4271
      %v4273 = vpop.xlane.xlu0 %4272
      %v4274 = vsel %vm3430, %v4141, 0.0
      %v4275 = vadd.f32 %v4140, %v4274
      %4276 = vadd.xlane.f32.xlu0 %v4275
      %v4277 = vpop.xlane.xlu0 %4276
      %v4278 = vsel %vm3430, %v4143, 0.0
      %v4279 = vadd.f32 %v4142, %v4278
      %4280 = vadd.xlane.f32.xlu0 %v4279
      %v4281 = vpop.xlane.xlu0 %4280
      %v4282 = vsel %vm3430, %v4145, 0.0
      %v4283 = vadd.f32 %v4144, %v4282
      %4284 = vadd.xlane.f32.xlu0 %v4283
      %v4285 = vpop.xlane.xlu0 %4284
      %v4286 = vsel %vm3430, %v4147, 0.0
      %v4287 = vadd.f32 %v4146, %v4286
      %4288 = vadd.xlane.f32.xlu0 %v4287
      %v4289 = vpop.xlane.xlu0 %4288
      %v4290 = vsel %vm3430, %v4149, 0.0
      %v4291 = vadd.f32 %v4148, %v4290
      %4292 = vadd.xlane.f32.xlu0 %v4291
      %v4293 = vpop.xlane.xlu0 %4292
      %v4294 = vsel %vm3430, %v4151, 0.0
      %v4295 = vadd.f32 %v4150, %v4294
      %4296 = vadd.xlane.f32.xlu0 %v4295
      %v4297 = vpop.xlane.xlu0 %4296
      %v4298 = vsel %vm3430, %v4153, 0.0
      %v4299 = vadd.f32 %v4152, %v4298
      %4300 = vadd.xlane.f32.xlu0 %v4299
      %v4301 = vpop.xlane.xlu0 %4300
      %v4302 = vsel %vm3728, %v4154, 0.0
      %v4303 = vsel %vm3460, %v4155, 0.0
      %v4304 = vadd.f32 %v4302, %v4303
      %4305 = vadd.xlane.f32.xlu0 %v4304
      %v4306 = vpop.xlane.xlu0 %4305
      %v4307 = vsel %vm3430, %v4157, 0.0
      %v4308 = vadd.f32 %v4156, %v4307
      %4309 = vadd.xlane.f32.xlu0 %v4308
      %v4310 = vpop.xlane.xlu0 %4309
      %v4311 = vsel %vm3430, %v4159, 0.0
      %v4312 = vadd.f32 %v4158, %v4311
      %4313 = vadd.xlane.f32.xlu0 %v4312
      %v4314 = vpop.xlane.xlu0 %4313
      %v4315 = vsel %vm3430, %v4161, 0.0
      %v4316 = vadd.f32 %v4160, %v4315
      %4317 = vadd.xlane.f32.xlu0 %v4316
      %v4318 = vpop.xlane.xlu0 %4317
      %v4319 = vsel %vm3430, %v4163, 0.0
      %v4320 = vadd.f32 %v4162, %v4319
      %4321 = vadd.xlane.f32.xlu0 %v4320
      %v4322 = vpop.xlane.xlu0 %4321
      %v4323 = vsel %vm3430, %v4165, 0.0
      %v4324 = vadd.f32 %v4164, %v4323
      %4325 = vadd.xlane.f32.xlu0 %v4324
      %v4326 = vpop.xlane.xlu0 %4325
      %v4327 = vsel %vm3430, %v4167, 0.0
      %v4328 = vadd.f32 %v4166, %v4327
      %4329 = vadd.xlane.f32.xlu0 %v4328
      %v4330 = vpop.xlane.xlu0 %4329
      %v4331 = vsel %vm3430, %v4169, 0.0
      %v4332 = vadd.f32 %v4168, %v4331
      %4333 = vadd.xlane.f32.xlu0 %v4332
      %v4334 = vpop.xlane.xlu0 %4333
      %v4335 = vsel %vm3430, %v4171, 0.0
      %v4336 = vadd.f32 %v4170, %v4335
      %4337 = vadd.xlane.f32.xlu0 %v4336
      %v4338 = vpop.xlane.xlu0 %4337
      %v4339 = vsel %vm3430, %v4173, 0.0
      %v4340 = vadd.f32 %v4172, %v4339
      %4341 = vadd.xlane.f32.xlu0 %v4340
      %v4342 = vpop.xlane.xlu0 %4341
      %v4343 = vsel %vm3430, %v4175, 0.0
      %v4344 = vadd.f32 %v4174, %v4343
      %4345 = vadd.xlane.f32.xlu0 %v4344
      %v4346 = vpop.xlane.xlu0 %4345
      %v4347 = vsel %vm3430, %v4177, 0.0
      %v4348 = vadd.f32 %v4176, %v4347
      %4349 = vadd.xlane.f32.xlu0 %v4348
      %v4350 = vpop.xlane.xlu0 %4349
      %v4351 = vsel %vm3430, %v4179, 0.0
      %v4352 = vadd.f32 %v4178, %v4351
      %4353 = vadd.xlane.f32.xlu0 %v4352
      %v4354 = vpop.xlane.xlu0 %4353
      %v4355 = vsel %vm3430, %v4181, 0.0
      %v4356 = vadd.f32 %v4180, %v4355
      %4357 = vadd.xlane.f32.xlu0 %v4356
      %v4358 = vpop.xlane.xlu0 %4357
      %v4359 = vsel %vm3430, %v4183, 0.0
      %v4360 = vadd.f32 %v4182, %v4359
      %4361 = vadd.xlane.f32.xlu0 %v4360
      %v4362 = vpop.xlane.xlu0 %4361
      %v4363 = vsel %vm3728, %v4184, 0.0
      %v4364 = vsel %vm3460, %v4185, 0.0
      %v4365 = vadd.f32 %v4363, %v4364
      %4366 = vadd.xlane.f32.xlu0 %v4365
      %v4367 = vpop.xlane.xlu0 %4366
      %v4368 = vsel %vm3430, %v4187, 0.0
      %v4369 = vadd.f32 %v4186, %v4368
      %4370 = vadd.xlane.f32.xlu0 %v4369
      %v4371 = vpop.xlane.xlu0 %4370
      %v4372 = vsel %vm3430, %v4189, 0.0
      %v4373 = vadd.f32 %v4188, %v4372
      %4374 = vadd.xlane.f32.xlu0 %v4373
      %v4375 = vpop.xlane.xlu0 %4374
      %v4376 = vsel %vm3430, %v4191, 0.0
      %v4377 = vadd.f32 %v4190, %v4376
      %4378 = vadd.xlane.f32.xlu0 %v4377
      %v4379 = vpop.xlane.xlu0 %4378
      %v4380 = vsel %vm3430, %v4193, 0.0
      %v4381 = vadd.f32 %v4192, %v4380
      %4382 = vadd.xlane.f32.xlu0 %v4381
      %v4383 = vpop.xlane.xlu0 %4382
      %v4384 = vsel %vm3430, %v4195, 0.0
      %v4385 = vadd.f32 %v4194, %v4384
      %4386 = vadd.xlane.f32.xlu0 %v4385
      %v4387 = vpop.xlane.xlu0 %4386
      %v4388 = vsel %vm3430, %v4197, 0.0
      %v4389 = vadd.f32 %v4196, %v4388
      %4390 = vadd.xlane.f32.xlu0 %v4389
      %v4391 = vpop.xlane.xlu0 %4390
      %v4392 = vsel %vm3430, %v4199, 0.0
      %v4393 = vadd.f32 %v4198, %v4392
      %4394 = vadd.xlane.f32.xlu0 %v4393
      %v4395 = vpop.xlane.xlu0 %4394
      %v4396 = vsel %vm3430, %v4201, 0.0
      %v4397 = vadd.f32 %v4200, %v4396
      %4398 = vadd.xlane.f32.xlu0 %v4397
      %v4399 = vpop.xlane.xlu0 %4398
      %v4400 = vsel %vm3430, %v4203, 0.0
      %v4401 = vadd.f32 %v4202, %v4400
      %4402 = vadd.xlane.f32.xlu0 %v4401
      %v4403 = vpop.xlane.xlu0 %4402
      %v4404 = vsel %vm3430, %v4205, 0.0
      %v4405 = vadd.f32 %v4204, %v4404
      %4406 = vadd.xlane.f32.xlu0 %v4405
      %v4407 = vpop.xlane.xlu0 %4406
      %v4408 = vsel %vm3430, %v4207, 0.0
      %v4409 = vadd.f32 %v4206, %v4408
      %4410 = vadd.xlane.f32.xlu0 %v4409
      %v4411 = vpop.xlane.xlu0 %4410
      %v4412 = vsel %vm3430, %v4209, 0.0
      %v4413 = vadd.f32 %v4208, %v4412
      %4414 = vadd.xlane.f32.xlu0 %v4413
      %v4415 = vpop.xlane.xlu0 %4414
      %v4416 = vsel %vm3430, %v4211, 0.0
      %v4417 = vadd.f32 %v4210, %v4416
      %4418 = vadd.xlane.f32.xlu0 %v4417
      %v4419 = vpop.xlane.xlu0 %4418
      %v4420 = vsel %vm3430, %v4213, 0.0
      %v4421 = vadd.f32 %v4212, %v4420
      %4422 = vadd.xlane.f32.xlu0 %v4421
      %v4423 = vpop.xlane.xlu0 %4422
      %v4424 = vsel %vm3728, %v4214, 0.0
      %v4425 = vsel %vm3460, %v4215, 0.0
      %v4426 = vadd.f32 %v4424, %v4425
      %4427 = vadd.xlane.f32.xlu0 %v4426
      %v4428 = vpop.xlane.xlu0 %4427
      %v4429 = vsel %vm3430, %v4217, 0.0
      %v4430 = vadd.f32 %v4216, %v4429
      %4431 = vadd.xlane.f32.xlu0 %v4430
      %v4432 = vpop.xlane.xlu0 %4431
      %v4433 = vsel %vm3430, %v4219, 0.0
      %v4434 = vadd.f32 %v4218, %v4433
      %4435 = vadd.xlane.f32.xlu0 %v4434
      %v4436 = vpop.xlane.xlu0 %4435
      %v4437 = vsel %vm3430, %v4221, 0.0
      %v4438 = vadd.f32 %v4220, %v4437
      %4439 = vadd.xlane.f32.xlu0 %v4438
      %v4440 = vpop.xlane.xlu0 %4439
      %v4441 = vsel %vm3430, %v4223, 0.0
      %v4442 = vadd.f32 %v4222, %v4441
      %4443 = vadd.xlane.f32.xlu0 %v4442
      %v4444 = vpop.xlane.xlu0 %4443
      %v4445 = vsel %vm3430, %v4225, 0.0
      %v4446 = vadd.f32 %v4224, %v4445
      %4447 = vadd.xlane.f32.xlu0 %v4446
      %v4448 = vpop.xlane.xlu0 %4447
      %v4449 = vsel %vm3430, %v4227, 0.0
      %v4450 = vadd.f32 %v4226, %v4449
      %4451 = vadd.xlane.f32.xlu0 %v4450
      %v4452 = vpop.xlane.xlu0 %4451
      %v4453 = vsel %vm3430, %v4229, 0.0
      %v4454 = vadd.f32 %v4228, %v4453
      %4455 = vadd.xlane.f32.xlu0 %v4454
      %v4456 = vpop.xlane.xlu0 %4455
      %v4457 = vsel %vm3430, %v4231, 0.0
      %v4458 = vadd.f32 %v4230, %v4457
      %4459 = vadd.xlane.f32.xlu0 %v4458
      %v4460 = vpop.xlane.xlu0 %4459
      %v4461 = vsel %vm3430, %v4233, 0.0
      %v4462 = vadd.f32 %v4232, %v4461
      %4463 = vadd.xlane.f32.xlu0 %v4462
      %v4464 = vpop.xlane.xlu0 %4463
      %v4465 = vsel %vm3430, %v4235, 0.0
      %v4466 = vadd.f32 %v4234, %v4465
      %4467 = vadd.xlane.f32.xlu0 %v4466
      %v4468 = vpop.xlane.xlu0 %4467
      %v4469 = vsel %vm3430, %v4237, 0.0
      %v4470 = vadd.f32 %v4236, %v4469
      %4471 = vadd.xlane.f32.xlu0 %v4470
      %v4472 = vpop.xlane.xlu0 %4471
      %v4473 = vsel %vm3430, %v4239, 0.0
      %v4474 = vadd.f32 %v4238, %v4473
      %4475 = vadd.xlane.f32.xlu0 %v4474
      %v4476 = vpop.xlane.xlu0 %4475
      %v4477 = vsel %vm3430, %v4241, 0.0
      %v4478 = vadd.f32 %v4240, %v4477
      %4479 = vadd.xlane.f32.xlu0 %v4478
      %v4480 = vpop.xlane.xlu0 %4479
      %v4481 = vsel %vm3430, %v4243, 0.0
      %v4482 = vadd.f32 %v4242, %v4481
      %4483 = vadd.xlane.f32.xlu0 %v4482
      %v4484 = vpop.xlane.xlu0 %4483
      %v4485 = vsel %vm3728, %v4244, 0.0
      %v4486 = vsel %vm3460, %v4245, 0.0
      %v4487 = vadd.f32 %v4485, %v4486
      %4488 = vadd.xlane.f32.xlu0 %v4487
      %v4489 = vpop.xlane.xlu0 %4488
      %v4490 = vadd.f32 %v4249, %v4253
      %v4491 = vadd.f32 %v4490, %v4257
      %v4492 = vadd.f32 %v4491, %v4261
      %v4493 = vadd.f32 %v4492, %v4265
      %v4494 = vadd.f32 %v4493, %v4269
      %v4495 = vadd.f32 %v4494, %v4273
      %v4496 = vadd.f32 %v4495, %v4277
      %v4497 = vadd.f32 %v4496, %v4281
      %v4498 = vadd.f32 %v4497, %v4285
      %v4499 = vadd.f32 %v4498, %v4289
      %v4500 = vadd.f32 %v4499, %v4293
      %v4501 = vadd.f32 %v4500, %v4297
      %v4502 = vadd.f32 %v4501, %v4301
      %v4503 = vsel %vm3728, %v4306, 0.0
      %v4504 = vadd.f32 %v4502, %v4503
      %v4505 = vrot.slane %v4504, 4
      %v4506 = vadd.f32 %v4504, %v4505
      %v4507 = vrot.slane %v4506, 2
      %v4508 = vadd.f32 %v4506, %v4507
      %v4509 = vrot.slane %v4508, 1
      %v4510 = vadd.f32 %v4508, %v4509
      %v4511 = vadd.f32 %v4310, %v4314
      %v4512 = vadd.f32 %v4511, %v4318
      %v4513 = vadd.f32 %v4512, %v4322
      %v4514 = vadd.f32 %v4513, %v4326
      %v4515 = vadd.f32 %v4514, %v4330
      %v4516 = vadd.f32 %v4515, %v4334
      %v4517 = vadd.f32 %v4516, %v4338
      %v4518 = vadd.f32 %v4517, %v4342
      %v4519 = vadd.f32 %v4518, %v4346
      %v4520 = vadd.f32 %v4519, %v4350
      %v4521 = vadd.f32 %v4520, %v4354
      %v4522 = vadd.f32 %v4521, %v4358
      %v4523 = vadd.f32 %v4522, %v4362
      %v4524 = vsel %vm3728, %v4367, 0.0
      %v4525 = vadd.f32 %v4523, %v4524
      %v4526 = vrot.slane %v4525, 4
      %v4527 = vadd.f32 %v4525, %v4526
      %v4528 = vrot.slane %v4527, 2
      %v4529 = vadd.f32 %v4527, %v4528
      %v4530 = vrot.slane %v4529, 1
      %v4531 = vadd.f32 %v4529, %v4530
      %v4532 = vadd.f32 %v4371, %v4375
      %v4533 = vadd.f32 %v4532, %v4379
      %v4534 = vadd.f32 %v4533, %v4383
      %v4535 = vadd.f32 %v4534, %v4387
      %v4536 = vadd.f32 %v4535, %v4391
      %v4537 = vadd.f32 %v4536, %v4395
      %v4538 = vadd.f32 %v4537, %v4399
      %v4539 = vadd.f32 %v4538, %v4403
      %v4540 = vadd.f32 %v4539, %v4407
      %v4541 = vadd.f32 %v4540, %v4411
      %v4542 = vadd.f32 %v4541, %v4415
      %v4543 = vadd.f32 %v4542, %v4419
      %v4544 = vadd.f32 %v4543, %v4423
      %v4545 = vsel %vm3728, %v4428, 0.0
      %v4546 = vadd.f32 %v4544, %v4545
      %v4547 = vrot.slane %v4546, 4
      %v4548 = vadd.f32 %v4546, %v4547
      %v4549 = vrot.slane %v4548, 2
      %v4550 = vadd.f32 %v4548, %v4549
      %v4551 = vrot.slane %v4550, 1
      %v4552 = vadd.f32 %v4550, %v4551
      %v4553 = vadd.f32 %v4432, %v4436
      %v4554 = vadd.f32 %v4553, %v4440
      %v4555 = vadd.f32 %v4554, %v4444
      %v4556 = vadd.f32 %v4555, %v4448
      %v4557 = vadd.f32 %v4556, %v4452
      %v4558 = vadd.f32 %v4557, %v4456
      %v4559 = vadd.f32 %v4558, %v4460
      %v4560 = vadd.f32 %v4559, %v4464
      %v4561 = vadd.f32 %v4560, %v4468
      %v4562 = vadd.f32 %v4561, %v4472
      %v4563 = vadd.f32 %v4562, %v4476
      %v4564 = vadd.f32 %v4563, %v4480
      %v4565 = vadd.f32 %v4564, %v4484
      %v4566 = vsel %vm3728, %v4489, 0.0
      %v4567 = vadd.f32 %v4565, %v4566
      %v4568 = vrot.slane %v4567, 4
      %v4569 = vadd.f32 %v4567, %v4568
      %v4570 = vrot.slane %v4569, 2
      %v4571 = vadd.f32 %v4569, %v4570
      %v4572 = vrot.slane %v4571, 1
      %v4573 = vadd.f32 %v4571, %v4572
      %v4574 = vmul.f32 %v4510, %v4001
      %v4575 = vmul.f32 %v4531, %v4001
      %v4576 = vmul.f32 %v4552, %v4001
      %v4577 = vmul.f32 %v4573, %v4001
      %v4578 = vadd.f32 %v4574, 1e-05
      %v4579 = vadd.f32 %v4575, 1e-05
      %v4580 = vadd.f32 %v4576, 1e-05
      %v4581 = vadd.f32 %v4577, 1e-05
      %v4582 = vrsqrt.pop %v4578
      %v4583 = vrsqrt.pop %v4579
      %v4584 = vrsqrt.pop %v4580
      %v4585 = vrsqrt.pop %v4581
      %v4586 = vmul.f32 %v4582, %v290
      %v4587 = vmul.f32 %v4583, %v290
      %v4588 = vmul.f32 %v4584, %v290
      %v4589 = vmul.f32 %v4585, %v290
      %v4594 = vlaneseq
      %v4595 = vshrl.u32 %v4594, 7
      %v4596 = vsub.s32 0, %v4595
      %v4597 = vrot.slane %v4586, %v4596
      %v4598 = vlaneseq
      %v4599 = vshrl.u32 %v4598, 7
      %v4600 = vsub.s32 1, %v4599
      %v4601 = vrot.slane %v4586, %v4600
      %v4602 = vlaneseq
      %v4603 = vshrl.u32 %v4602, 7
      %v4604 = vsub.s32 0, %v4603
      %v4605 = vrot.slane %v4587, %v4604
      %v4606 = vlaneseq
      %v4607 = vshrl.u32 %v4606, 7
      %v4608 = vsub.s32 1, %v4607
      %v4609 = vrot.slane %v4587, %v4608
      %v4610 = vlaneseq
      %v4611 = vshrl.u32 %v4610, 7
      %v4612 = vsub.s32 0, %v4611
      %v4613 = vrot.slane %v4588, %v4612
      %v4614 = vlaneseq
      %v4615 = vshrl.u32 %v4614, 7
      %v4616 = vsub.s32 1, %v4615
      %v4617 = vrot.slane %v4588, %v4616
      %v4618 = vlaneseq
      %v4619 = vshrl.u32 %v4618, 7
      %v4620 = vsub.s32 0, %v4619
      %v4621 = vrot.slane %v4589, %v4620
      %v4622 = vlaneseq
      %v4623 = vshrl.u32 %v4622, 7
      %v4624 = vsub.s32 1, %v4623
      %v4625 = vrot.slane %v4589, %v4624
      %v4634 = vmul.f32 %v4006, %v4597
      %v4635 = vmul.f32 %v4007, %v4601
      %v4636 = vmul.f32 %v4008, %v4597
      %v4637 = vmul.f32 %v4009, %v4601
      %v4638 = vmul.f32 %v4010, %v4597
      %v4639 = vmul.f32 %v4011, %v4601
      %v4640 = vmul.f32 %v4012, %v4597
      %v4641 = vmul.f32 %v4013, %v4601
      %v4642 = vmul.f32 %v4014, %v4597
      %v4643 = vmul.f32 %v4015, %v4601
      %v4644 = vmul.f32 %v4016, %v4597
      %v4645 = vmul.f32 %v4017, %v4601
      %v4646 = vmul.f32 %v4018, %v4597
      %v4647 = vmul.f32 %v4019, %v4601
      %v4648 = vmul.f32 %v4020, %v4597
      %v4649 = vmul.f32 %v4021, %v4601
      %v4650 = vmul.f32 %v4022, %v4597
      %v4651 = vmul.f32 %v4023, %v4601
      %v4652 = vmul.f32 %v4024, %v4597
      %v4653 = vmul.f32 %v4025, %v4601
      %v4654 = vmul.f32 %v4026, %v4597
      %v4655 = vmul.f32 %v4027, %v4601
      %v4656 = vmul.f32 %v4028, %v4597
      %v4657 = vmul.f32 %v4029, %v4601
      %v4658 = vmul.f32 %v4030, %v4597
      %v4659 = vmul.f32 %v4031, %v4601
      %v4660 = vmul.f32 %v4032, %v4597
      %v4661 = vmul.f32 %v4033, %v4601
      %v4662 = vmul.f32 %v4034, %v4597
      %v4663 = vmul.f32 %v4035, %v4601
      %v4664 = vmul.f32 %v4036, %v4605
      %v4665 = vmul.f32 %v4037, %v4609
      %v4666 = vmul.f32 %v4038, %v4605
      %v4667 = vmul.f32 %v4039, %v4609
      %v4668 = vmul.f32 %v4040, %v4605
      %v4669 = vmul.f32 %v4041, %v4609
      %v4670 = vmul.f32 %v4042, %v4605
      %v4671 = vmul.f32 %v4043, %v4609
      %v4672 = vmul.f32 %v4044, %v4605
      %v4673 = vmul.f32 %v4045, %v4609
      %v4674 = vmul.f32 %v4046, %v4605
      %v4675 = vmul.f32 %v4047, %v4609
      %v4676 = vmul.f32 %v4048, %v4605
      %v4677 = vmul.f32 %v4049, %v4609
      %v4678 = vmul.f32 %v4050, %v4605
      %v4679 = vmul.f32 %v4051, %v4609
      %v4680 = vmul.f32 %v4052, %v4605
      %v4681 = vmul.f32 %v4053, %v4609
      %v4682 = vmul.f32 %v4054, %v4605
      %v4683 = vmul.f32 %v4055, %v4609
      %v4684 = vmul.f32 %v4056, %v4605
      %v4685 = vmul.f32 %v4057, %v4609
      %v4686 = vmul.f32 %v4058, %v4605
      %v4687 = vmul.f32 %v4059, %v4609
      %v4688 = vmul.f32 %v4060, %v4605
      %v4689 = vmul.f32 %v4061, %v4609
      %v4690 = vmul.f32 %v4062, %v4605
      %v4691 = vmul.f32 %v4063, %v4609
      %v4692 = vmul.f32 %v4064, %v4605
      %v4693 = vmul.f32 %v4065, %v4609
      %v4694 = vmul.f32 %v4066, %v4613
      %v4695 = vmul.f32 %v4067, %v4617
      %v4696 = vmul.f32 %v4068, %v4613
      %v4697 = vmul.f32 %v4069, %v4617
      %v4698 = vmul.f32 %v4070, %v4613
      %v4699 = vmul.f32 %v4071, %v4617
      %v4700 = vmul.f32 %v4072, %v4613
      %v4701 = vmul.f32 %v4073, %v4617
      %v4702 = vmul.f32 %v4074, %v4613
      %v4703 = vmul.f32 %v4075, %v4617
      %v4704 = vmul.f32 %v4076, %v4613
      %v4705 = vmul.f32 %v4077, %v4617
      %v4706 = vmul.f32 %v4078, %v4613
      %v4707 = vmul.f32 %v4079, %v4617
      %v4708 = vmul.f32 %v4080, %v4613
      %v4709 = vmul.f32 %v4081, %v4617
      %v4710 = vmul.f32 %v4082, %v4613
      %v4711 = vmul.f32 %v4083, %v4617
      %v4712 = vmul.f32 %v4084, %v4613
      %v4713 = vmul.f32 %v4085, %v4617
      %v4714 = vmul.f32 %v4086, %v4613
      %v4715 = vmul.f32 %v4087, %v4617
      %v4716 = vmul.f32 %v4088, %v4613
      %v4717 = vmul.f32 %v4089, %v4617
      %v4718 = vmul.f32 %v4090, %v4613
      %v4719 = vmul.f32 %v4091, %v4617
      %v4720 = vmul.f32 %v4092, %v4613
      %v4721 = vmul.f32 %v4093, %v4617
      %v4722 = vmul.f32 %v4094, %v4613
      %v4723 = vmul.f32 %v4095, %v4617
      %v4724 = vmul.f32 %v4096, %v4621
      %v4725 = vmul.f32 %v4097, %v4625
      %v4726 = vmul.f32 %v4098, %v4621
      %v4727 = vmul.f32 %v4099, %v4625
      %v4728 = vmul.f32 %v4100, %v4621
      %v4729 = vmul.f32 %v4101, %v4625
      %v4730 = vmul.f32 %v4102, %v4621
      %v4731 = vmul.f32 %v4103, %v4625
      %v4732 = vmul.f32 %v4104, %v4621
      %v4733 = vmul.f32 %v4105, %v4625
      %v4734 = vmul.f32 %v4106, %v4621
      %v4735 = vmul.f32 %v4107, %v4625
      %v4736 = vmul.f32 %v4108, %v4621
      %v4737 = vmul.f32 %v4109, %v4625
      %v4738 = vmul.f32 %v4110, %v4621
      %v4739 = vmul.f32 %v4111, %v4625
      %v4740 = vmul.f32 %v4112, %v4621
      %v4741 = vmul.f32 %v4113, %v4625
      %v4742 = vmul.f32 %v4114, %v4621
      %v4743 = vmul.f32 %v4115, %v4625
      %v4744 = vmul.f32 %v4116, %v4621
      %v4745 = vmul.f32 %v4117, %v4625
      %v4746 = vmul.f32 %v4118, %v4621
      %v4747 = vmul.f32 %v4119, %v4625
      %v4748 = vmul.f32 %v4120, %v4621
      %v4749 = vmul.f32 %v4121, %v4625
      %v4750 = vmul.f32 %v4122, %v4621
      %v4751 = vmul.f32 %v4123, %v4625
      %v4752 = vmul.f32 %v4124, %v4621
      %v4753 = vmul.f32 %v4125, %v4625
      %v4755 = vlaneseq
      %v4756 = vshrl.u32 %v4755, 7
      %v4757 = vsub.s32 0, %v4756
      %v4758 = vrot.slane %v291, %v4757
      %v4759 = vlaneseq
      %v4760 = vshrl.u32 %v4759, 7
      %v4761 = vsub.s32 1, %v4760
      %v4762 = vrot.slane %v291, %v4761
      %v4765 = vadd.f32 %v4634, %v4758
      %v4766 = vadd.f32 %v4635, %v4762
      %v4767 = vadd.f32 %v4636, %v4758
      %v4768 = vadd.f32 %v4637, %v4762
      %v4769 = vadd.f32 %v4638, %v4758
      %v4770 = vadd.f32 %v4639, %v4762
      %v4771 = vadd.f32 %v4640, %v4758
      %v4772 = vadd.f32 %v4641, %v4762
      %v4773 = vadd.f32 %v4642, %v4758
      %v4774 = vadd.f32 %v4643, %v4762
      %v4775 = vadd.f32 %v4644, %v4758
      %v4776 = vadd.f32 %v4645, %v4762
      %v4777 = vadd.f32 %v4646, %v4758
      %v4778 = vadd.f32 %v4647, %v4762
      %v4779 = vadd.f32 %v4648, %v4758
      %v4780 = vadd.f32 %v4649, %v4762
      %v4781 = vadd.f32 %v4650, %v4758
      %v4782 = vadd.f32 %v4651, %v4762
      %v4783 = vadd.f32 %v4652, %v4758
      %v4784 = vadd.f32 %v4653, %v4762
      %v4785 = vadd.f32 %v4654, %v4758
      %v4786 = vadd.f32 %v4655, %v4762
      %v4787 = vadd.f32 %v4656, %v4758
      %v4788 = vadd.f32 %v4657, %v4762
      %v4789 = vadd.f32 %v4658, %v4758
      %v4790 = vadd.f32 %v4659, %v4762
      %v4791 = vadd.f32 %v4660, %v4758
      %v4792 = vadd.f32 %v4661, %v4762
      %v4793 = vadd.f32 %v4662, %v4758
      %v4794 = vadd.f32 %v4663, %v4762
      %v4795 = vadd.f32 %v4664, %v4758
      %v4796 = vadd.f32 %v4665, %v4762
      %v4797 = vadd.f32 %v4666, %v4758
      %v4798 = vadd.f32 %v4667, %v4762
      %v4799 = vadd.f32 %v4668, %v4758
      %v4800 = vadd.f32 %v4669, %v4762
      %v4801 = vadd.f32 %v4670, %v4758
      %v4802 = vadd.f32 %v4671, %v4762
      %v4803 = vadd.f32 %v4672, %v4758
      %v4804 = vadd.f32 %v4673, %v4762
      %v4805 = vadd.f32 %v4674, %v4758
      %v4806 = vadd.f32 %v4675, %v4762
      %v4807 = vadd.f32 %v4676, %v4758
      %v4808 = vadd.f32 %v4677, %v4762
      %v4809 = vadd.f32 %v4678, %v4758
      %v4810 = vadd.f32 %v4679, %v4762
      %v4811 = vadd.f32 %v4680, %v4758
      %v4812 = vadd.f32 %v4681, %v4762
      %v4813 = vadd.f32 %v4682, %v4758
      %v4814 = vadd.f32 %v4683, %v4762
      %v4815 = vadd.f32 %v4684, %v4758
      %v4816 = vadd.f32 %v4685, %v4762
      %v4817 = vadd.f32 %v4686, %v4758
      %v4818 = vadd.f32 %v4687, %v4762
      %v4819 = vadd.f32 %v4688, %v4758
      %v4820 = vadd.f32 %v4689, %v4762
      %v4821 = vadd.f32 %v4690, %v4758
      %v4822 = vadd.f32 %v4691, %v4762
      %v4823 = vadd.f32 %v4692, %v4758
      %v4824 = vadd.f32 %v4693, %v4762
      %v4825 = vadd.f32 %v4694, %v4758
      %v4826 = vadd.f32 %v4695, %v4762
      %v4827 = vadd.f32 %v4696, %v4758
      %v4828 = vadd.f32 %v4697, %v4762
      %v4829 = vadd.f32 %v4698, %v4758
      %v4830 = vadd.f32 %v4699, %v4762
      %v4831 = vadd.f32 %v4700, %v4758
      %v4832 = vadd.f32 %v4701, %v4762
      %v4833 = vadd.f32 %v4702, %v4758
      %v4834 = vadd.f32 %v4703, %v4762
      %v4835 = vadd.f32 %v4704, %v4758
      %v4836 = vadd.f32 %v4705, %v4762
      %v4837 = vadd.f32 %v4706, %v4758
      %v4838 = vadd.f32 %v4707, %v4762
      %v4839 = vadd.f32 %v4708, %v4758
      %v4840 = vadd.f32 %v4709, %v4762
      %v4841 = vadd.f32 %v4710, %v4758
      %v4842 = vadd.f32 %v4711, %v4762
      %v4843 = vadd.f32 %v4712, %v4758
      %v4844 = vadd.f32 %v4713, %v4762
      %v4845 = vadd.f32 %v4714, %v4758
      %v4846 = vadd.f32 %v4715, %v4762
      %v4847 = vadd.f32 %v4716, %v4758
      %v4848 = vadd.f32 %v4717, %v4762
      %v4849 = vadd.f32 %v4718, %v4758
      %v4850 = vadd.f32 %v4719, %v4762
      %v4851 = vadd.f32 %v4720, %v4758
      %v4852 = vadd.f32 %v4721, %v4762
      %v4853 = vadd.f32 %v4722, %v4758
      %v4854 = vadd.f32 %v4723, %v4762
      %v4855 = vadd.f32 %v4724, %v4758
      %v4856 = vadd.f32 %v4725, %v4762
      %v4857 = vadd.f32 %v4726, %v4758
      %v4858 = vadd.f32 %v4727, %v4762
      %v4859 = vadd.f32 %v4728, %v4758
      %v4860 = vadd.f32 %v4729, %v4762
      %v4861 = vadd.f32 %v4730, %v4758
      %v4862 = vadd.f32 %v4731, %v4762
      %v4863 = vadd.f32 %v4732, %v4758
      %v4864 = vadd.f32 %v4733, %v4762
      %v4865 = vadd.f32 %v4734, %v4758
      %v4866 = vadd.f32 %v4735, %v4762
      %v4867 = vadd.f32 %v4736, %v4758
      %v4868 = vadd.f32 %v4737, %v4762
      %v4869 = vadd.f32 %v4738, %v4758
      %v4870 = vadd.f32 %v4739, %v4762
      %v4871 = vadd.f32 %v4740, %v4758
      %v4872 = vadd.f32 %v4741, %v4762
      %v4873 = vadd.f32 %v4742, %v4758
      %v4874 = vadd.f32 %v4743, %v4762
      %v4875 = vadd.f32 %v4744, %v4758
      %v4876 = vadd.f32 %v4745, %v4762
      %v4877 = vadd.f32 %v4746, %v4758
      %v4878 = vadd.f32 %v4747, %v4762
      %v4879 = vadd.f32 %v4748, %v4758
      %v4880 = vadd.f32 %v4749, %v4762
      %v4881 = vadd.f32 %v4750, %v4758
      %v4882 = vadd.f32 %v4751, %v4762
      %v4883 = vadd.f32 %v4752, %v4758
      %v4884 = vadd.f32 %v4753, %v4762
      %4885 = vst [vmem:[%s223] sm:$0xff] %v4765
      %4886 = vst.msk [vmem:[%s223 + $0x8] sm:$0xff] %vm3430, %v4766
      %4887 = vst [vmem:[%s223 + $0x10] sm:$0xff] %v4767
      %4888 = vst.msk [vmem:[%s223 + $0x18] sm:$0xff] %vm3430, %v4768
      %4889 = vst [vmem:[%s223 + $0x20] sm:$0xff] %v4769
      %4890 = vst.msk [vmem:[%s223 + $0x28] sm:$0xff] %vm3430, %v4770
      %4891 = vst [vmem:[%s223 + $0x30] sm:$0xff] %v4771
      %4892 = vst.msk [vmem:[%s223 + $0x38] sm:$0xff] %vm3430, %v4772
      %4893 = vst [vmem:[%s223 + $0x40] sm:$0xff] %v4773
      %4894 = vst.msk [vmem:[%s223 + $0x48] sm:$0xff] %vm3430, %v4774
      %4895 = vst [vmem:[%s223 + $0x50] sm:$0xff] %v4775
      %4896 = vst.msk [vmem:[%s223 + $0x58] sm:$0xff] %vm3430, %v4776
      %4897 = vst [vmem:[%s223 + $0x60] sm:$0xff] %v4777
      %4898 = vst.msk [vmem:[%s223 + $0x68] sm:$0xff] %vm3430, %v4778
      %4899 = vst [vmem:[%s223 + $0x70] sm:$0xff] %v4779
      %4900 = vst.msk [vmem:[%s223 + $0x78] sm:$0xff] %vm3430, %v4780
      %4901 = vst [vmem:[%s223 + $0x80] sm:$0xff] %v4781
      %4902 = vst.msk [vmem:[%s223 + $0x88] sm:$0xff] %vm3430, %v4782
      %4903 = vst [vmem:[%s223 + $0x90] sm:$0xff] %v4783
      %4904 = vst.msk [vmem:[%s223 + $0x98] sm:$0xff] %vm3430, %v4784
      %4905 = vst [vmem:[%s223 + $0xa0] sm:$0xff] %v4785
      %4906 = vst.msk [vmem:[%s223 + $0xa8] sm:$0xff] %vm3430, %v4786
      %4907 = vst [vmem:[%s223 + $0xb0] sm:$0xff] %v4787
      %4908 = vst.msk [vmem:[%s223 + $0xb8] sm:$0xff] %vm3430, %v4788
      %4909 = vst [vmem:[%s223 + $0xc0] sm:$0xff] %v4789
      %4910 = vst.msk [vmem:[%s223 + $0xc8] sm:$0xff] %vm3430, %v4790
      %4911 = vst [vmem:[%s223 + $0xd0] sm:$0xff] %v4791
      %4912 = vst.msk [vmem:[%s223 + $0xd8] sm:$0xff] %vm3430, %v4792
      %4913 = vst [vmem:[%s223 + $0xe0] sm:$0xf] %v4793
      %4914 = vst.msk [vmem:[%s223 + $0xe8] sm:$0xf] %vm3460, %v4794
      %4915 = vst [vmem:[%s223 + $0xf0] sm:$0xff] %v4795
      %4916 = vst.msk [vmem:[%s223 + $0xf8] sm:$0xff] %vm3430, %v4796
      %4917 = vst [vmem:[%s223 + $0x100] sm:$0xff] %v4797
      %4918 = vst.msk [vmem:[%s223 + $0x108] sm:$0xff] %vm3430, %v4798
      %4919 = vst [vmem:[%s223 + $0x110] sm:$0xff] %v4799
      %4920 = vst.msk [vmem:[%s223 + $0x118] sm:$0xff] %vm3430, %v4800
      %4921 = vst [vmem:[%s223 + $0x120] sm:$0xff] %v4801
      %4922 = vst.msk [vmem:[%s223 + $0x128] sm:$0xff] %vm3430, %v4802
      %4923 = vst [vmem:[%s223 + $0x130] sm:$0xff] %v4803
      %4924 = vst.msk [vmem:[%s223 + $0x138] sm:$0xff] %vm3430, %v4804
      %4925 = vst [vmem:[%s223 + $0x140] sm:$0xff] %v4805
      %4926 = vst.msk [vmem:[%s223 + $0x148] sm:$0xff] %vm3430, %v4806
      %4927 = vst [vmem:[%s223 + $0x150] sm:$0xff] %v4807
      %4928 = vst.msk [vmem:[%s223 + $0x158] sm:$0xff] %vm3430, %v4808
      %4929 = vst [vmem:[%s223 + $0x160] sm:$0xff] %v4809
      %4930 = vst.msk [vmem:[%s223 + $0x168] sm:$0xff] %vm3430, %v4810
      %4931 = vst [vmem:[%s223 + $0x170] sm:$0xff] %v4811
      %4932 = vst.msk [vmem:[%s223 + $0x178] sm:$0xff] %vm3430, %v4812
      %4933 = vst [vmem:[%s223 + $0x180] sm:$0xff] %v4813
      %4934 = vst.msk [vmem:[%s223 + $0x188] sm:$0xff] %vm3430, %v4814
      %4935 = vst [vmem:[%s223 + $0x190] sm:$0xff] %v4815
      %4936 = vst.msk [vmem:[%s223 + $0x198] sm:$0xff] %vm3430, %v4816
      %4937 = vst [vmem:[%s223 + $0x1a0] sm:$0xff] %v4817
      %4938 = vst.msk [vmem:[%s223 + $0x1a8] sm:$0xff] %vm3430, %v4818
      %4939 = vst [vmem:[%s223 + $0x1b0] sm:$0xff] %v4819
      %4940 = vst.msk [vmem:[%s223 + $0x1b8] sm:$0xff] %vm3430, %v4820
      %4941 = vst [vmem:[%s223 + $0x1c0] sm:$0xff] %v4821
      %4942 = vst.msk [vmem:[%s223 + $0x1c8] sm:$0xff] %vm3430, %v4822
      %4943 = vst [vmem:[%s223 + $0x1d0] sm:$0xf] %v4823
      %4944 = vst.msk [vmem:[%s223 + $0x1d8] sm:$0xf] %vm3460, %v4824
      %4945 = vst [vmem:[%s223 + $0x1e0] sm:$0xff] %v4825
      %4946 = vst.msk [vmem:[%s223 + $0x1e8] sm:$0xff] %vm3430, %v4826
      %4947 = vst [vmem:[%s223 + $0x1f0] sm:$0xff] %v4827
      %4948 = vst.msk [vmem:[%s223 + $0x1f8] sm:$0xff] %vm3430, %v4828
      %4949 = vst [vmem:[%s223 + $0x200] sm:$0xff] %v4829
      %4950 = vst.msk [vmem:[%s223 + $0x208] sm:$0xff] %vm3430, %v4830
      %4951 = vst [vmem:[%s223 + $0x210] sm:$0xff] %v4831
      %4952 = vst.msk [vmem:[%s223 + $0x218] sm:$0xff] %vm3430, %v4832
      %4953 = vst [vmem:[%s223 + $0x220] sm:$0xff] %v4833
      %4954 = vst.msk [vmem:[%s223 + $0x228] sm:$0xff] %vm3430, %v4834
      %4955 = vst [vmem:[%s223 + $0x230] sm:$0xff] %v4835
      %4956 = vst.msk [vmem:[%s223 + $0x238] sm:$0xff] %vm3430, %v4836
      %4957 = vst [vmem:[%s223 + $0x240] sm:$0xff] %v4837
      %4958 = vst.msk [vmem:[%s223 + $0x248] sm:$0xff] %vm3430, %v4838
      %4959 = vst [vmem:[%s223 + $0x250] sm:$0xff] %v4839
      %4960 = vst.msk [vmem:[%s223 + $0x258] sm:$0xff] %vm3430, %v4840
      %4961 = vst [vmem:[%s223 + $0x260] sm:$0xff] %v4841
      %4962 = vst.msk [vmem:[%s223 + $0x268] sm:$0xff] %vm3430, %v4842
      %4963 = vst [vmem:[%s223 + $0x270] sm:$0xff] %v4843
      %4964 = vst.msk [vmem:[%s223 + $0x278] sm:$0xff] %vm3430, %v4844
      %4965 = vst [vmem:[%s223 + $0x280] sm:$0xff] %v4845
      %4966 = vst.msk [vmem:[%s223 + $0x288] sm:$0xff] %vm3430, %v4846
      %4967 = vst [vmem:[%s223 + $0x290] sm:$0xff] %v4847
      %4968 = vst.msk [vmem:[%s223 + $0x298] sm:$0xff] %vm3430, %v4848
      %4969 = vst [vmem:[%s223 + $0x2a0] sm:$0xff] %v4849
      %4970 = vst.msk [vmem:[%s223 + $0x2a8] sm:$0xff] %vm3430, %v4850
      %4971 = vst [vmem:[%s223 + $0x2b0] sm:$0xff] %v4851
      %4972 = vst.msk [vmem:[%s223 + $0x2b8] sm:$0xff] %vm3430, %v4852
      %4973 = vst [vmem:[%s223 + $0x2c0] sm:$0xf] %v4853
      %4974 = vst.msk [vmem:[%s223 + $0x2c8] sm:$0xf] %vm3460, %v4854
      %4975 = vst [vmem:[%s223 + $0x2d0] sm:$0xff] %v4855
      %4976 = vst.msk [vmem:[%s223 + $0x2d8] sm:$0xff] %vm3430, %v4856
      %4977 = vst [vmem:[%s223 + $0x2e0] sm:$0xff] %v4857
      %4978 = vst.msk [vmem:[%s223 + $0x2e8] sm:$0xff] %vm3430, %v4858
      %4979 = vst [vmem:[%s223 + $0x2f0] sm:$0xff] %v4859
      %4980 = vst.msk [vmem:[%s223 + $0x2f8] sm:$0xff] %vm3430, %v4860
      %4981 = vst [vmem:[%s223 + $0x300] sm:$0xff] %v4861
      %4982 = vst.msk [vmem:[%s223 + $0x308] sm:$0xff] %vm3430, %v4862
      %4983 = vst [vmem:[%s223 + $0x310] sm:$0xff] %v4863
      %4984 = vst.msk [vmem:[%s223 + $0x318] sm:$0xff] %vm3430, %v4864
      %4985 = vst [vmem:[%s223 + $0x320] sm:$0xff] %v4865
      %4986 = vst.msk [vmem:[%s223 + $0x328] sm:$0xff] %vm3430, %v4866
      %4987 = vst [vmem:[%s223 + $0x330] sm:$0xff] %v4867
      %4988 = vst.msk [vmem:[%s223 + $0x338] sm:$0xff] %vm3430, %v4868
      %4989 = vst [vmem:[%s223 + $0x340] sm:$0xff] %v4869
      %4990 = vst.msk [vmem:[%s223 + $0x348] sm:$0xff] %vm3430, %v4870
      %4991 = vst [vmem:[%s223 + $0x350] sm:$0xff] %v4871
      %4992 = vst.msk [vmem:[%s223 + $0x358] sm:$0xff] %vm3430, %v4872
      %4993 = vst [vmem:[%s223 + $0x360] sm:$0xff] %v4873
      %4994 = vst.msk [vmem:[%s223 + $0x368] sm:$0xff] %vm3430, %v4874
      %4995 = vst [vmem:[%s223 + $0x370] sm:$0xff] %v4875
      %4996 = vst.msk [vmem:[%s223 + $0x378] sm:$0xff] %vm3430, %v4876
      %4997 = vst [vmem:[%s223 + $0x380] sm:$0xff] %v4877
      %4998 = vst.msk [vmem:[%s223 + $0x388] sm:$0xff] %vm3430, %v4878
      %4999 = vst [vmem:[%s223 + $0x390] sm:$0xff] %v4879
      %5000 = vst.msk [vmem:[%s223 + $0x398] sm:$0xff] %vm3430, %v4880
      %5001 = vst [vmem:[%s223 + $0x3a0] sm:$0xff] %v4881
      %5002 = vst.msk [vmem:[%s223 + $0x3a8] sm:$0xff] %vm3430, %v4882
      %5003 = vst [vmem:[%s223 + $0x3b0] sm:$0xf] %v4883
      %5004 = vst.msk [vmem:[%s223 + $0x3b8] sm:$0xf] %vm3460, %v4884
      %s5005 = smul.u32 4, %s15
      %p5006 = scmp.lt.s32.totalorder %s5005, 7
      %s5007 = scalar_select %p5006, %s5005, 7
      %s5008 = smul.addr %s5007, 30
      %s5009 = smul.addr %s5008, 8
      %s5010 = scalar_lea.vmem %s4, %s5009
      // Predicated region
      $region37: #{brain_context_forward.1} parent=35 // pred_check
        %p5011 = pneg %p127
      $region38: #{brain_context_forward.1} parent=35 // pred_check_branch
        %5013 = sbr.rel (%p5011) target = $region40
      $region39: #{brain_context_forward.1} parent=35 // pred_region
        %s5014 = smul.u32 4, %s15
      $region40: #{brain_context_forward.1} parent=35 // pred_fallthru
        _
    $region36: #{brain_context_forward.1} parent=5 // pred_fallthru
      _
    %p5015 = scmp.le.s32.totalorder 2, %s10
    // Predicated region
    $region41: #{brain_context_forward.1} parent=5 // pred_check
      %p5016 = pneg %p5015
    $region42: #{brain_context_forward.1} parent=5 // pred_check_branch
      %5018 = sbr.rel (%p5016) target = $region44
    $region43: #{brain_context_forward.1} parent=5 // pred_region
      %s5019 = ssub.s32 %s10, 2
      // Predicated region
      $region45: #{brain_context_forward.1} parent=43 // pred_check
        %p5020 = pneg %p133
      $region46: #{brain_context_forward.1} parent=43 // pred_check_branch
        %5022 = sbr.rel (%p5020) target = $region48
      $region47: #{brain_context_forward.1} parent=43 // pred_region
        %s5023 = smul.u32 4, %s16
        %p5024 = scmp.lt.s32.totalorder %s5023, 7
        %s5025 = scalar_select %p5024, %s5023, 7
        %s5026 = smul.addr %s5025, 30
        %s5027 = smul.addr %s5026, 8
        %s5028 = scalar_lea.vmem %s4, %s5027
      $region48: #{brain_context_forward.1} parent=43 // pred_fallthru
        _
    $region44: #{brain_context_forward.1} parent=5 // pred_fallthru
      _
  $region6: #{brain_context_forward.1} parent=0 // loop_footer
    %s14 = sadd.s32 1, %s10
  $region7: #{brain_context_forward.1} parent=0 // loop_footer_branch
    %9 = sbr.rel target = $region3
  $region8: #{brain_context_forward.1} parent=0 // loop_exit
    _

</llo_original>
